<compile_context>
chip_gen: v7x
topology: tpu7x:2x2x1
jax: 0.10.0
libtpu: 0.0.40
codegen_flags: <defaults>
</compile_context>

<pallas_src>
import jax
import jax.numpy as jnp
from jax.experimental import pallas as pl
from jax.experimental.pallas import tpu as pltpu


def _round_up(x, m):
    return ((x + m - 1) // m) * m


# ---------------------------------------------------------------------------
# Kernel
# ---------------------------------------------------------------------------
def deup_cat_kernel(x_ref, prev_ref, wfold_ref, w3bd_ref, bfold_ref, out_ref):
    """One (tile_m, 8*C_out) output tile, computed/stored per 2*C_out-lane tap-pair group."""
    gw = w3bd_ref.shape[0]          # group width = 2 * C_out lanes (two transpose-conv taps)
    c8 = out_ref.shape[-1]          # 8 * C_out
    x = x_ref[...]                  # (tile_m, C_in_pad): resident across all groups
    w3bd = w3bd_ref[...]            # (gw, gw) block-diag(W3a^T, W3a^T)
    for g in range(c8 // gw):       # static unroll: 4 groups of 2 taps
        lo = g * gw                 # static, lane-aligned (multiple of 2*C_out)
        acc = jnp.dot(x, wfold_ref[:, lo:lo + gw], preferred_element_type=jnp.float32)
        acc = acc + jnp.dot(prev_ref[:, lo:lo + gw], w3bd,
                            preferred_element_type=jnp.float32)
        acc = acc + bfold_ref[:, lo:lo + gw]            # f32 folded bias, broadcast over rows
        out_ref[:, lo:lo + gw] = acc.astype(out_ref.dtype)   # dense 2*C_out-lane store


# ---------------------------------------------------------------------------
# Zero-relayout entry point (tap-minor channels-last rows)
# ---------------------------------------------------------------------------
def deup_cat_rows(x_rows, prev_rows, wfold, w3bd, bfold, *, tile_m=1024, out_dtype=None):
    """Fused DeUp_Cat on pre-flattened rows.

    x_rows:    (M, C_in_pad)  input voxel rows, channel-minor, K zero-padded to 128-multiple
    prev_rows: (M, 8*C_out)   tap-minor channels-last rows of `prev`
    returns    (M, 8*C_out)   tap-minor channels-last rows of the output
    """
    M, c_in_pad = x_rows.shape
    c8 = prev_rows.shape[-1]
    gw = w3bd.shape[0]
    out_dtype = out_dtype or prev_rows.dtype

    # Big tiles amortize the ~0.35us/step grid overhead, but keep >= 4 grid steps
    # (>= 2 per TensorCore on v7x) so input/output DMAs of adjacent steps overlap.
    tile_m = min(tile_m, _round_up(M, 8))
    while tile_m >= 512 and pl.cdiv(M, tile_m) < 4:
        tile_m //= 2
    num_tiles = pl.cdiv(M, tile_m)
    m_pad = num_tiles * tile_m
    if m_pad != M:
        x_rows = jnp.pad(x_rows, ((0, m_pad - M), (0, 0)))
        prev_rows = jnp.pad(prev_rows, ((0, m_pad - M), (0, 0)))

    # VMEM budget: double-buffered in/out blocks + resident weights + the two f32
    # (tile_m, gw) intermediates the sliced epilogue keeps live, with 50% headroom.
    bpe = jnp.dtype(x_rows.dtype).itemsize
    block_bytes = tile_m * (c_in_pad + 2 * c8) * bpe
    weight_bytes = c_in_pad * c8 * bpe + gw * gw * bpe + c8 * 4
    f32_bytes = 2 * tile_m * gw * 4
    vmem_need = 2 * block_bytes + weight_bytes + f32_bytes
    try:
        # Generation-aware cap: ~64 MiB on v5e/v6e (128 MiB physical), ~32 MiB on v7x.
        vmem_cap = int(pltpu.get_tpu_info().vmem_capacity_bytes) // 2
    except Exception:
        vmem_cap = 32 * 2 ** 20
    vmem_limit = int(min(max(int(vmem_need * 1.5), 16 * 2 ** 20), vmem_cap))

    const = lambda shape: pl.BlockSpec(shape, lambda i: tuple(0 for _ in shape))
    out_rows = pl.pallas_call(
        deup_cat_kernel,
        out_shape=jax.ShapeDtypeStruct((m_pad, c8), out_dtype),
        grid_spec=pltpu.PrefetchScalarGridSpec(
            num_scalar_prefetch=0,
            grid=(num_tiles,),
            in_specs=[
                pl.BlockSpec((tile_m, c_in_pad), lambda i: (i, 0)),   # x rows (lane-dense K)
                pl.BlockSpec((tile_m, c8), lambda i: (i, 0)),         # prev rows (tap-minor)
                const((c_in_pad, c8)),                                # folded conv1*conv2*conv3b
                const((gw, gw)),                                      # blockdiag(W3a^T, W3a^T)
                const((1, c8)),                                       # folded bias (f32)
            ],
            out_specs=pl.BlockSpec((tile_m, c8), lambda i: (i, 0)),
        ),
        compiler_params=pltpu.CompilerParams(
            dimension_semantics=("parallel",),    # independent row tiles -> both TCs on v7x
            vmem_limit_bytes=vmem_limit,
        ),
    )(x_rows, prev_rows, wfold, w3bd, bfold)
    return out_rows[:M] if m_pad != M else out_rows


# ---------------------------------------------------------------------------
# Weight folding (exact, done once in f32 on tiny weights)
# ---------------------------------------------------------------------------
def fold_params(params, c_in_pad, compute_dtype=jnp.bfloat16):
    W1, b1, W2, b2, W3, b3 = params
    C_out, C_in = W1.shape[0], W1.shape[1]
    f32 = jnp.float32
    w1_t = jnp.transpose(W1[:, :, 0, 0, 0]).astype(f32)                        # (C_in, C_out)
    w2_taps = jnp.transpose(W2, (2, 3, 4, 0, 1)).reshape(8, C_out, C_out).astype(f32)
    w3 = W3[:, :, 0, 0, 0].astype(f32)                                         # (C_out, 2*C_out)
    w3a_t = jnp.transpose(w3[:, :C_out])                                       # prev @ w3a_t
    w3b_t = jnp.transpose(w3[:, C_out:])                                       # y2   @ w3b_t
    w23 = jnp.einsum('tij,jk->tik', w2_taps, w3b_t)                            # (8, C_out, C_out)
    wfold = jnp.einsum('ci,tik->ctk', w1_t, w23).reshape(C_in, 8 * C_out)      # (C_in, 8*C_out)
    wfold = jnp.pad(wfold, ((0, c_in_pad - C_in), (0, 0)))                     # zero-pad K
    bfold = (jnp.einsum('i,tik->tk', b1.astype(f32), w23)
             + (b2.astype(f32) @ w3b_t)[None, :]
             + b3.astype(f32)[None, :]).reshape(1, 8 * C_out)                  # (1, 8*C_out) f32
    zero = jnp.zeros_like(w3a_t)
    w3bd = jnp.block([[w3a_t, zero], [zero, w3a_t]])                           # (2C, 2C) tap pair
    return wfold.astype(compute_dtype), w3bd.astype(compute_dtype), bfold


# ---------------------------------------------------------------------------
# NCDHW wrapper (PyTorch-parity interface)
# ---------------------------------------------------------------------------
def deup_cat_forward(x, prev, params, *, tile_m=1024, compute_dtype=jnp.bfloat16):
    """x: (N, C_in, D, H, W); prev: (N, C_out, 2D, 2H, 2W) -> (N, C_out, 2D, 2H, 2W)."""
    W1 = params[0]
    N, C_in, D, H, W = x.shape
    C_out = W1.shape[0]
    M = N * D * H * W
    C8 = 8 * C_out
    c_in_pad = _round_up(C_in, 128)

    wfold, w3bd, bfold = fold_params(params, c_in_pad, compute_dtype)

    # ---- layout plumbing: NCDHW <-> tap-minor channels-last rows ----
    # TODO(synk): these transposes re-stream prev/out through HBM; a channels-last model
    # should keep activations in the tap-minor row layout and call deup_cat_rows directly
    # (the kernel itself already reads/writes lane-dense (tile_m, 8*C_out) blocks).
    x_rows = jnp.transpose(x, (0, 2, 3, 4, 1)).reshape(M, C_in).astype(compute_dtype)
    x_rows = jnp.pad(x_rows, ((0, 0), (0, c_in_pad - C_in)))
    prev_rows = jnp.transpose(prev, (0, 2, 3, 4, 1)).reshape(N, D, 2, H, 2, W, 2, C_out)
    prev_rows = (jnp.transpose(prev_rows, (0, 1, 3, 5, 2, 4, 6, 7))
                 .reshape(M, C8).astype(compute_dtype))

    out_rows = deup_cat_rows(x_rows, prev_rows, wfold, w3bd, bfold, tile_m=tile_m)

    out = out_rows.reshape(N, D, H, W, 2, 2, 2, C_out)
    out = jnp.transpose(out, (0, 7, 1, 4, 2, 5, 3, 6)).reshape(N, C_out, 2 * D, 2 * H, 2 * W)
    return out.astype(x.dtype)


# ---------------------------------------------------------------------------
# Pure-JAX reference (exact PyTorch semantics, f32)
# ---------------------------------------------------------------------------
def ref_forward(x, prev, params):
    W1, b1, W2, b2, W3, b3 = params
    N, C_in, D, H, W = x.shape
    C_out = W1.shape[0]
    x1 = jnp.einsum('nidhw,oi->nodhw', x, W1[:, :, 0, 0, 0]) + b1[None, :, None, None, None]
    # ConvTranspose3d k=2 s=2: y2[n,o,2d+a,2h+b,2w+c] = sum_i x1[n,i,d,h,w] * W2[i,o,a,b,c]
    y2 = jnp.einsum('nidhw,ioabc->nodahbwc', x1, W2).reshape(N, C_out, 2 * D, 2 * H, 2 * W)
    y2 = y2 + b2[None, :, None, None, None]
    cat = jnp.concatenate([prev, y2], axis=1)
    out = jnp.einsum('ncdhw,oc->nodhw', cat, W3[:, :, 0, 0, 0]) + b3[None, :, None, None, None]
    return out


def init_params(key, in_channels, out_channels, dtype=jnp.float32):
    ks = jax.random.split(key, 6)
    s1 = 1.0 / (in_channels ** 0.5)
    s2 = 1.0 / ((out_channels * 8) ** 0.5)
    s3 = 1.0 / ((2 * out_channels) ** 0.5)
    W1 = jax.random.uniform(ks[0], (out_channels, in_channels, 1, 1, 1), dtype, -s1, s1)
    b1 = jax.random.uniform(ks[1], (out_channels,), dtype, -s1, s1)
    W2 = jax.random.uniform(ks[2], (out_channels, out_channels, 2, 2, 2), dtype, -s2, s2)
    b2 = jax.random.uniform(ks[3], (out_channels,), dtype, -s2, s2)
    W3 = jax.random.uniform(ks[4], (out_channels, 2 * out_channels, 1, 1, 1), dtype, -s3, s3)
    b3 = jax.random.uniform(ks[5], (out_channels,), dtype, -s3, s3)
    return (W1, b1, W2, b2, W3, b3)


if __name__ == "__main__":
    key = jax.random.PRNGKey(0)
    k_p, k_x, k_prev = jax.random.split(key, 3)

    # Small TransBTS-decoder-like sizes; C_out = 128 keeps every tap slice / store and the
    # 8*C_out = 1024 output lane dimension fully 128-aligned.
    N, C_in, C_out = 2, 64, 128
    D = H = W = 8

    params = init_params(k_p, C_in, C_out)
    x = jax.random.normal(k_x, (N, C_in, D, H, W), jnp.float32)
    prev = jax.random.normal(k_prev, (N, C_out, 2 * D, 2 * H, 2 * W), jnp.float32)

    out = deup_cat_forward(x, prev, params)
    out = jax.block_until_ready(out)

    ref = ref_forward(x, prev, params)
    assert out.shape == ref.shape == (N, C_out, 2 * D, 2 * H, 2 * W)
    max_err = float(jnp.max(jnp.abs(out - ref)))
    # bf16 inputs/weights (fold computed in f32) with f32 MXU accumulation.
    assert jnp.allclose(out, ref, atol=5e-2, rtol=5e-2), max_err

    print("KERNEL_OK")
</pallas_src>

<mosaic_0001>
module attributes {stable_mosaic.version = 11 : i64} {
  func.func @deup_cat_kernel(%arg0: i32, %arg1: memref<256x128xbf16, #tpu.memory_space<vmem>>, %arg2: memref<256x1024xbf16, #tpu.memory_space<vmem>>, %arg3: memref<128x1024xbf16, #tpu.memory_space<vmem>>, %arg4: memref<256x256xbf16, #tpu.memory_space<vmem>>, %arg5: memref<1x1024xf32, #tpu.memory_space<vmem>>, %arg6: memref<256x1024xbf16, #tpu.memory_space<vmem>>) attributes {dimension_semantics = [#tpu.dimension_semantics<parallel>], iteration_bounds = array<i64: 4>, scalar_prefetch = 0 : i64, scratch_operands = 0 : i64, tpu.core_type = #tpu.core_type<tc>, window_params = [{transform_indices = @transform_0, window_bounds = array<i64: 256, 128>}, {transform_indices = @transform_1, window_bounds = array<i64: 256, 1024>}, {pipeline_mode = #tpu.pipeline_mode<synchronous>, transform_indices = @transform_2, window_bounds = array<i64: 128, 1024>}, {pipeline_mode = #tpu.pipeline_mode<synchronous>, transform_indices = @transform_3, window_bounds = array<i64: 256, 256>}, {pipeline_mode = #tpu.pipeline_mode<synchronous>, transform_indices = @transform_4, window_bounds = array<i64: 1, 1024>}, {transform_indices = @transform_5, window_bounds = array<i64: 256, 1024>}]} {
    %c0 = arith.constant 0 : index
    %c0_0 = arith.constant 0 : index
    %0 = vector.load %arg1[%c0, %c0_0] : memref<256x128xbf16, #tpu.memory_space<vmem>>, vector<256x128xbf16>
    %c0_1 = arith.constant 0 : index
    %c0_2 = arith.constant 0 : index
    %1 = vector.load %arg4[%c0_1, %c0_2] : memref<256x256xbf16, #tpu.memory_space<vmem>>, vector<256x256xbf16>
    %c0_3 = arith.constant 0 : index
    %c0_4 = arith.constant 0 : index
    %2 = vector.load %arg3[%c0_3, %c0_4] : memref<128x1024xbf16, #tpu.memory_space<vmem>>, vector<128x256xbf16>
    %cst = arith.constant dense<0.000000e+00> : vector<256x256xf32>
    %3 = tpu.matmul %0, %2, %cst {dimension_numbers = #tpu.dot_dimension_numbers<[1], [0], [0], [1], [0, 0, 1, 1], [], []>} : vector<256x128xbf16>, vector<128x256xbf16>, vector<256x256xf32> -> vector<256x256xf32>
    %c0_5 = arith.constant 0 : index
    %c0_6 = arith.constant 0 : index
    %4 = vector.load %arg2[%c0_5, %c0_6] : memref<256x1024xbf16, #tpu.memory_space<vmem>>, vector<256x256xbf16>
    %cst_7 = arith.constant dense<0.000000e+00> : vector<256x256xf32>
    %5 = tpu.matmul %4, %1, %cst_7 {dimension_numbers = #tpu.dot_dimension_numbers<[1], [0], [0], [1], [0, 0, 1, 1], [], []>} : vector<256x256xbf16>, vector<256x256xbf16>, vector<256x256xf32> -> vector<256x256xf32>
    %6 = arith.addf %3, %5 : vector<256x256xf32>
    %c0_8 = arith.constant 0 : index
    %c0_9 = arith.constant 0 : index
    %7 = vector.load %arg5[%c0_8, %c0_9] : memref<1x1024xf32, #tpu.memory_space<vmem>>, vector<1x256xf32>
    %8 = vector.broadcast %7 : vector<1x256xf32> to vector<256x256xf32>
    %9 = arith.addf %6, %8 : vector<256x256xf32>
    %10 = arith.truncf %9 : vector<256x256xf32> to vector<256x256xbf16>
    %c0_10 = arith.constant 0 : index
    %c0_11 = arith.constant 0 : index
    %11 = vector.load %arg6[%c0_10, %c0_11] : memref<256x1024xbf16, #tpu.memory_space<vmem>>, vector<256x256xbf16>
    tpu.vector_store %arg6[%c0_10, %c0_11], %10 {strides = array<i32>} : memref<256x1024xbf16, #tpu.memory_space<vmem>>, vector<256x256xbf16>,
    %c0_12 = arith.constant 0 : index
    %c256 = arith.constant 256 : index
    %12 = vector.load %arg3[%c0_12, %c256] : memref<128x1024xbf16, #tpu.memory_space<vmem>>, vector<128x256xbf16>
    %cst_13 = arith.constant dense<0.000000e+00> : vector<256x256xf32>
    %13 = tpu.matmul %0, %12, %cst_13 {dimension_numbers = #tpu.dot_dimension_numbers<[1], [0], [0], [1], [0, 0, 1, 1], [], []>} : vector<256x128xbf16>, vector<128x256xbf16>, vector<256x256xf32> -> vector<256x256xf32>
    %c0_14 = arith.constant 0 : index
    %c256_15 = arith.constant 256 : index
    %14 = vector.load %arg2[%c0_14, %c256_15] : memref<256x1024xbf16, #tpu.memory_space<vmem>>, vector<256x256xbf16>
    %cst_16 = arith.constant dense<0.000000e+00> : vector<256x256xf32>
    %15 = tpu.matmul %14, %1, %cst_16 {dimension_numbers = #tpu.dot_dimension_numbers<[1], [0], [0], [1], [0, 0, 1, 1], [], []>} : vector<256x256xbf16>, vector<256x256xbf16>, vector<256x256xf32> -> vector<256x256xf32>
    %16 = arith.addf %13, %15 : vector<256x256xf32>
    %c0_17 = arith.constant 0 : index
    %c256_18 = arith.constant 256 : index
    %17 = vector.load %arg5[%c0_17, %c256_18] : memref<1x1024xf32, #tpu.memory_space<vmem>>, vector<1x256xf32>
    %18 = vector.broadcast %17 : vector<1x256xf32> to vector<256x256xf32>
    %19 = arith.addf %16, %18 : vector<256x256xf32>
    %20 = arith.truncf %19 : vector<256x256xf32> to vector<256x256xbf16>
    %c0_19 = arith.constant 0 : index
    %c256_20 = arith.constant 256 : index
    %21 = vector.load %arg6[%c0_19, %c256_20] : memref<256x1024xbf16, #tpu.memory_space<vmem>>, vector<256x256xbf16>
    tpu.vector_store %arg6[%c0_19, %c256_20], %20 {strides = array<i32>} : memref<256x1024xbf16, #tpu.memory_space<vmem>>, vector<256x256xbf16>,
    %c0_21 = arith.constant 0 : index
    %c512 = arith.constant 512 : index
    %22 = vector.load %arg3[%c0_21, %c512] : memref<128x1024xbf16, #tpu.memory_space<vmem>>, vector<128x256xbf16>
    %cst_22 = arith.constant dense<0.000000e+00> : vector<256x256xf32>
    %23 = tpu.matmul %0, %22, %cst_22 {dimension_numbers = #tpu.dot_dimension_numbers<[1], [0], [0], [1], [0, 0, 1, 1], [], []>} : vector<256x128xbf16>, vector<128x256xbf16>, vector<256x256xf32> -> vector<256x256xf32>
    %c0_23 = arith.constant 0 : index
    %c512_24 = arith.constant 512 : index
    %24 = vector.load %arg2[%c0_23, %c512_24] : memref<256x1024xbf16, #tpu.memory_space<vmem>>, vector<256x256xbf16>
    %cst_25 = arith.constant dense<0.000000e+00> : vector<256x256xf32>
    %25 = tpu.matmul %24, %1, %cst_25 {dimension_numbers = #tpu.dot_dimension_numbers<[1], [0], [0], [1], [0, 0, 1, 1], [], []>} : vector<256x256xbf16>, vector<256x256xbf16>, vector<256x256xf32> -> vector<256x256xf32>
    %26 = arith.addf %23, %25 : vector<256x256xf32>
    %c0_26 = arith.constant 0 : index
    %c512_27 = arith.constant 512 : index
    %27 = vector.load %arg5[%c0_26, %c512_27] : memref<1x1024xf32, #tpu.memory_space<vmem>>, vector<1x256xf32>
    %28 = vector.broadcast %27 : vector<1x256xf32> to vector<256x256xf32>
    %29 = arith.addf %26, %28 : vector<256x256xf32>
    %30 = arith.truncf %29 : vector<256x256xf32> to vector<256x256xbf16>
    %c0_28 = arith.constant 0 : index
    %c512_29 = arith.constant 512 : index
    %31 = vector.load %arg6[%c0_28, %c512_29] : memref<256x1024xbf16, #tpu.memory_space<vmem>>, vector<256x256xbf16>
    tpu.vector_store %arg6[%c0_28, %c512_29], %30 {strides = array<i32>} : memref<256x1024xbf16, #tpu.memory_space<vmem>>, vector<256x256xbf16>,
    %c0_30 = arith.constant 0 : index
    %c768 = arith.constant 768 : index
    %32 = vector.load %arg3[%c0_30, %c768] : memref<128x1024xbf16, #tpu.memory_space<vmem>>, vector<128x256xbf16>
    %cst_31 = arith.constant dense<0.000000e+00> : vector<256x256xf32>
    %33 = tpu.matmul %0, %32, %cst_31 {dimension_numbers = #tpu.dot_dimension_numbers<[1], [0], [0], [1], [0, 0, 1, 1], [], []>} : vector<256x128xbf16>, vector<128x256xbf16>, vector<256x256xf32> -> vector<256x256xf32>
    %c0_32 = arith.constant 0 : index
    %c768_33 = arith.constant 768 : index
    %34 = vector.load %arg2[%c0_32, %c768_33] : memref<256x1024xbf16, #tpu.memory_space<vmem>>, vector<256x256xbf16>
    %cst_34 = arith.constant dense<0.000000e+00> : vector<256x256xf32>
    %35 = tpu.matmul %34, %1, %cst_34 {dimension_numbers = #tpu.dot_dimension_numbers<[1], [0], [0], [1], [0, 0, 1, 1], [], []>} : vector<256x256xbf16>, vector<256x256xbf16>, vector<256x256xf32> -> vector<256x256xf32>
    %36 = arith.addf %33, %35 : vector<256x256xf32>
    %c0_35 = arith.constant 0 : index
    %c768_36 = arith.constant 768 : index
    %37 = vector.load %arg5[%c0_35, %c768_36] : memref<1x1024xf32, #tpu.memory_space<vmem>>, vector<1x256xf32>
    %38 = vector.broadcast %37 : vector<1x256xf32> to vector<256x256xf32>
    %39 = arith.addf %36, %38 : vector<256x256xf32>
    %40 = arith.truncf %39 : vector<256x256xf32> to vector<256x256xbf16>
    %c0_37 = arith.constant 0 : index
    %c768_38 = arith.constant 768 : index
    %41 = vector.load %arg6[%c0_37, %c768_38] : memref<256x1024xbf16, #tpu.memory_space<vmem>>, vector<256x256xbf16>
    tpu.vector_store %arg6[%c0_37, %c768_38], %40 {strides = array<i32>} : memref<256x1024xbf16, #tpu.memory_space<vmem>>, vector<256x256xbf16>,
    return
  }
  func.func @transform_0(%arg0: i32) -> (i32, i32) {
    %c0_i32 = arith.constant 0 : i32
    %c0_i32_0 = arith.constant 0 : i32
    return %arg0, %c0_i32 : i32, i32
  }
  func.func @transform_1(%arg0: i32) -> (i32, i32) {
    %c0_i32 = arith.constant 0 : i32
    %c0_i32_0 = arith.constant 0 : i32
    return %arg0, %c0_i32 : i32, i32
  }
  func.func @transform_2(%arg0: i32) -> (i32, i32) {
    %c0_i32 = arith.constant 0 : i32
    %c0_i32_0 = arith.constant 0 : i32
    %c0_i32_1 = arith.constant 0 : i32
    return %c0_i32, %c0_i32_0 : i32, i32
  }
  func.func @transform_3(%arg0: i32) -> (i32, i32) {
    %c0_i32 = arith.constant 0 : i32
    %c0_i32_0 = arith.constant 0 : i32
    %c0_i32_1 = arith.constant 0 : i32
    return %c0_i32, %c0_i32_0 : i32, i32
  }
  func.func @transform_4(%arg0: i32) -> (i32, i32) {
    %c0_i32 = arith.constant 0 : i32
    %c0_i32_0 = arith.constant 0 : i32
    %c0_i32_1 = arith.constant 0 : i32
    return %c0_i32, %c0_i32_0 : i32, i32
  }
  func.func @transform_5(%arg0: i32) -> (i32, i32) {
    %c0_i32 = arith.constant 0 : i32
    %c0_i32_0 = arith.constant 0 : i32
    return %arg0, %c0_i32 : i32, i32
  }
}

</mosaic_0001>

<llo_original>
// kernel: tpu_custom_call.1
$region0: #{tpu_custom_call.1}
  #allocation0 [shape = 'u32[]', space=smem, size = 0x4, offset = 0x4, fixed_abs, tag = 'smem constant byte address 0x4 - core index']
  #allocation1 [shape = 'u32[144,128]{1,0:T(1,128)}', space=vmem, size = 0x12000, scoped, tag = 'internal scratch']
  %s0 = inlined_call_operand.hbm [shape: bf16[1024,128], index: 0, kind: input, shape index: {}]
  %s1 = inlined_call_operand.hbm [shape: bf16[1024,1024], index: 1, kind: input, shape index: {}]
  %s2 = inlined_call_operand.hbm [shape: bf16[128,1024], index: 2, kind: input, shape index: {}]
  %s3 = inlined_call_operand.hbm [shape: bf16[256,256], index: 3, kind: input, shape index: {}]
  %s4 = inlined_call_operand.hbm [shape: f32[1,1024], index: 4, kind: input, shape index: {}]
  %s5 = inlined_call_operand.hbm [shape: bf16[1024,1024], index: 5, kind: output, shape index: {}]
  %s6 = sld [smem:[#allocation0]]
  $region73: #{tpu_custom_call.1} parent=0
    _
  %s8 = ssub.s32 1, %s6
  %s9 = scalar_select 0, %s8, %s6
  $region1: #{tpu_custom_call.1} parent=0
    #allocation2 [shape = 'u8[131072]{0}', space=vmem, size = 0x20000, scoped, tag = 'input window, operand 0']
    #allocation3 [shape = 's32[2]{0}', space=sflag, size = 0x8, scoped, tag = 'scoped memory for tpu_custom_call.1']
    #allocation4 [shape = 's32[2]{0}', space=sflag, size = 0x8, scoped, tag = 'scoped memory for tpu_custom_call.1']
    #allocation5 [shape = 'u8[1048576]{0}', space=vmem, size = 0x100000, scoped, tag = 'input window, operand 1']
    #allocation6 [shape = 's32[2]{0}', space=sflag, size = 0x8, scoped, tag = 'scoped memory for tpu_custom_call.1']
    #allocation7 [shape = 'u8[262144]{0}', space=vmem, size = 0x40000, scoped, tag = 'input window, operand 2, single buffered']
    #allocation8 [shape = 'u8[131072]{0}', space=vmem, size = 0x20000, scoped, tag = 'input window, operand 3, single buffered']
    #allocation9 [shape = 's32[1]{0}', space=sflag, size = 0x4, scoped, tag = 'scoped memory for tpu_custom_call.1']
    #allocation10 [shape = 'u8[4096]{0}', space=vmem, size = 0x1000, scoped, tag = 'input window, operand 4, single buffered']
    #allocation11 [shape = 'u8[1048576]{0}', space=vmem, size = 0x100000, scoped, tag = 'output window, operand 0']
    %10 = vsyncpa [#allocation3], 0
    %s11 = scalar_lea.sflag [#allocation3], 1
    %12 = vsyncpa %s11, 0
    %13 = vsyncpa [#allocation6], 0
    %s14 = scalar_lea.sflag [#allocation6], 1
    %15 = vsyncpa %s14, 0
    %16 = vsyncpa [#allocation9], 0
    %17 = vsyncpa [#allocation4], 0
    %s18 = scalar_lea.sflag [#allocation4], 1
    %19 = vsyncpa %s18, 0
    loop: start=0, step=1, limit=6
    $region2: #{tpu_custom_call.1} parent=1 // loop_pre_header
      _
    $region3: #{tpu_custom_call.1} parent=1 // loop_header
      %s21 = sphi 0, %s25
      %p22 = scmp.ge.s32.totalorder %s21, 6
      %s31 = sphi 0, %s33
      %s34 = sphi 0, %s31
      %s35 = sphi 0, %s34
      %s51 = sphi 0, %s35
      %s57 = sphi 0, %s59
      %s60 = sphi 0, %s57
      %s61 = sphi 0, %s60
      %s77 = sphi 0, %s61
      %s81 = sphi 0, %s81
      %s83 = sphi 0, %s81
      %s84 = sphi 0, %s83
      %s98 = sphi 0, %s84
      %s102 = sphi 0, %s102
      %s104 = sphi 0, %s102
      %s105 = sphi 0, %s104
      %s119 = sphi 0, %s105
      %s123 = sphi 0, %s123
      %s125 = sphi 0, %s123
      %s126 = sphi 0, %s125
      %s140 = sphi 0, %s126
      %s146 = sphi 0, %s148
      %s149 = sphi 0, %s146
      %s150 = sphi 0, %s149
      %s166 = sphi 0, %s150
    $region4: #{tpu_custom_call.1} parent=1 // loop_header_branch
      %24 = sbr.rel (%p22) target = $region8
    $region5: #{tpu_custom_call.1} parent=1 // loop_body
      %s26 = ssub.s32 %s21, 1
      %s27 = ssub.s32 %s21, 2
      %s28 = sadd.s32 %s21, 1
      %s29 = ssub.s32 %s21, %s28
      %p30 = scmp.eq.s32.totalorder %s29, 0
      %s32 = sadd.s32 %s31, 1
      %s33 = scalar_select %p30, %s31, %s32
      %p36 = pneg %p30
      %p37 = scmp.eq.s32.totalorder %s21, 3
      %p38 = por %p36, %p37
      %p39 = scmp.ne.s32.totalorder %s31, %s34
      %p40 = scmp.eq.s32.totalorder %s21, 0
      %p41 = por %p39, %p40
      %p42 = scmp.ne.s32.totalorder %s31, %s34
      %p43 = scmp.eq.s32.totalorder %s26, 3
      %p44 = por %p42, %p43
      %p45 = scmp.ne.s32.totalorder %s34, %s35
      %p46 = scmp.eq.s32.totalorder %s26, 0
      %p47 = por %p45, %p46
      %p48 = scmp.ne.s32.totalorder %s34, %s35
      %p49 = scmp.eq.s32.totalorder %s27, 3
      %p50 = por %p48, %p49
      %p52 = scmp.ne.s32.totalorder %s35, %s51
      %p53 = scmp.eq.s32.totalorder %s27, 0
      %p54 = por %p52, %p53
      %s55 = ssub.s32 %s21, %s28
      %p56 = scmp.eq.s32.totalorder %s55, 0
      %s58 = sadd.s32 %s57, 1
      %s59 = scalar_select %p56, %s57, %s58
      %p62 = pneg %p56
      %p63 = scmp.eq.s32.totalorder %s21, 3
      %p64 = por %p62, %p63
      %p65 = scmp.ne.s32.totalorder %s57, %s60
      %p66 = scmp.eq.s32.totalorder %s21, 0
      %p67 = por %p65, %p66
      %p68 = scmp.ne.s32.totalorder %s57, %s60
      %p69 = scmp.eq.s32.totalorder %s26, 3
      %p70 = por %p68, %p69
      %p71 = scmp.ne.s32.totalorder %s60, %s61
      %p72 = scmp.eq.s32.totalorder %s26, 0
      %p73 = por %p71, %p72
      %p74 = scmp.ne.s32.totalorder %s60, %s61
      %p75 = scmp.eq.s32.totalorder %s27, 3
      %p76 = por %p74, %p75
      %p78 = scmp.ne.s32.totalorder %s61, %s77
      %p79 = scmp.eq.s32.totalorder %s27, 0
      %p80 = por %p78, %p79
      %s82 = sadd.s32 %s81, 1
      %p85 = scmp.eq.s32.totalorder %s21, 3
      %p86 = scmp.ne.s32.totalorder %s81, %s83
      %p87 = scmp.eq.s32.totalorder %s21, 0
      %p88 = por %p86, %p87
      %p89 = scmp.ne.s32.totalorder %s81, %s83
      %p90 = scmp.eq.s32.totalorder %s26, 3
      %p91 = por %p89, %p90
      %p92 = scmp.ne.s32.totalorder %s83, %s84
      %p93 = scmp.eq.s32.totalorder %s26, 0
      %p94 = por %p92, %p93
      %p95 = scmp.ne.s32.totalorder %s83, %s84
      %p96 = scmp.eq.s32.totalorder %s27, 3
      %p97 = por %p95, %p96
      %p99 = scmp.ne.s32.totalorder %s84, %s98
      %p100 = scmp.eq.s32.totalorder %s27, 0
      %p101 = por %p99, %p100
      %s103 = sadd.s32 %s102, 1
      %p106 = scmp.eq.s32.totalorder %s21, 3
      %p107 = scmp.ne.s32.totalorder %s102, %s104
      %p108 = scmp.eq.s32.totalorder %s21, 0
      %p109 = por %p107, %p108
      %p110 = scmp.ne.s32.totalorder %s102, %s104
      %p111 = scmp.eq.s32.totalorder %s26, 3
      %p112 = por %p110, %p111
      %p113 = scmp.ne.s32.totalorder %s104, %s105
      %p114 = scmp.eq.s32.totalorder %s26, 0
      %p115 = por %p113, %p114
      %p116 = scmp.ne.s32.totalorder %s104, %s105
      %p117 = scmp.eq.s32.totalorder %s27, 3
      %p118 = por %p116, %p117
      %p120 = scmp.ne.s32.totalorder %s105, %s119
      %p121 = scmp.eq.s32.totalorder %s27, 0
      %p122 = por %p120, %p121
      %s124 = sadd.s32 %s123, 1
      %p127 = scmp.eq.s32.totalorder %s21, 3
      %p128 = scmp.ne.s32.totalorder %s123, %s125
      %p129 = scmp.eq.s32.totalorder %s21, 0
      %p130 = por %p128, %p129
      %p131 = scmp.ne.s32.totalorder %s123, %s125
      %p132 = scmp.eq.s32.totalorder %s26, 3
      %p133 = por %p131, %p132
      %p134 = scmp.ne.s32.totalorder %s125, %s126
      %p135 = scmp.eq.s32.totalorder %s26, 0
      %p136 = por %p134, %p135
      %p137 = scmp.ne.s32.totalorder %s125, %s126
      %p138 = scmp.eq.s32.totalorder %s27, 3
      %p139 = por %p137, %p138
      %p141 = scmp.ne.s32.totalorder %s126, %s140
      %p142 = scmp.eq.s32.totalorder %s27, 0
      %p143 = por %p141, %p142
      %s144 = ssub.s32 %s21, %s28
      %p145 = scmp.eq.s32.totalorder %s144, 0
      %s147 = sadd.s32 %s146, 1
      %s148 = scalar_select %p145, %s146, %s147
      %p151 = pneg %p145
      %p152 = scmp.eq.s32.totalorder %s21, 3
      %p153 = por %p151, %p152
      %p154 = scmp.ne.s32.totalorder %s146, %s149
      %p155 = scmp.eq.s32.totalorder %s21, 0
      %p156 = por %p154, %p155
      %p157 = scmp.ne.s32.totalorder %s146, %s149
      %p158 = scmp.eq.s32.totalorder %s26, 3
      %p159 = por %p157, %p158
      %p160 = scmp.ne.s32.totalorder %s149, %s150
      %p161 = scmp.eq.s32.totalorder %s26, 0
      %p162 = por %p160, %p161
      %p163 = scmp.ne.s32.totalorder %s149, %s150
      %p164 = scmp.eq.s32.totalorder %s27, 3
      %p165 = por %p163, %p164
      %p167 = scmp.ne.s32.totalorder %s150, %s166
      %p168 = scmp.eq.s32.totalorder %s27, 0
      %p169 = por %p167, %p168
      %p170 = scmp.le.s32.totalorder 1, %s21
      %p171 = scmp.lt.s32.totalorder %s21, 5
      %p172 = pnand %p170, %p171
      %p173 = pneg %p172
      // Predicated region
      $region9: #{tpu_custom_call.1} parent=5 // pred_check
        _
      $region10: #{tpu_custom_call.1} parent=5 // pred_check_branch
        %175 = sbr.rel (%p172) target = $region12
      $region11: #{tpu_custom_call.1} parent=5 // pred_region
        %s176 = ssub.s32 %s21, 1
        // Predicated region
        $region13: #{tpu_custom_call.1} parent=11 // pred_check
          %p177 = pneg %p94
        $region14: #{tpu_custom_call.1} parent=11 // pred_check_branch
          %179 = sbr.rel (%p177) target = $region16
        $region15: #{tpu_custom_call.1} parent=11 // pred_region
          %s181 = ssub.s32 8192, 8192
          %182 = vsyncadd [#allocation6], %s181
          %s183 = sshll.u32 [#allocation7], 4
          %s184 = int_to_ptr.vmem [resolvable:$true] %s183
          %189 = dma.hbm_to_vmem [thread:$0]  %s2, 8192, %s184, [#allocation6], 512, 512, 32
        $region16: #{tpu_custom_call.1} parent=11 // pred_fallthru
          _
        // Predicated region
        $region17: #{tpu_custom_call.1} parent=11 // pred_check
          %p190 = pneg %p115
        $region18: #{tpu_custom_call.1} parent=11 // pred_check_branch
          %192 = sbr.rel (%p190) target = $region20
        $region19: #{tpu_custom_call.1} parent=11 // pred_region
          %s194 = ssub.s32 4096, 4096
          %195 = vsyncadd [#allocation9], %s194
          %s196 = sshll.u32 [#allocation8], 4
          %s197 = int_to_ptr.vmem [resolvable:$true] %s196
          %202 = dma.hbm_to_vmem [thread:$0]  %s3, 4096, %s197, [#allocation9], 128, 128, 8
        $region20: #{tpu_custom_call.1} parent=11 // pred_fallthru
          _
        // Predicated region
        $region21: #{tpu_custom_call.1} parent=11 // pred_check
          %p203 = pneg %p136
        $region22: #{tpu_custom_call.1} parent=11 // pred_check_branch
          %205 = sbr.rel (%p203) target = $region24
        $region23: #{tpu_custom_call.1} parent=11 // pred_region
          %s207 = ssub.s32 128, 128
          %208 = vsyncadd [#allocation9], %s207
          %s210 = sshll.u32 [#allocation10], 4
          %s211 = int_to_ptr.vmem [resolvable:$true] %s210
          %213 = dma.hbm_to_vmem [thread:$0]  %s4, 128, %s211, [#allocation9]
        $region24: #{tpu_custom_call.1} parent=11 // pred_fallthru
          _
      $region12: #{tpu_custom_call.1} parent=5 // pred_fallthru
        _
      %p214 = scmp.lt.s32.totalorder %s21, 4
      // Predicated region
      $region25: #{tpu_custom_call.1} parent=5 // pred_check
        %p215 = pneg %p214
      $region26: #{tpu_custom_call.1} parent=5 // pred_check_branch
        %217 = sbr.rel (%p215) target = $region28
      $region27: #{tpu_custom_call.1} parent=5 // pred_region
        // Predicated region
        $region29: #{tpu_custom_call.1} parent=27 // pred_check
          %p218 = pneg %p41
        $region30: #{tpu_custom_call.1} parent=27 // pred_check_branch
          %220 = sbr.rel (%p218) target = $region32
        $region31: #{tpu_custom_call.1} parent=27 // pred_region
          %s221 = sand.u32 %s31, 1
          %s222 = scalar_lea.sflag [#allocation3], %s221
          %s223 = sand.u32 %s31, 1
          %s224 = smul.addr %s223, 128
          %s225 = scalar_lea.vmem [#allocation2], %s224
          %s226 = smul.u32 32, %s21
          %s228 = ssub.s32 2048, 2048
          %229 = vsyncadd %s222, %s228
          %s230 = smul.addr %s226, 64
          %s231 = scalar_lea.hbm %s0, %s230
          %s232 = sshll.u32 %s225, 4
          %s233 = int_to_ptr.vmem [resolvable:$true] %s232
          %238 = dma.hbm_to_vmem [thread:$0]  %s231, 2048, %s233, %s222, 64, 64, 4
        $region32: #{tpu_custom_call.1} parent=27 // pred_fallthru
          _
        // Predicated region
        $region33: #{tpu_custom_call.1} parent=27 // pred_check
          %p239 = pneg %p67
        $region34: #{tpu_custom_call.1} parent=27 // pred_check_branch
          %241 = sbr.rel (%p239) target = $region36
        $region35: #{tpu_custom_call.1} parent=27 // pred_region
          %s242 = sand.u32 %s21, 1
          %s243 = scalar_lea.sflag [#allocation6], %s242
          %s244 = sand.u32 %s57, 1
          %s245 = smul.addr %s244, 1024
          %s246 = scalar_lea.vmem [#allocation5], %s245
          %s247 = smul.u32 32, %s21
          %s249 = ssub.s32 16384, 16384
          %250 = vsyncadd %s243, %s249
          %s251 = smul.addr %s247, 8
          %s252 = smul.addr %s251, 64
          %s253 = scalar_lea.hbm %s1, %s252
          %s254 = sshll.u32 %s246, 4
          %s255 = int_to_ptr.vmem [resolvable:$true] %s254
          %260 = dma.hbm_to_vmem [thread:$0]  %s253, 16384, %s255, %s243, 512, 512, 32
        $region36: #{tpu_custom_call.1} parent=27 // pred_fallthru
          _
      $region28: #{tpu_custom_call.1} parent=5 // pred_fallthru
        _
      %p261 = scmp.le.s32.totalorder 1, %s21
      %p262 = scmp.lt.s32.totalorder %s21, 5
      %p263 = pnand %p261, %p262
      %p264 = pneg %p263
      // Predicated region
      $region37: #{tpu_custom_call.1} parent=5 // pred_check
        _
      $region38: #{tpu_custom_call.1} parent=5 // pred_check_branch
        %266 = sbr.rel (%p263) target = $region40
      $region39: #{tpu_custom_call.1} parent=5 // pred_region
        %s267 = ssub.s32 %s21, 1
        %s268 = sand.u32 %s34, 1
        %s269 = scalar_lea.sflag [#allocation3], %s268
        %s270 = sand.u32 %s34, 1
        %s271 = smul.addr %s270, 128
        %s272 = scalar_lea.vmem [#allocation2], %s271
        // Predicated region
        $region41: #{tpu_custom_call.1} parent=39 // pred_check
          %p273 = pneg %p47
        $region42: #{tpu_custom_call.1} parent=39 // pred_check_branch
          %275 = sbr.rel (%p273) target = $region44
        $region43: #{tpu_custom_call.1} parent=39 // pred_region
          %276 = dma.done %s269, 2048
        $region44: #{tpu_custom_call.1} parent=39 // pred_fallthru
          _
        %s277 = sand.u32 %s26, 1
        %s278 = scalar_lea.sflag [#allocation6], %s277
        %s279 = sand.u32 %s60, 1
        %s280 = smul.addr %s279, 1024
        %s281 = scalar_lea.vmem [#allocation5], %s280
        // Predicated region
        $region45: #{tpu_custom_call.1} parent=39 // pred_check
          %p282 = pneg %p73
        $region46: #{tpu_custom_call.1} parent=39 // pred_check_branch
          %284 = sbr.rel (%p282) target = $region48
        $region47: #{tpu_custom_call.1} parent=39 // pred_region
          %285 = dma.done %s278, 16384
        $region48: #{tpu_custom_call.1} parent=39 // pred_fallthru
          _
        // Predicated region
        $region49: #{tpu_custom_call.1} parent=39 // pred_check
          %p286 = pneg %p94
        $region50: #{tpu_custom_call.1} parent=39 // pred_check_branch
          %288 = sbr.rel (%p286) target = $region52
        $region51: #{tpu_custom_call.1} parent=39 // pred_region
          %289 = dma.done [#allocation6], 8192
        $region52: #{tpu_custom_call.1} parent=39 // pred_fallthru
          _
        // Predicated region
        $region53: #{tpu_custom_call.1} parent=39 // pred_check
          %p290 = pneg %p115
        $region54: #{tpu_custom_call.1} parent=39 // pred_check_branch
          %292 = sbr.rel (%p290) target = $region56
        $region55: #{tpu_custom_call.1} parent=39 // pred_region
          %293 = dma.done [#allocation9], 4096
        $region56: #{tpu_custom_call.1} parent=39 // pred_fallthru
          _
        // Predicated region
        $region57: #{tpu_custom_call.1} parent=39 // pred_check
          %p294 = pneg %p136
        $region58: #{tpu_custom_call.1} parent=39 // pred_check_branch
          %296 = sbr.rel (%p294) target = $region60
        $region59: #{tpu_custom_call.1} parent=39 // pred_region
          %297 = dma.done [#allocation9], 128
        $region60: #{tpu_custom_call.1} parent=39 // pred_fallthru
          _
        %s298 = sand.u32 %s34, 1
        %s299 = scalar_lea.sflag [#allocation3], %s298
        %s300 = sand.u32 %s34, 1
        %s301 = smul.addr %s300, 128
        %s302 = scalar_lea.vmem [#allocation2], %s301
        %p303 = pneg %p47
        %p304 = pneg %p44
        %s305 = sand.u32 %s26, 1
        %s306 = scalar_lea.sflag [#allocation6], %s305
        %s307 = sand.u32 %s60, 1
        %s308 = smul.addr %s307, 1024
        %s309 = scalar_lea.vmem [#allocation5], %s308
        %p310 = pneg %p73
        %p311 = pneg %p70
        %p312 = pneg %p94
        %p313 = pneg %p91
        %p314 = pneg %p115
        %p315 = pneg %p112
        %p316 = pneg %p136
        %p317 = pneg %p133
        %p318 = pneg %p162
        %p319 = pneg %p159
        %s320 = sand.u32 %s149, 1
        %s321 = scalar_lea.sflag [#allocation4], %s320
        %s322 = sand.u32 %s149, 1
        %s323 = smul.addr %s322, 1024
        %s324 = scalar_lea.vmem [#allocation11], %s323
        %s325 = smul.u32 32, %s26
        %s326 = smul.u32 32, %s26
        %s327 = smul.u32 32, %s26
        %v329 = vld [vmem:[%s272] sm:$0xf]
        %v330 = vld [vmem:[%s272 + $0x4] sm:$0xf]
        %v331 = vld [vmem:[%s272 + $0x8] sm:$0xf]
        %v332 = vld [vmem:[%s272 + $0xc] sm:$0xf]
        %v333 = vld [vmem:[%s272 + $0x10] sm:$0xf]
        %v334 = vld [vmem:[%s272 + $0x14] sm:$0xf]
        %v335 = vld [vmem:[%s272 + $0x18] sm:$0xf]
        %v336 = vld [vmem:[%s272 + $0x1c] sm:$0xf]
        %v337 = vld [vmem:[%s272 + $0x20] sm:$0xf]
        %v338 = vld [vmem:[%s272 + $0x24] sm:$0xf]
        %v339 = vld [vmem:[%s272 + $0x28] sm:$0xf]
        %v340 = vld [vmem:[%s272 + $0x2c] sm:$0xf]
        %v341 = vld [vmem:[%s272 + $0x30] sm:$0xf]
        %v342 = vld [vmem:[%s272 + $0x34] sm:$0xf]
        %v343 = vld [vmem:[%s272 + $0x38] sm:$0xf]
        %v344 = vld [vmem:[%s272 + $0x3c] sm:$0xf]
        %v345 = vld [vmem:[%s272 + $0x40] sm:$0xf]
        %v346 = vld [vmem:[%s272 + $0x44] sm:$0xf]
        %v347 = vld [vmem:[%s272 + $0x48] sm:$0xf]
        %v348 = vld [vmem:[%s272 + $0x4c] sm:$0xf]
        %v349 = vld [vmem:[%s272 + $0x50] sm:$0xf]
        %v350 = vld [vmem:[%s272 + $0x54] sm:$0xf]
        %v351 = vld [vmem:[%s272 + $0x58] sm:$0xf]
        %v352 = vld [vmem:[%s272 + $0x5c] sm:$0xf]
        %v353 = vld [vmem:[%s272 + $0x60] sm:$0xf]
        %v354 = vld [vmem:[%s272 + $0x64] sm:$0xf]
        %v355 = vld [vmem:[%s272 + $0x68] sm:$0xf]
        %v356 = vld [vmem:[%s272 + $0x6c] sm:$0xf]
        %v357 = vld [vmem:[%s272 + $0x70] sm:$0xf]
        %v358 = vld [vmem:[%s272 + $0x74] sm:$0xf]
        %v359 = vld [vmem:[%s272 + $0x78] sm:$0xf]
        %v360 = vld [vmem:[%s272 + $0x7c] sm:$0xf]
        %v361 = vld [vmem:[#allocation8] sm:$0xff]
        %v362 = vld [vmem:[#allocation8 + $0x8] sm:$0xff]
        %v363 = vld [vmem:[#allocation8 + $0x10] sm:$0xff]
        %v364 = vld [vmem:[#allocation8 + $0x18] sm:$0xff]
        %v365 = vld [vmem:[#allocation8 + $0x20] sm:$0xff]
        %v366 = vld [vmem:[#allocation8 + $0x28] sm:$0xff]
        %v367 = vld [vmem:[#allocation8 + $0x30] sm:$0xff]
        %v368 = vld [vmem:[#allocation8 + $0x38] sm:$0xff]
        %v369 = vld [vmem:[#allocation8 + $0x40] sm:$0xff]
        %v370 = vld [vmem:[#allocation8 + $0x48] sm:$0xff]
        %v371 = vld [vmem:[#allocation8 + $0x50] sm:$0xff]
        %v372 = vld [vmem:[#allocation8 + $0x58] sm:$0xff]
        %v373 = vld [vmem:[#allocation8 + $0x60] sm:$0xff]
        %v374 = vld [vmem:[#allocation8 + $0x68] sm:$0xff]
        %v375 = vld [vmem:[#allocation8 + $0x70] sm:$0xff]
        %v376 = vld [vmem:[#allocation8 + $0x78] sm:$0xff]
        %v377 = vld [vmem:[#allocation8 + $0x80] sm:$0xff]
        %v378 = vld [vmem:[#allocation8 + $0x88] sm:$0xff]
        %v379 = vld [vmem:[#allocation8 + $0x90] sm:$0xff]
        %v380 = vld [vmem:[#allocation8 + $0x98] sm:$0xff]
        %v381 = vld [vmem:[#allocation8 + $0xa0] sm:$0xff]
        %v382 = vld [vmem:[#allocation8 + $0xa8] sm:$0xff]
        %v383 = vld [vmem:[#allocation8 + $0xb0] sm:$0xff]
        %v384 = vld [vmem:[#allocation8 + $0xb8] sm:$0xff]
        %v385 = vld [vmem:[#allocation8 + $0xc0] sm:$0xff]
        %v386 = vld [vmem:[#allocation8 + $0xc8] sm:$0xff]
        %v387 = vld [vmem:[#allocation8 + $0xd0] sm:$0xff]
        %v388 = vld [vmem:[#allocation8 + $0xd8] sm:$0xff]
        %v389 = vld [vmem:[#allocation8 + $0xe0] sm:$0xff]
        %v390 = vld [vmem:[#allocation8 + $0xe8] sm:$0xff]
        %v391 = vld [vmem:[#allocation8 + $0xf0] sm:$0xff]
        %v392 = vld [vmem:[#allocation8 + $0xf8] sm:$0xff]
        %v393 = vld [vmem:[#allocation7] sm:$0xff]
        %v394 = vld [vmem:[#allocation7 + $0x20] sm:$0xff]
        %v395 = vld [vmem:[#allocation7 + $0x40] sm:$0xff]
        %v396 = vld [vmem:[#allocation7 + $0x60] sm:$0xff]
        %v397 = vld [vmem:[#allocation7 + $0x80] sm:$0xff]
        %v398 = vld [vmem:[#allocation7 + $0xa0] sm:$0xff]
        %v399 = vld [vmem:[#allocation7 + $0xc0] sm:$0xff]
        %v400 = vld [vmem:[#allocation7 + $0xe0] sm:$0xff]
        %v401 = vld [vmem:[#allocation7 + $0x100] sm:$0xff]
        %v402 = vld [vmem:[#allocation7 + $0x120] sm:$0xff]
        %v403 = vld [vmem:[#allocation7 + $0x140] sm:$0xff]
        %v404 = vld [vmem:[#allocation7 + $0x160] sm:$0xff]
        %v405 = vld [vmem:[#allocation7 + $0x180] sm:$0xff]
        %v406 = vld [vmem:[#allocation7 + $0x1a0] sm:$0xff]
        %v407 = vld [vmem:[#allocation7 + $0x1c0] sm:$0xff]
        %v408 = vld [vmem:[#allocation7 + $0x1e0] sm:$0xff]
        %v409 = vld [vmem:[%s281] sm:$0xff]
        %v410 = vld [vmem:[%s281 + $0x20] sm:$0xff]
        %v411 = vld [vmem:[%s281 + $0x40] sm:$0xff]
        %v412 = vld [vmem:[%s281 + $0x60] sm:$0xff]
        %v413 = vld [vmem:[%s281 + $0x80] sm:$0xff]
        %v414 = vld [vmem:[%s281 + $0xa0] sm:$0xff]
        %v415 = vld [vmem:[%s281 + $0xc0] sm:$0xff]
        %v416 = vld [vmem:[%s281 + $0xe0] sm:$0xff]
        %v417 = vld [vmem:[%s281 + $0x100] sm:$0xff]
        %v418 = vld [vmem:[%s281 + $0x120] sm:$0xff]
        %v419 = vld [vmem:[%s281 + $0x140] sm:$0xff]
        %v420 = vld [vmem:[%s281 + $0x160] sm:$0xff]
        %v421 = vld [vmem:[%s281 + $0x180] sm:$0xff]
        %v422 = vld [vmem:[%s281 + $0x1a0] sm:$0xff]
        %v423 = vld [vmem:[%s281 + $0x1c0] sm:$0xff]
        %v424 = vld [vmem:[%s281 + $0x1e0] sm:$0xff]
        %v425 = vld [vmem:[%s281 + $0x200] sm:$0xff]
        %v426 = vld [vmem:[%s281 + $0x220] sm:$0xff]
        %v427 = vld [vmem:[%s281 + $0x240] sm:$0xff]
        %v428 = vld [vmem:[%s281 + $0x260] sm:$0xff]
        %v429 = vld [vmem:[%s281 + $0x280] sm:$0xff]
        %v430 = vld [vmem:[%s281 + $0x2a0] sm:$0xff]
        %v431 = vld [vmem:[%s281 + $0x2c0] sm:$0xff]
        %v432 = vld [vmem:[%s281 + $0x2e0] sm:$0xff]
        %v433 = vld [vmem:[%s281 + $0x300] sm:$0xff]
        %v434 = vld [vmem:[%s281 + $0x320] sm:$0xff]
        %v435 = vld [vmem:[%s281 + $0x340] sm:$0xff]
        %v436 = vld [vmem:[%s281 + $0x360] sm:$0xff]
        %v437 = vld [vmem:[%s281 + $0x380] sm:$0xff]
        %v438 = vld [vmem:[%s281 + $0x3a0] sm:$0xff]
        %v439 = vld [vmem:[%s281 + $0x3c0] sm:$0xff]
        %v440 = vld [vmem:[%s281 + $0x3e0] sm:$0xff]
        %v473 = vunpack.c.l.b16 %v409
        %v474 = vunpack.c.h.b16 %v409
        %v475 = vunpack.c.l.b16 %v410
        %v476 = vunpack.c.h.b16 %v410
        %v477 = vunpack.c.l.b16 %v411
        %v478 = vunpack.c.h.b16 %v411
        %v479 = vunpack.c.l.b16 %v412
        %v480 = vunpack.c.h.b16 %v412
        %v481 = vunpack.c.l.b16 %v413
        %v482 = vunpack.c.h.b16 %v413
        %v483 = vunpack.c.l.b16 %v414
        %v484 = vunpack.c.h.b16 %v414
        %v485 = vunpack.c.l.b16 %v415
        %v486 = vunpack.c.h.b16 %v415
        %v487 = vunpack.c.l.b16 %v416
        %v488 = vunpack.c.h.b16 %v416
        %v489 = vunpack.c.l.b16 %v417
        %v490 = vunpack.c.h.b16 %v417
        %v491 = vunpack.c.l.b16 %v418
        %v492 = vunpack.c.h.b16 %v418
        %v493 = vunpack.c.l.b16 %v419
        %v494 = vunpack.c.h.b16 %v419
        %v495 = vunpack.c.l.b16 %v420
        %v496 = vunpack.c.h.b16 %v420
        %v497 = vunpack.c.l.b16 %v421
        %v498 = vunpack.c.h.b16 %v421
        %v499 = vunpack.c.l.b16 %v422
        %v500 = vunpack.c.h.b16 %v422
        %v501 = vunpack.c.l.b16 %v423
        %v502 = vunpack.c.h.b16 %v423
        %v503 = vunpack.c.l.b16 %v424
        %v504 = vunpack.c.h.b16 %v424
        %v505 = vunpack.c.l.b16 %v425
        %v506 = vunpack.c.h.b16 %v425
        %v507 = vunpack.c.l.b16 %v426
        %v508 = vunpack.c.h.b16 %v426
        %v509 = vunpack.c.l.b16 %v427
        %v510 = vunpack.c.h.b16 %v427
        %v511 = vunpack.c.l.b16 %v428
        %v512 = vunpack.c.h.b16 %v428
        %v513 = vunpack.c.l.b16 %v429
        %v514 = vunpack.c.h.b16 %v429
        %v515 = vunpack.c.l.b16 %v430
        %v516 = vunpack.c.h.b16 %v430
        %v517 = vunpack.c.l.b16 %v431
        %v518 = vunpack.c.h.b16 %v431
        %v519 = vunpack.c.l.b16 %v432
        %v520 = vunpack.c.h.b16 %v432
        %v521 = vunpack.c.l.b16 %v433
        %v522 = vunpack.c.h.b16 %v433
        %v523 = vunpack.c.l.b16 %v434
        %v524 = vunpack.c.h.b16 %v434
        %v525 = vunpack.c.l.b16 %v435
        %v526 = vunpack.c.h.b16 %v435
        %v527 = vunpack.c.l.b16 %v436
        %v528 = vunpack.c.h.b16 %v436
        %v529 = vunpack.c.l.b16 %v437
        %v530 = vunpack.c.h.b16 %v437
        %v531 = vunpack.c.l.b16 %v438
        %v532 = vunpack.c.h.b16 %v438
        %v533 = vunpack.c.l.b16 %v439
        %v534 = vunpack.c.h.b16 %v439
        %v535 = vunpack.c.l.b16 %v440
        %v536 = vunpack.c.h.b16 %v440
        %v537 = vpack.c.b16 %v475, %v473
        %v538 = vpack.c.b16 %v476, %v474
        %v539 = vpack.c.b16 %v479, %v477
        %v540 = vpack.c.b16 %v480, %v478
        %v541 = vpack.c.b16 %v483, %v481
        %v542 = vpack.c.b16 %v484, %v482
        %v543 = vpack.c.b16 %v487, %v485
        %v544 = vpack.c.b16 %v488, %v486
        %v545 = vpack.c.b16 %v491, %v489
        %v546 = vpack.c.b16 %v492, %v490
        %v547 = vpack.c.b16 %v495, %v493
        %v548 = vpack.c.b16 %v496, %v494
        %v549 = vpack.c.b16 %v499, %v497
        %v550 = vpack.c.b16 %v500, %v498
        %v551 = vpack.c.b16 %v503, %v501
        %v552 = vpack.c.b16 %v504, %v502
        %v553 = vpack.c.b16 %v507, %v505
        %v554 = vpack.c.b16 %v508, %v506
        %v555 = vpack.c.b16 %v511, %v509
        %v556 = vpack.c.b16 %v512, %v510
        %v557 = vpack.c.b16 %v515, %v513
        %v558 = vpack.c.b16 %v516, %v514
        %v559 = vpack.c.b16 %v519, %v517
        %v560 = vpack.c.b16 %v520, %v518
        %v561 = vpack.c.b16 %v523, %v521
        %v562 = vpack.c.b16 %v524, %v522
        %v563 = vpack.c.b16 %v527, %v525
        %v564 = vpack.c.b16 %v528, %v526
        %v565 = vpack.c.b16 %v531, %v529
        %v566 = vpack.c.b16 %v532, %v530
        %v567 = vpack.c.b16 %v535, %v533
        %v568 = vpack.c.b16 %v536, %v534
        %v633 = vunpack.c.l.b16 %v361
        %v634 = vunpack.c.h.b16 %v361
        %v635 = vunpack.c.l.b16 %v362
        %v636 = vunpack.c.h.b16 %v362
        %v637 = vunpack.c.l.b16 %v363
        %v638 = vunpack.c.h.b16 %v363
        %v639 = vunpack.c.l.b16 %v364
        %v640 = vunpack.c.h.b16 %v364
        %v641 = vunpack.c.l.b16 %v365
        %v642 = vunpack.c.h.b16 %v365
        %v643 = vunpack.c.l.b16 %v366
        %v644 = vunpack.c.h.b16 %v366
        %v645 = vunpack.c.l.b16 %v367
        %v646 = vunpack.c.h.b16 %v367
        %v647 = vunpack.c.l.b16 %v368
        %v648 = vunpack.c.h.b16 %v368
        %v649 = vunpack.c.l.b16 %v369
        %v650 = vunpack.c.h.b16 %v369
        %v651 = vunpack.c.l.b16 %v370
        %v652 = vunpack.c.h.b16 %v370
        %v653 = vunpack.c.l.b16 %v371
        %v654 = vunpack.c.h.b16 %v371
        %v655 = vunpack.c.l.b16 %v372
        %v656 = vunpack.c.h.b16 %v372
        %v657 = vunpack.c.l.b16 %v373
        %v658 = vunpack.c.h.b16 %v373
        %v659 = vunpack.c.l.b16 %v374
        %v660 = vunpack.c.h.b16 %v374
        %v661 = vunpack.c.l.b16 %v375
        %v662 = vunpack.c.h.b16 %v375
        %v663 = vunpack.c.l.b16 %v376
        %v664 = vunpack.c.h.b16 %v376
        %v665 = vunpack.c.l.b16 %v377
        %v666 = vunpack.c.h.b16 %v377
        %v667 = vunpack.c.l.b16 %v378
        %v668 = vunpack.c.h.b16 %v378
        %v669 = vunpack.c.l.b16 %v379
        %v670 = vunpack.c.h.b16 %v379
        %v671 = vunpack.c.l.b16 %v380
        %v672 = vunpack.c.h.b16 %v380
        %v673 = vunpack.c.l.b16 %v381
        %v674 = vunpack.c.h.b16 %v381
        %v675 = vunpack.c.l.b16 %v382
        %v676 = vunpack.c.h.b16 %v382
        %v677 = vunpack.c.l.b16 %v383
        %v678 = vunpack.c.h.b16 %v383
        %v679 = vunpack.c.l.b16 %v384
        %v680 = vunpack.c.h.b16 %v384
        %v681 = vunpack.c.l.b16 %v385
        %v682 = vunpack.c.h.b16 %v385
        %v683 = vunpack.c.l.b16 %v386
        %v684 = vunpack.c.h.b16 %v386
        %v685 = vunpack.c.l.b16 %v387
        %v686 = vunpack.c.h.b16 %v387
        %v687 = vunpack.c.l.b16 %v388
        %v688 = vunpack.c.h.b16 %v388
        %v689 = vunpack.c.l.b16 %v389
        %v690 = vunpack.c.h.b16 %v389
        %v691 = vunpack.c.l.b16 %v390
        %v692 = vunpack.c.h.b16 %v390
        %v693 = vunpack.c.l.b16 %v391
        %v694 = vunpack.c.h.b16 %v391
        %v695 = vunpack.c.l.b16 %v392
        %v696 = vunpack.c.h.b16 %v392
        %v697 = vpack.c.b16 %v635, %v633
        %v698 = vpack.c.b16 %v636, %v634
        %v699 = vpack.c.b16 %v639, %v637
        %v700 = vpack.c.b16 %v640, %v638
        %v701 = vpack.c.b16 %v643, %v641
        %v702 = vpack.c.b16 %v644, %v642
        %v703 = vpack.c.b16 %v647, %v645
        %v704 = vpack.c.b16 %v648, %v646
        %v705 = vpack.c.b16 %v651, %v649
        %v706 = vpack.c.b16 %v652, %v650
        %v707 = vpack.c.b16 %v655, %v653
        %v708 = vpack.c.b16 %v656, %v654
        %v709 = vpack.c.b16 %v659, %v657
        %v710 = vpack.c.b16 %v660, %v658
        %v711 = vpack.c.b16 %v663, %v661
        %v712 = vpack.c.b16 %v664, %v662
        %v713 = vpack.c.b16 %v667, %v665
        %v714 = vpack.c.b16 %v668, %v666
        %v715 = vpack.c.b16 %v671, %v669
        %v716 = vpack.c.b16 %v672, %v670
        %v717 = vpack.c.b16 %v675, %v673
        %v718 = vpack.c.b16 %v676, %v674
        %v719 = vpack.c.b16 %v679, %v677
        %v720 = vpack.c.b16 %v680, %v678
        %v721 = vpack.c.b16 %v683, %v681
        %v722 = vpack.c.b16 %v684, %v682
        %v723 = vpack.c.b16 %v687, %v685
        %v724 = vpack.c.b16 %v688, %v686
        %v725 = vpack.c.b16 %v691, %v689
        %v726 = vpack.c.b16 %v692, %v690
        %v727 = vpack.c.b16 %v695, %v693
        %v728 = vpack.c.b16 %v696, %v694
        %761 = vmatprep.subr.bf16.mxu0 %v698
        %762 = vmatpush1.bf16.msra.mxu0 %v697
        %763 = vmatprep.subr.bf16.mxu0 %v700
        %764 = vmatpush1.bf16.msra.mxu0 %v699
        %765 = vmatprep.subr.bf16.mxu0 %v702
        %766 = vmatpush1.bf16.msra.mxu0 %v701
        %767 = vmatprep.subr.bf16.mxu0 %v704
        %768 = vmatpush1.bf16.msra.mxu0 %v703
        %769 = vmatprep.subr.bf16.mxu0 %v706
        %770 = vmatpush1.bf16.msra.mxu0 %v705
        %771 = vmatprep.subr.bf16.mxu0 %v708
        %772 = vmatpush1.bf16.msra.mxu0 %v707
        %773 = vmatprep.subr.bf16.mxu0 %v710
        %774 = vmatpush1.bf16.msra.mxu0 %v709
        %775 = vmatprep.subr.bf16.mxu0 %v712
        %776 = vmatpush1.bf16.msra.mxu0 %v711
        %777 = vmatprep.subr.bf16.mxu0 %v714
        %778 = vmatpush1.bf16.msra.mxu0 %v713
        %779 = vmatprep.subr.bf16.mxu0 %v716
        %780 = vmatpush1.bf16.msra.mxu0 %v715
        %781 = vmatprep.subr.bf16.mxu0 %v718
        %782 = vmatpush1.bf16.msra.mxu0 %v717
        %783 = vmatprep.subr.bf16.mxu0 %v720
        %784 = vmatpush1.bf16.msra.mxu0 %v719
        %785 = vmatprep.subr.bf16.mxu0 %v722
        %786 = vmatpush1.bf16.msra.mxu0 %v721
        %787 = vmatprep.subr.bf16.mxu0 %v724
        %788 = vmatpush1.bf16.msra.mxu0 %v723
        %789 = vmatprep.subr.bf16.mxu0 %v726
        %790 = vmatpush1.bf16.msra.mxu0 %v725
        %791 = vmatprep.subr.bf16.mxu0 %v728
        %792 = vmatpush1.bf16.msra.mxu0 %v727
        %793 = vmatprep.mubr.bf16.mxu0 %v538
        %794 = vmatmul.mubr.bf16.gmra.mrb[0].mxu0 %v537
        %v795 = vpop.f32.mrb[0].mxu0
        %v796 = vadd.f32 0.0, %v795
        %v797 = vpop.f32.mrb[0].mxu0
        %v798 = vadd.f32 0.0, %v797
        %v799 = vpop.f32.mrb[0].mxu0
        %v800 = vadd.f32 0.0, %v799
        %v801 = vpop.f32.mrb[0].mxu0
        %v802 = vadd.f32 0.0, %v801
        %803 = vmatprep.mubr.bf16.mxu0 %v540
        %804 = vmatmul.mubr.bf16.gmra.mrb[0].mxu0 %v539
        %v805 = vpop.f32.mrb[0].mxu0
        %v806 = vadd.f32 0.0, %v805
        %v807 = vpop.f32.mrb[0].mxu0
        %v808 = vadd.f32 0.0, %v807
        %v809 = vpop.f32.mrb[0].mxu0
        %v810 = vadd.f32 0.0, %v809
        %v811 = vpop.f32.mrb[0].mxu0
        %v812 = vadd.f32 0.0, %v811
        %813 = vmatprep.mubr.bf16.mxu0 %v542
        %814 = vmatmul.mubr.bf16.gmra.mrb[0].mxu0 %v541
        %v815 = vpop.f32.mrb[0].mxu0
        %v816 = vadd.f32 0.0, %v815
        %v817 = vpop.f32.mrb[0].mxu0
        %v818 = vadd.f32 0.0, %v817
        %v819 = vpop.f32.mrb[0].mxu0
        %v820 = vadd.f32 0.0, %v819
        %v821 = vpop.f32.mrb[0].mxu0
        %v822 = vadd.f32 0.0, %v821
        %823 = vmatprep.mubr.bf16.mxu0 %v544
        %824 = vmatmul.mubr.bf16.gmra.mrb[0].mxu0 %v543
        %v825 = vpop.f32.mrb[0].mxu0
        %v826 = vadd.f32 0.0, %v825
        %v827 = vpop.f32.mrb[0].mxu0
        %v828 = vadd.f32 0.0, %v827
        %v829 = vpop.f32.mrb[0].mxu0
        %v830 = vadd.f32 0.0, %v829
        %v831 = vpop.f32.mrb[0].mxu0
        %v832 = vadd.f32 0.0, %v831
        %833 = vmatprep.mubr.bf16.mxu0 %v546
        %834 = vmatmul.mubr.bf16.gmra.mrb[0].mxu0 %v545
        %v835 = vpop.f32.mrb[0].mxu0
        %v836 = vadd.f32 0.0, %v835
        %v837 = vpop.f32.mrb[0].mxu0
        %v838 = vadd.f32 0.0, %v837
        %v839 = vpop.f32.mrb[0].mxu0
        %v840 = vadd.f32 0.0, %v839
        %v841 = vpop.f32.mrb[0].mxu0
        %v842 = vadd.f32 0.0, %v841
        %843 = vmatprep.mubr.bf16.mxu0 %v548
        %844 = vmatmul.mubr.bf16.gmra.mrb[0].mxu0 %v547
        %v845 = vpop.f32.mrb[0].mxu0
        %v846 = vadd.f32 0.0, %v845
        %v847 = vpop.f32.mrb[0].mxu0
        %v848 = vadd.f32 0.0, %v847
        %v849 = vpop.f32.mrb[0].mxu0
        %v850 = vadd.f32 0.0, %v849
        %v851 = vpop.f32.mrb[0].mxu0
        %v852 = vadd.f32 0.0, %v851
        %853 = vmatprep.mubr.bf16.mxu0 %v550
        %854 = vmatmul.mubr.bf16.gmra.mrb[0].mxu0 %v549
        %v855 = vpop.f32.mrb[0].mxu0
        %v856 = vadd.f32 0.0, %v855
        %v857 = vpop.f32.mrb[0].mxu0
        %v858 = vadd.f32 0.0, %v857
        %v859 = vpop.f32.mrb[0].mxu0
        %v860 = vadd.f32 0.0, %v859
        %v861 = vpop.f32.mrb[0].mxu0
        %v862 = vadd.f32 0.0, %v861
        %863 = vmatprep.mubr.bf16.mxu0 %v552
        %864 = vmatmul.mubr.bf16.gmra.mrb[0].mxu0 %v551
        %v865 = vpop.f32.mrb[0].mxu0
        %v866 = vadd.f32 0.0, %v865
        %v867 = vpop.f32.mrb[0].mxu0
        %v868 = vadd.f32 0.0, %v867
        %v869 = vpop.f32.mrb[0].mxu0
        %v870 = vadd.f32 0.0, %v869
        %v871 = vpop.f32.mrb[0].mxu0
        %v872 = vadd.f32 0.0, %v871
        %873 = vmatprep.mubr.bf16.mxu0 %v554
        %874 = vmatmul.mubr.bf16.gmra.mrb[0].mxu0 %v553
        %v875 = vpop.f32.mrb[0].mxu0
        %v876 = vadd.f32 0.0, %v875
        %v877 = vpop.f32.mrb[0].mxu0
        %v878 = vadd.f32 0.0, %v877
        %v879 = vpop.f32.mrb[0].mxu0
        %v880 = vadd.f32 0.0, %v879
        %v881 = vpop.f32.mrb[0].mxu0
        %v882 = vadd.f32 0.0, %v881
        %883 = vmatprep.mubr.bf16.mxu0 %v556
        %884 = vmatmul.mubr.bf16.gmra.mrb[0].mxu0 %v555
        %v885 = vpop.f32.mrb[0].mxu0
        %v886 = vadd.f32 0.0, %v885
        %v887 = vpop.f32.mrb[0].mxu0
        %v888 = vadd.f32 0.0, %v887
        %v889 = vpop.f32.mrb[0].mxu0
        %v890 = vadd.f32 0.0, %v889
        %v891 = vpop.f32.mrb[0].mxu0
        %v892 = vadd.f32 0.0, %v891
        %893 = vmatprep.mubr.bf16.mxu0 %v558
        %894 = vmatmul.mubr.bf16.gmra.mrb[0].mxu0 %v557
        %v895 = vpop.f32.mrb[0].mxu0
        %v896 = vadd.f32 0.0, %v895
        %v897 = vpop.f32.mrb[0].mxu0
        %v898 = vadd.f32 0.0, %v897
        %v899 = vpop.f32.mrb[0].mxu0
        %v900 = vadd.f32 0.0, %v899
        %v901 = vpop.f32.mrb[0].mxu0
        %v902 = vadd.f32 0.0, %v901
        %903 = vmatprep.mubr.bf16.mxu0 %v560
        %904 = vmatmul.mubr.bf16.gmra.mrb[0].mxu0 %v559
        %v905 = vpop.f32.mrb[0].mxu0
        %v906 = vadd.f32 0.0, %v905
        %v907 = vpop.f32.mrb[0].mxu0
        %v908 = vadd.f32 0.0, %v907
        %v909 = vpop.f32.mrb[0].mxu0
        %v910 = vadd.f32 0.0, %v909
        %v911 = vpop.f32.mrb[0].mxu0
        %v912 = vadd.f32 0.0, %v911
        %913 = vmatprep.mubr.bf16.mxu0 %v562
        %914 = vmatmul.mubr.bf16.gmra.mrb[0].mxu0 %v561
        %v915 = vpop.f32.mrb[0].mxu0
        %v916 = vadd.f32 0.0, %v915
        %v917 = vpop.f32.mrb[0].mxu0
        %v918 = vadd.f32 0.0, %v917
        %v919 = vpop.f32.mrb[0].mxu0
        %v920 = vadd.f32 0.0, %v919
        %v921 = vpop.f32.mrb[0].mxu0
        %v922 = vadd.f32 0.0, %v921
        %923 = vmatprep.mubr.bf16.mxu0 %v564
        %924 = vmatmul.mubr.bf16.gmra.mrb[0].mxu0 %v563
        %v925 = vpop.f32.mrb[0].mxu0
        %v926 = vadd.f32 0.0, %v925
        %v927 = vpop.f32.mrb[0].mxu0
        %v928 = vadd.f32 0.0, %v927
        %v929 = vpop.f32.mrb[0].mxu0
        %v930 = vadd.f32 0.0, %v929
        %v931 = vpop.f32.mrb[0].mxu0
        %v932 = vadd.f32 0.0, %v931
        %933 = vmatprep.mubr.bf16.mxu0 %v566
        %934 = vmatmul.mubr.bf16.gmra.mrb[0].mxu0 %v565
        %v935 = vpop.f32.mrb[0].mxu0
        %v936 = vadd.f32 0.0, %v935
        %v937 = vpop.f32.mrb[0].mxu0
        %v938 = vadd.f32 0.0, %v937
        %v939 = vpop.f32.mrb[0].mxu0
        %v940 = vadd.f32 0.0, %v939
        %v941 = vpop.f32.mrb[0].mxu0
        %v942 = vadd.f32 0.0, %v941
        %943 = vmatprep.mubr.bf16.mxu0 %v568
        %944 = vmatmul.mubr.bf16.gmra.mrb[0].mxu0 %v567
        %v945 = vpop.f32.mrb[0].mxu0
        %v946 = vadd.f32 0.0, %v945
        %v947 = vpop.f32.mrb[0].mxu0
        %v948 = vadd.f32 0.0, %v947
        %v949 = vpop.f32.mrb[0].mxu0
        %v950 = vadd.f32 0.0, %v949
        %v951 = vpop.f32.mrb[0].mxu0
        %v952 = vadd.f32 0.0, %v951
        %953 = vdwg.mxu0
        %v986 = vunpack.c.l.b16 %v329
        %v987 = vunpack.c.l.b16 %v330
        %v988 = vunpack.c.l.b16 %v331
        %v989 = vunpack.c.l.b16 %v332
        %v990 = vunpack.c.l.b16 %v333
        %v991 = vunpack.c.l.b16 %v334
        %v992 = vunpack.c.l.b16 %v335
        %v993 = vunpack.c.l.b16 %v336
        %v994 = vunpack.c.l.b16 %v337
        %v995 = vunpack.c.l.b16 %v338
        %v996 = vunpack.c.l.b16 %v339
        %v997 = vunpack.c.l.b16 %v340
        %v998 = vunpack.c.l.b16 %v341
        %v999 = vunpack.c.l.b16 %v342
        %v1000 = vunpack.c.l.b16 %v343
        %v1001 = vunpack.c.l.b16 %v344
        %v1002 = vunpack.c.l.b16 %v345
        %v1003 = vunpack.c.l.b16 %v346
        %v1004 = vunpack.c.l.b16 %v347
        %v1005 = vunpack.c.l.b16 %v348
        %v1006 = vunpack.c.l.b16 %v349
        %v1007 = vunpack.c.l.b16 %v350
        %v1008 = vunpack.c.l.b16 %v351
        %v1009 = vunpack.c.l.b16 %v352
        %v1010 = vunpack.c.l.b16 %v353
        %v1011 = vunpack.c.l.b16 %v354
        %v1012 = vunpack.c.l.b16 %v355
        %v1013 = vunpack.c.l.b16 %v356
        %v1014 = vunpack.c.l.b16 %v357
        %v1015 = vunpack.c.l.b16 %v358
        %v1016 = vunpack.c.l.b16 %v359
        %v1017 = vunpack.c.l.b16 %v360
        %v1018 = vpack.c.b16 %v987, %v986
        %v1019 = vpack.c.b16 %v989, %v988
        %v1020 = vpack.c.b16 %v991, %v990
        %v1021 = vpack.c.b16 %v993, %v992
        %v1022 = vpack.c.b16 %v995, %v994
        %v1023 = vpack.c.b16 %v997, %v996
        %v1024 = vpack.c.b16 %v999, %v998
        %v1025 = vpack.c.b16 %v1001, %v1000
        %v1026 = vpack.c.b16 %v1003, %v1002
        %v1027 = vpack.c.b16 %v1005, %v1004
        %v1028 = vpack.c.b16 %v1007, %v1006
        %v1029 = vpack.c.b16 %v1009, %v1008
        %v1030 = vpack.c.b16 %v1011, %v1010
        %v1031 = vpack.c.b16 %v1013, %v1012
        %v1032 = vpack.c.b16 %v1015, %v1014
        %v1033 = vpack.c.b16 %v1017, %v1016
        %v1066 = vunpack.c.l.b16 %v393
        %v1067 = vunpack.c.h.b16 %v393
        %v1068 = vunpack.c.l.b16 %v394
        %v1069 = vunpack.c.h.b16 %v394
        %v1070 = vunpack.c.l.b16 %v395
        %v1071 = vunpack.c.h.b16 %v395
        %v1072 = vunpack.c.l.b16 %v396
        %v1073 = vunpack.c.h.b16 %v396
        %v1074 = vunpack.c.l.b16 %v397
        %v1075 = vunpack.c.h.b16 %v397
        %v1076 = vunpack.c.l.b16 %v398
        %v1077 = vunpack.c.h.b16 %v398
        %v1078 = vunpack.c.l.b16 %v399
        %v1079 = vunpack.c.h.b16 %v399
        %v1080 = vunpack.c.l.b16 %v400
        %v1081 = vunpack.c.h.b16 %v400
        %v1082 = vunpack.c.l.b16 %v401
        %v1083 = vunpack.c.h.b16 %v401
        %v1084 = vunpack.c.l.b16 %v402
        %v1085 = vunpack.c.h.b16 %v402
        %v1086 = vunpack.c.l.b16 %v403
        %v1087 = vunpack.c.h.b16 %v403
        %v1088 = vunpack.c.l.b16 %v404
        %v1089 = vunpack.c.h.b16 %v404
        %v1090 = vunpack.c.l.b16 %v405
        %v1091 = vunpack.c.h.b16 %v405
        %v1092 = vunpack.c.l.b16 %v406
        %v1093 = vunpack.c.h.b16 %v406
        %v1094 = vunpack.c.l.b16 %v407
        %v1095 = vunpack.c.h.b16 %v407
        %v1096 = vunpack.c.l.b16 %v408
        %v1097 = vunpack.c.h.b16 %v408
        %v1098 = vpack.c.b16 %v1068, %v1066
        %v1099 = vpack.c.b16 %v1069, %v1067
        %v1100 = vpack.c.b16 %v1072, %v1070
        %v1101 = vpack.c.b16 %v1073, %v1071
        %v1102 = vpack.c.b16 %v1076, %v1074
        %v1103 = vpack.c.b16 %v1077, %v1075
        %v1104 = vpack.c.b16 %v1080, %v1078
        %v1105 = vpack.c.b16 %v1081, %v1079
        %v1106 = vpack.c.b16 %v1084, %v1082
        %v1107 = vpack.c.b16 %v1085, %v1083
        %v1108 = vpack.c.b16 %v1088, %v1086
        %v1109 = vpack.c.b16 %v1089, %v1087
        %v1110 = vpack.c.b16 %v1092, %v1090
        %v1111 = vpack.c.b16 %v1093, %v1091
        %v1112 = vpack.c.b16 %v1096, %v1094
        %v1113 = vpack.c.b16 %v1097, %v1095
        %1130 = vmatprep.subr.bf16.mxu0 %v1099
        %1131 = vmatpush1.bf16.msra.mxu0 %v1098
        %1132 = vmatprep.subr.bf16.mxu0 %v1101
        %1133 = vmatpush1.bf16.msra.mxu0 %v1100
        %1134 = vmatprep.subr.bf16.mxu0 %v1103
        %1135 = vmatpush1.bf16.msra.mxu0 %v1102
        %1136 = vmatprep.subr.bf16.mxu0 %v1105
        %1137 = vmatpush1.bf16.msra.mxu0 %v1104
        %1138 = vmatprep.subr.bf16.mxu0 %v1107
        %1139 = vmatpush1.bf16.msra.mxu0 %v1106
        %1140 = vmatprep.subr.bf16.mxu0 %v1109
        %1141 = vmatpush1.bf16.msra.mxu0 %v1108
        %1142 = vmatprep.subr.bf16.mxu0 %v1111
        %1143 = vmatpush1.bf16.msra.mxu0 %v1110
        %1144 = vmatprep.subr.bf16.mxu0 %v1113
        %1145 = vmatpush1.bf16.msra.mxu0 %v1112
        %1146 = vmatprep.subr.bf16.mxu0 0
        %1147 = vmatpush1.bf16.msra.mxu0 0
        %1148 = vmatprep.subr.bf16.mxu0 0
        %1149 = vmatpush1.bf16.msra.mxu0 0
        %1150 = vmatprep.subr.bf16.mxu0 0
        %1151 = vmatpush1.bf16.msra.mxu0 0
        %1152 = vmatprep.subr.bf16.mxu0 0
        %1153 = vmatpush1.bf16.msra.mxu0 0
        %1154 = vmatprep.subr.bf16.mxu0 0
        %1155 = vmatpush1.bf16.msra.mxu0 0
        %1156 = vmatprep.subr.bf16.mxu0 0
        %1157 = vmatpush1.bf16.msra.mxu0 0
        %1158 = vmatprep.subr.bf16.mxu0 0
        %1159 = vmatpush1.bf16.msra.mxu0 0
        %1160 = vmatprep.subr.bf16.mxu0 0
        %1161 = vmatpush1.bf16.msra.mxu0 0
        %1162 = vmatprep.mubr.bf16.mxu0 0
        %1163 = vmatmul.mubr.bf16.gmra.mrb[0].mxu0 %v1018
        %v1164 = vpop.f32.mrb[0].mxu0
        %v1165 = vadd.f32 %v796, %v1164
        %v1166 = vpop.f32.mrb[0].mxu0
        %v1167 = vadd.f32 %v798, %v1166
        %v1168 = vpop.f32.mrb[0].mxu0
        %v1169 = vadd.f32 %v800, %v1168
        %v1170 = vpop.f32.mrb[0].mxu0
        %v1171 = vadd.f32 %v802, %v1170
        %1172 = vmatprep.mubr.bf16.mxu0 0
        %1173 = vmatmul.mubr.bf16.gmra.mrb[0].mxu0 %v1019
        %v1174 = vpop.f32.mrb[0].mxu0
        %v1175 = vadd.f32 %v806, %v1174
        %v1176 = vpop.f32.mrb[0].mxu0
        %v1177 = vadd.f32 %v808, %v1176
        %v1178 = vpop.f32.mrb[0].mxu0
        %v1179 = vadd.f32 %v810, %v1178
        %v1180 = vpop.f32.mrb[0].mxu0
        %v1181 = vadd.f32 %v812, %v1180
        %1182 = vmatprep.mubr.bf16.mxu0 0
        %1183 = vmatmul.mubr.bf16.gmra.mrb[0].mxu0 %v1020
        %v1184 = vpop.f32.mrb[0].mxu0
        %v1185 = vadd.f32 %v816, %v1184
        %v1186 = vpop.f32.mrb[0].mxu0
        %v1187 = vadd.f32 %v818, %v1186
        %v1188 = vpop.f32.mrb[0].mxu0
        %v1189 = vadd.f32 %v820, %v1188
        %v1190 = vpop.f32.mrb[0].mxu0
        %v1191 = vadd.f32 %v822, %v1190
        %1192 = vmatprep.mubr.bf16.mxu0 0
        %1193 = vmatmul.mubr.bf16.gmra.mrb[0].mxu0 %v1021
        %v1194 = vpop.f32.mrb[0].mxu0
        %v1195 = vadd.f32 %v826, %v1194
        %v1196 = vpop.f32.mrb[0].mxu0
        %v1197 = vadd.f32 %v828, %v1196
        %v1198 = vpop.f32.mrb[0].mxu0
        %v1199 = vadd.f32 %v830, %v1198
        %v1200 = vpop.f32.mrb[0].mxu0
        %v1201 = vadd.f32 %v832, %v1200
        %1202 = vmatprep.mubr.bf16.mxu0 0
        %1203 = vmatmul.mubr.bf16.gmra.mrb[0].mxu0 %v1022
        %v1204 = vpop.f32.mrb[0].mxu0
        %v1205 = vadd.f32 %v836, %v1204
        %v1206 = vpop.f32.mrb[0].mxu0
        %v1207 = vadd.f32 %v838, %v1206
        %v1208 = vpop.f32.mrb[0].mxu0
        %v1209 = vadd.f32 %v840, %v1208
        %v1210 = vpop.f32.mrb[0].mxu0
        %v1211 = vadd.f32 %v842, %v1210
        %1212 = vmatprep.mubr.bf16.mxu0 0
        %1213 = vmatmul.mubr.bf16.gmra.mrb[0].mxu0 %v1023
        %v1214 = vpop.f32.mrb[0].mxu0
        %v1215 = vadd.f32 %v846, %v1214
        %v1216 = vpop.f32.mrb[0].mxu0
        %v1217 = vadd.f32 %v848, %v1216
        %v1218 = vpop.f32.mrb[0].mxu0
        %v1219 = vadd.f32 %v850, %v1218
        %v1220 = vpop.f32.mrb[0].mxu0
        %v1221 = vadd.f32 %v852, %v1220
        %1222 = vmatprep.mubr.bf16.mxu0 0
        %1223 = vmatmul.mubr.bf16.gmra.mrb[0].mxu0 %v1024
        %v1224 = vpop.f32.mrb[0].mxu0
        %v1225 = vadd.f32 %v856, %v1224
        %v1226 = vpop.f32.mrb[0].mxu0
        %v1227 = vadd.f32 %v858, %v1226
        %v1228 = vpop.f32.mrb[0].mxu0
        %v1229 = vadd.f32 %v860, %v1228
        %v1230 = vpop.f32.mrb[0].mxu0
        %v1231 = vadd.f32 %v862, %v1230
        %1232 = vmatprep.mubr.bf16.mxu0 0
        %1233 = vmatmul.mubr.bf16.gmra.mrb[0].mxu0 %v1025
        %v1234 = vpop.f32.mrb[0].mxu0
        %v1235 = vadd.f32 %v866, %v1234
        %v1236 = vpop.f32.mrb[0].mxu0
        %v1237 = vadd.f32 %v868, %v1236
        %v1238 = vpop.f32.mrb[0].mxu0
        %v1239 = vadd.f32 %v870, %v1238
        %v1240 = vpop.f32.mrb[0].mxu0
        %v1241 = vadd.f32 %v872, %v1240
        %1242 = vmatprep.mubr.bf16.mxu0 0
        %1243 = vmatmul.mubr.bf16.gmra.mrb[0].mxu0 %v1026
        %v1244 = vpop.f32.mrb[0].mxu0
        %v1245 = vadd.f32 %v876, %v1244
        %v1246 = vpop.f32.mrb[0].mxu0
        %v1247 = vadd.f32 %v878, %v1246
        %v1248 = vpop.f32.mrb[0].mxu0
        %v1249 = vadd.f32 %v880, %v1248
        %v1250 = vpop.f32.mrb[0].mxu0
        %v1251 = vadd.f32 %v882, %v1250
        %1252 = vmatprep.mubr.bf16.mxu0 0
        %1253 = vmatmul.mubr.bf16.gmra.mrb[0].mxu0 %v1027
        %v1254 = vpop.f32.mrb[0].mxu0
        %v1255 = vadd.f32 %v886, %v1254
        %v1256 = vpop.f32.mrb[0].mxu0
        %v1257 = vadd.f32 %v888, %v1256
        %v1258 = vpop.f32.mrb[0].mxu0
        %v1259 = vadd.f32 %v890, %v1258
        %v1260 = vpop.f32.mrb[0].mxu0
        %v1261 = vadd.f32 %v892, %v1260
        %1262 = vmatprep.mubr.bf16.mxu0 0
        %1263 = vmatmul.mubr.bf16.gmra.mrb[0].mxu0 %v1028
        %v1264 = vpop.f32.mrb[0].mxu0
        %v1265 = vadd.f32 %v896, %v1264
        %v1266 = vpop.f32.mrb[0].mxu0
        %v1267 = vadd.f32 %v898, %v1266
        %v1268 = vpop.f32.mrb[0].mxu0
        %v1269 = vadd.f32 %v900, %v1268
        %v1270 = vpop.f32.mrb[0].mxu0
        %v1271 = vadd.f32 %v902, %v1270
        %1272 = vmatprep.mubr.bf16.mxu0 0
        %1273 = vmatmul.mubr.bf16.gmra.mrb[0].mxu0 %v1029
        %v1274 = vpop.f32.mrb[0].mxu0
        %v1275 = vadd.f32 %v906, %v1274
        %v1276 = vpop.f32.mrb[0].mxu0
        %v1277 = vadd.f32 %v908, %v1276
        %v1278 = vpop.f32.mrb[0].mxu0
        %v1279 = vadd.f32 %v910, %v1278
        %v1280 = vpop.f32.mrb[0].mxu0
        %v1281 = vadd.f32 %v912, %v1280
        %1282 = vmatprep.mubr.bf16.mxu0 0
        %1283 = vmatmul.mubr.bf16.gmra.mrb[0].mxu0 %v1030
        %v1284 = vpop.f32.mrb[0].mxu0
        %v1285 = vadd.f32 %v916, %v1284
        %v1286 = vpop.f32.mrb[0].mxu0
        %v1287 = vadd.f32 %v918, %v1286
        %v1288 = vpop.f32.mrb[0].mxu0
        %v1289 = vadd.f32 %v920, %v1288
        %v1290 = vpop.f32.mrb[0].mxu0
        %v1291 = vadd.f32 %v922, %v1290
        %1292 = vmatprep.mubr.bf16.mxu0 0
        %1293 = vmatmul.mubr.bf16.gmra.mrb[0].mxu0 %v1031
        %v1294 = vpop.f32.mrb[0].mxu0
        %v1295 = vadd.f32 %v926, %v1294
        %v1296 = vpop.f32.mrb[0].mxu0
        %v1297 = vadd.f32 %v928, %v1296
        %v1298 = vpop.f32.mrb[0].mxu0
        %v1299 = vadd.f32 %v930, %v1298
        %v1300 = vpop.f32.mrb[0].mxu0
        %v1301 = vadd.f32 %v932, %v1300
        %1302 = vmatprep.mubr.bf16.mxu0 0
        %1303 = vmatmul.mubr.bf16.gmra.mrb[0].mxu0 %v1032
        %v1304 = vpop.f32.mrb[0].mxu0
        %v1305 = vadd.f32 %v936, %v1304
        %v1306 = vpop.f32.mrb[0].mxu0
        %v1307 = vadd.f32 %v938, %v1306
        %v1308 = vpop.f32.mrb[0].mxu0
        %v1309 = vadd.f32 %v940, %v1308
        %v1310 = vpop.f32.mrb[0].mxu0
        %v1311 = vadd.f32 %v942, %v1310
        %1312 = vmatprep.mubr.bf16.mxu0 0
        %1313 = vmatmul.mubr.bf16.gmra.mrb[0].mxu0 %v1033
        %v1314 = vpop.f32.mrb[0].mxu0
        %v1315 = vadd.f32 %v946, %v1314
        %v1316 = vpop.f32.mrb[0].mxu0
        %v1317 = vadd.f32 %v948, %v1316
        %v1318 = vpop.f32.mrb[0].mxu0
        %v1319 = vadd.f32 %v950, %v1318
        %v1320 = vpop.f32.mrb[0].mxu0
        %v1321 = vadd.f32 %v952, %v1320
        %1322 = vdwg.mxu0
        %v1323 = vld [vmem:[#allocation10] sm:$0x3]
        %v1325 = vlaneseq
        %v1326 = vshrl.u32 %v1325, 7
        %v1327 = vsub.s32 0, %v1326
        %v1328 = vrot.slane %v1323, %v1327
        %v1329 = vlaneseq
        %v1330 = vshrl.u32 %v1329, 7
        %v1331 = vsub.s32 1, %v1330
        %v1332 = vrot.slane %v1323, %v1331
        %v1335 = vadd.f32 %v1165, %v1328
        %v1336 = vadd.f32 %v1167, %v1332
        %v1337 = vadd.f32 %v1169, %v1328
        %v1338 = vadd.f32 %v1171, %v1332
        %v1339 = vadd.f32 %v1175, %v1328
        %v1340 = vadd.f32 %v1177, %v1332
        %v1341 = vadd.f32 %v1179, %v1328
        %v1342 = vadd.f32 %v1181, %v1332
        %v1343 = vadd.f32 %v1185, %v1328
        %v1344 = vadd.f32 %v1187, %v1332
        %v1345 = vadd.f32 %v1189, %v1328
        %v1346 = vadd.f32 %v1191, %v1332
        %v1347 = vadd.f32 %v1195, %v1328
        %v1348 = vadd.f32 %v1197, %v1332
        %v1349 = vadd.f32 %v1199, %v1328
        %v1350 = vadd.f32 %v1201, %v1332
        %v1351 = vadd.f32 %v1205, %v1328
        %v1352 = vadd.f32 %v1207, %v1332
        %v1353 = vadd.f32 %v1209, %v1328
        %v1354 = vadd.f32 %v1211, %v1332
        %v1355 = vadd.f32 %v1215, %v1328
        %v1356 = vadd.f32 %v1217, %v1332
        %v1357 = vadd.f32 %v1219, %v1328
        %v1358 = vadd.f32 %v1221, %v1332
        %v1359 = vadd.f32 %v1225, %v1328
        %v1360 = vadd.f32 %v1227, %v1332
        %v1361 = vadd.f32 %v1229, %v1328
        %v1362 = vadd.f32 %v1231, %v1332
        %v1363 = vadd.f32 %v1235, %v1328
        %v1364 = vadd.f32 %v1237, %v1332
        %v1365 = vadd.f32 %v1239, %v1328
        %v1366 = vadd.f32 %v1241, %v1332
        %v1367 = vadd.f32 %v1245, %v1328
        %v1368 = vadd.f32 %v1247, %v1332
        %v1369 = vadd.f32 %v1249, %v1328
        %v1370 = vadd.f32 %v1251, %v1332
        %v1371 = vadd.f32 %v1255, %v1328
        %v1372 = vadd.f32 %v1257, %v1332
        %v1373 = vadd.f32 %v1259, %v1328
        %v1374 = vadd.f32 %v1261, %v1332
        %v1375 = vadd.f32 %v1265, %v1328
        %v1376 = vadd.f32 %v1267, %v1332
        %v1377 = vadd.f32 %v1269, %v1328
        %v1378 = vadd.f32 %v1271, %v1332
        %v1379 = vadd.f32 %v1275, %v1328
        %v1380 = vadd.f32 %v1277, %v1332
        %v1381 = vadd.f32 %v1279, %v1328
        %v1382 = vadd.f32 %v1281, %v1332
        %v1383 = vadd.f32 %v1285, %v1328
        %v1384 = vadd.f32 %v1287, %v1332
        %v1385 = vadd.f32 %v1289, %v1328
        %v1386 = vadd.f32 %v1291, %v1332
        %v1387 = vadd.f32 %v1295, %v1328
        %v1388 = vadd.f32 %v1297, %v1332
        %v1389 = vadd.f32 %v1299, %v1328
        %v1390 = vadd.f32 %v1301, %v1332
        %v1391 = vadd.f32 %v1305, %v1328
        %v1392 = vadd.f32 %v1307, %v1332
        %v1393 = vadd.f32 %v1309, %v1328
        %v1394 = vadd.f32 %v1311, %v1332
        %v1395 = vadd.f32 %v1315, %v1328
        %v1396 = vadd.f32 %v1317, %v1332
        %v1397 = vadd.f32 %v1319, %v1328
        %v1398 = vadd.f32 %v1321, %v1332
        %v1399 = vpack.c.bf16 %v1337, %v1335
        %v1400 = vpack.c.bf16 %v1338, %v1336
        %v1401 = vpack.c.bf16 %v1341, %v1339
        %v1402 = vpack.c.bf16 %v1342, %v1340
        %v1403 = vpack.c.bf16 %v1345, %v1343
        %v1404 = vpack.c.bf16 %v1346, %v1344
        %v1405 = vpack.c.bf16 %v1349, %v1347
        %v1406 = vpack.c.bf16 %v1350, %v1348
        %v1407 = vpack.c.bf16 %v1353, %v1351
        %v1408 = vpack.c.bf16 %v1354, %v1352
        %v1409 = vpack.c.bf16 %v1357, %v1355
        %v1410 = vpack.c.bf16 %v1358, %v1356
        %v1411 = vpack.c.bf16 %v1361, %v1359
        %v1412 = vpack.c.bf16 %v1362, %v1360
        %v1413 = vpack.c.bf16 %v1365, %v1363
        %v1414 = vpack.c.bf16 %v1366, %v1364
        %v1415 = vpack.c.bf16 %v1369, %v1367
        %v1416 = vpack.c.bf16 %v1370, %v1368
        %v1417 = vpack.c.bf16 %v1373, %v1371
        %v1418 = vpack.c.bf16 %v1374, %v1372
        %v1419 = vpack.c.bf16 %v1377, %v1375
        %v1420 = vpack.c.bf16 %v1378, %v1376
        %v1421 = vpack.c.bf16 %v1381, %v1379
        %v1422 = vpack.c.bf16 %v1382, %v1380
        %v1423 = vpack.c.bf16 %v1385, %v1383
        %v1424 = vpack.c.bf16 %v1386, %v1384
        %v1425 = vpack.c.bf16 %v1389, %v1387
        %v1426 = vpack.c.bf16 %v1390, %v1388
        %v1427 = vpack.c.bf16 %v1393, %v1391
        %v1428 = vpack.c.bf16 %v1394, %v1392
        %v1429 = vpack.c.bf16 %v1397, %v1395
        %v1430 = vpack.c.bf16 %v1398, %v1396
        %v1463 = vunpack.c.l.b16 %v1399
        %v1464 = vunpack.c.l.b16 %v1400
        %v1465 = vunpack.c.h.b16 %v1399
        %v1466 = vunpack.c.h.b16 %v1400
        %v1467 = vunpack.c.l.b16 %v1401
        %v1468 = vunpack.c.l.b16 %v1402
        %v1469 = vunpack.c.h.b16 %v1401
        %v1470 = vunpack.c.h.b16 %v1402
        %v1471 = vunpack.c.l.b16 %v1403
        %v1472 = vunpack.c.l.b16 %v1404
        %v1473 = vunpack.c.h.b16 %v1403
        %v1474 = vunpack.c.h.b16 %v1404
        %v1475 = vunpack.c.l.b16 %v1405
        %v1476 = vunpack.c.l.b16 %v1406
        %v1477 = vunpack.c.h.b16 %v1405
        %v1478 = vunpack.c.h.b16 %v1406
        %v1479 = vunpack.c.l.b16 %v1407
        %v1480 = vunpack.c.l.b16 %v1408
        %v1481 = vunpack.c.h.b16 %v1407
        %v1482 = vunpack.c.h.b16 %v1408
        %v1483 = vunpack.c.l.b16 %v1409
        %v1484 = vunpack.c.l.b16 %v1410
        %v1485 = vunpack.c.h.b16 %v1409
        %v1486 = vunpack.c.h.b16 %v1410
        %v1487 = vunpack.c.l.b16 %v1411
        %v1488 = vunpack.c.l.b16 %v1412
        %v1489 = vunpack.c.h.b16 %v1411
        %v1490 = vunpack.c.h.b16 %v1412
        %v1491 = vunpack.c.l.b16 %v1413
        %v1492 = vunpack.c.l.b16 %v1414
        %v1493 = vunpack.c.h.b16 %v1413
        %v1494 = vunpack.c.h.b16 %v1414
        %v1495 = vunpack.c.l.b16 %v1415
        %v1496 = vunpack.c.l.b16 %v1416
        %v1497 = vunpack.c.h.b16 %v1415
        %v1498 = vunpack.c.h.b16 %v1416
        %v1499 = vunpack.c.l.b16 %v1417
        %v1500 = vunpack.c.l.b16 %v1418
        %v1501 = vunpack.c.h.b16 %v1417
        %v1502 = vunpack.c.h.b16 %v1418
        %v1503 = vunpack.c.l.b16 %v1419
        %v1504 = vunpack.c.l.b16 %v1420
        %v1505 = vunpack.c.h.b16 %v1419
        %v1506 = vunpack.c.h.b16 %v1420
        %v1507 = vunpack.c.l.b16 %v1421
        %v1508 = vunpack.c.l.b16 %v1422
        %v1509 = vunpack.c.h.b16 %v1421
        %v1510 = vunpack.c.h.b16 %v1422
        %v1511 = vunpack.c.l.b16 %v1423
        %v1512 = vunpack.c.l.b16 %v1424
        %v1513 = vunpack.c.h.b16 %v1423
        %v1514 = vunpack.c.h.b16 %v1424
        %v1515 = vunpack.c.l.b16 %v1425
        %v1516 = vunpack.c.l.b16 %v1426
        %v1517 = vunpack.c.h.b16 %v1425
        %v1518 = vunpack.c.h.b16 %v1426
        %v1519 = vunpack.c.l.b16 %v1427
        %v1520 = vunpack.c.l.b16 %v1428
        %v1521 = vunpack.c.h.b16 %v1427
        %v1522 = vunpack.c.h.b16 %v1428
        %v1523 = vunpack.c.l.b16 %v1429
        %v1524 = vunpack.c.l.b16 %v1430
        %v1525 = vunpack.c.h.b16 %v1429
        %v1526 = vunpack.c.h.b16 %v1430
        %v1527 = vpack.c.b16 %v1464, %v1463
        %v1528 = vpack.c.b16 %v1466, %v1465
        %v1529 = vpack.c.b16 %v1468, %v1467
        %v1530 = vpack.c.b16 %v1470, %v1469
        %v1531 = vpack.c.b16 %v1472, %v1471
        %v1532 = vpack.c.b16 %v1474, %v1473
        %v1533 = vpack.c.b16 %v1476, %v1475
        %v1534 = vpack.c.b16 %v1478, %v1477
        %v1535 = vpack.c.b16 %v1480, %v1479
        %v1536 = vpack.c.b16 %v1482, %v1481
        %v1537 = vpack.c.b16 %v1484, %v1483
        %v1538 = vpack.c.b16 %v1486, %v1485
        %v1539 = vpack.c.b16 %v1488, %v1487
        %v1540 = vpack.c.b16 %v1490, %v1489
        %v1541 = vpack.c.b16 %v1492, %v1491
        %v1542 = vpack.c.b16 %v1494, %v1493
        %v1543 = vpack.c.b16 %v1496, %v1495
        %v1544 = vpack.c.b16 %v1498, %v1497
        %v1545 = vpack.c.b16 %v1500, %v1499
        %v1546 = vpack.c.b16 %v1502, %v1501
        %v1547 = vpack.c.b16 %v1504, %v1503
        %v1548 = vpack.c.b16 %v1506, %v1505
        %v1549 = vpack.c.b16 %v1508, %v1507
        %v1550 = vpack.c.b16 %v1510, %v1509
        %v1551 = vpack.c.b16 %v1512, %v1511
        %v1552 = vpack.c.b16 %v1514, %v1513
        %v1553 = vpack.c.b16 %v1516, %v1515
        %v1554 = vpack.c.b16 %v1518, %v1517
        %v1555 = vpack.c.b16 %v1520, %v1519
        %v1556 = vpack.c.b16 %v1522, %v1521
        %v1557 = vpack.c.b16 %v1524, %v1523
        %v1558 = vpack.c.b16 %v1526, %v1525
        %1591 = vst [vmem:[%s324] sm:$0xff] %v1527
        %1592 = vst [vmem:[%s324 + $0x20] sm:$0xff] %v1528
        %1593 = vst [vmem:[%s324 + $0x40] sm:$0xff] %v1529
        %1594 = vst [vmem:[%s324 + $0x60] sm:$0xff] %v1530
        %1595 = vst [vmem:[%s324 + $0x80] sm:$0xff] %v1531
        %1596 = vst [vmem:[%s324 + $0xa0] sm:$0xff] %v1532
        %1597 = vst [vmem:[%s324 + $0xc0] sm:$0xff] %v1533
        %1598 = vst [vmem:[%s324 + $0xe0] sm:$0xff] %v1534
        %1599 = vst [vmem:[%s324 + $0x100] sm:$0xff] %v1535
        %1600 = vst [vmem:[%s324 + $0x120] sm:$0xff] %v1536
        %1601 = vst [vmem:[%s324 + $0x140] sm:$0xff] %v1537
        %1602 = vst [vmem:[%s324 + $0x160] sm:$0xff] %v1538
        %1603 = vst [vmem:[%s324 + $0x180] sm:$0xff] %v1539
        %1604 = vst [vmem:[%s324 + $0x1a0] sm:$0xff] %v1540
        %1605 = vst [vmem:[%s324 + $0x1c0] sm:$0xff] %v1541
        %1606 = vst [vmem:[%s324 + $0x1e0] sm:$0xff] %v1542
        %1607 = vst [vmem:[%s324 + $0x200] sm:$0xff] %v1543
        %1608 = vst [vmem:[%s324 + $0x220] sm:$0xff] %v1544
        %1609 = vst [vmem:[%s324 + $0x240] sm:$0xff] %v1545
        %1610 = vst [vmem:[%s324 + $0x260] sm:$0xff] %v1546
        %1611 = vst [vmem:[%s324 + $0x280] sm:$0xff] %v1547
        %1612 = vst [vmem:[%s324 + $0x2a0] sm:$0xff] %v1548
        %1613 = vst [vmem:[%s324 + $0x2c0] sm:$0xff] %v1549
        %1614 = vst [vmem:[%s324 + $0x2e0] sm:$0xff] %v1550
        %1615 = vst [vmem:[%s324 + $0x300] sm:$0xff] %v1551
        %1616 = vst [vmem:[%s324 + $0x320] sm:$0xff] %v1552
        %1617 = vst [vmem:[%s324 + $0x340] sm:$0xff] %v1553
        %1618 = vst [vmem:[%s324 + $0x360] sm:$0xff] %v1554
        %1619 = vst [vmem:[%s324 + $0x380] sm:$0xff] %v1555
        %1620 = vst [vmem:[%s324 + $0x3a0] sm:$0xff] %v1556
        %1621 = vst [vmem:[%s324 + $0x3c0] sm:$0xff] %v1557
        %1622 = vst [vmem:[%s324 + $0x3e0] sm:$0xff] %v1558
        %v1623 = vld [vmem:[#allocation7 + $0x8] sm:$0xff]
        %v1624 = vld [vmem:[#allocation7 + $0x28] sm:$0xff]
        %v1625 = vld [vmem:[#allocation7 + $0x48] sm:$0xff]
        %v1626 = vld [vmem:[#allocation7 + $0x68] sm:$0xff]
        %v1627 = vld [vmem:[#allocation7 + $0x88] sm:$0xff]
        %v1628 = vld [vmem:[#allocation7 + $0xa8] sm:$0xff]
        %v1629 = vld [vmem:[#allocation7 + $0xc8] sm:$0xff]
        %v1630 = vld [vmem:[#allocation7 + $0xe8] sm:$0xff]
        %v1631 = vld [vmem:[#allocation7 + $0x108] sm:$0xff]
        %v1632 = vld [vmem:[#allocation7 + $0x128] sm:$0xff]
        %v1633 = vld [vmem:[#allocation7 + $0x148] sm:$0xff]
        %v1634 = vld [vmem:[#allocation7 + $0x168] sm:$0xff]
        %v1635 = vld [vmem:[#allocation7 + $0x188] sm:$0xff]
        %v1636 = vld [vmem:[#allocation7 + $0x1a8] sm:$0xff]
        %v1637 = vld [vmem:[#allocation7 + $0x1c8] sm:$0xff]
        %v1638 = vld [vmem:[#allocation7 + $0x1e8] sm:$0xff]
        %v1639 = vld [vmem:[%s281 + $0x8] sm:$0xff]
        %v1640 = vld [vmem:[%s281 + $0x28] sm:$0xff]
        %v1641 = vld [vmem:[%s281 + $0x48] sm:$0xff]
        %v1642 = vld [vmem:[%s281 + $0x68] sm:$0xff]
        %v1643 = vld [vmem:[%s281 + $0x88] sm:$0xff]
        %v1644 = vld [vmem:[%s281 + $0xa8] sm:$0xff]
        %v1645 = vld [vmem:[%s281 + $0xc8] sm:$0xff]
        %v1646 = vld [vmem:[%s281 + $0xe8] sm:$0xff]
        %v1647 = vld [vmem:[%s281 + $0x108] sm:$0xff]
        %v1648 = vld [vmem:[%s281 + $0x128] sm:$0xff]
        %v1649 = vld [vmem:[%s281 + $0x148] sm:$0xff]
        %v1650 = vld [vmem:[%s281 + $0x168] sm:$0xff]
        %v1651 = vld [vmem:[%s281 + $0x188] sm:$0xff]
        %v1652 = vld [vmem:[%s281 + $0x1a8] sm:$0xff]
        %v1653 = vld [vmem:[%s281 + $0x1c8] sm:$0xff]
        %v1654 = vld [vmem:[%s281 + $0x1e8] sm:$0xff]
        %v1655 = vld [vmem:[%s281 + $0x208] sm:$0xff]
        %v1656 = vld [vmem:[%s281 + $0x228] sm:$0xff]
        %v1657 = vld [vmem:[%s281 + $0x248] sm:$0xff]
        %v1658 = vld [vmem:[%s281 + $0x268] sm:$0xff]
        %v1659 = vld [vmem:[%s281 + $0x288] sm:$0xff]
        %v1660 = vld [vmem:[%s281 + $0x2a8] sm:$0xff]
        %v1661 = vld [vmem:[%s281 + $0x2c8] sm:$0xff]
        %v1662 = vld [vmem:[%s281 + $0x2e8] sm:$0xff]
        %v1663 = vld [vmem:[%s281 + $0x308] sm:$0xff]
        %v1664 = vld [vmem:[%s281 + $0x328] sm:$0xff]
        %v1665 = vld [vmem:[%s281 + $0x348] sm:$0xff]
        %v1666 = vld [vmem:[%s281 + $0x368] sm:$0xff]
        %v1667 = vld [vmem:[%s281 + $0x388] sm:$0xff]
        %v1668 = vld [vmem:[%s281 + $0x3a8] sm:$0xff]
        %v1669 = vld [vmem:[%s281 + $0x3c8] sm:$0xff]
        %v1670 = vld [vmem:[%s281 + $0x3e8] sm:$0xff]
        %v1703 = vunpack.c.l.b16 %v1639
        %v1704 = vunpack.c.h.b16 %v1639
        %v1705 = vunpack.c.l.b16 %v1640
        %v1706 = vunpack.c.h.b16 %v1640
        %v1707 = vunpack.c.l.b16 %v1641
        %v1708 = vunpack.c.h.b16 %v1641
        %v1709 = vunpack.c.l.b16 %v1642
        %v1710 = vunpack.c.h.b16 %v1642
        %v1711 = vunpack.c.l.b16 %v1643
        %v1712 = vunpack.c.h.b16 %v1643
        %v1713 = vunpack.c.l.b16 %v1644
        %v1714 = vunpack.c.h.b16 %v1644
        %v1715 = vunpack.c.l.b16 %v1645
        %v1716 = vunpack.c.h.b16 %v1645
        %v1717 = vunpack.c.l.b16 %v1646
        %v1718 = vunpack.c.h.b16 %v1646
        %v1719 = vunpack.c.l.b16 %v1647
        %v1720 = vunpack.c.h.b16 %v1647
        %v1721 = vunpack.c.l.b16 %v1648
        %v1722 = vunpack.c.h.b16 %v1648
        %v1723 = vunpack.c.l.b16 %v1649
        %v1724 = vunpack.c.h.b16 %v1649
        %v1725 = vunpack.c.l.b16 %v1650
        %v1726 = vunpack.c.h.b16 %v1650
        %v1727 = vunpack.c.l.b16 %v1651
        %v1728 = vunpack.c.h.b16 %v1651
        %v1729 = vunpack.c.l.b16 %v1652
        %v1730 = vunpack.c.h.b16 %v1652
        %v1731 = vunpack.c.l.b16 %v1653
        %v1732 = vunpack.c.h.b16 %v1653
        %v1733 = vunpack.c.l.b16 %v1654
        %v1734 = vunpack.c.h.b16 %v1654
        %v1735 = vunpack.c.l.b16 %v1655
        %v1736 = vunpack.c.h.b16 %v1655
        %v1737 = vunpack.c.l.b16 %v1656
        %v1738 = vunpack.c.h.b16 %v1656
        %v1739 = vunpack.c.l.b16 %v1657
        %v1740 = vunpack.c.h.b16 %v1657
        %v1741 = vunpack.c.l.b16 %v1658
        %v1742 = vunpack.c.h.b16 %v1658
        %v1743 = vunpack.c.l.b16 %v1659
        %v1744 = vunpack.c.h.b16 %v1659
        %v1745 = vunpack.c.l.b16 %v1660
        %v1746 = vunpack.c.h.b16 %v1660
        %v1747 = vunpack.c.l.b16 %v1661
        %v1748 = vunpack.c.h.b16 %v1661
        %v1749 = vunpack.c.l.b16 %v1662
        %v1750 = vunpack.c.h.b16 %v1662
        %v1751 = vunpack.c.l.b16 %v1663
        %v1752 = vunpack.c.h.b16 %v1663
        %v1753 = vunpack.c.l.b16 %v1664
        %v1754 = vunpack.c.h.b16 %v1664
        %v1755 = vunpack.c.l.b16 %v1665
        %v1756 = vunpack.c.h.b16 %v1665
        %v1757 = vunpack.c.l.b16 %v1666
        %v1758 = vunpack.c.h.b16 %v1666
        %v1759 = vunpack.c.l.b16 %v1667
        %v1760 = vunpack.c.h.b16 %v1667
        %v1761 = vunpack.c.l.b16 %v1668
        %v1762 = vunpack.c.h.b16 %v1668
        %v1763 = vunpack.c.l.b16 %v1669
        %v1764 = vunpack.c.h.b16 %v1669
        %v1765 = vunpack.c.l.b16 %v1670
        %v1766 = vunpack.c.h.b16 %v1670
        %v1767 = vpack.c.b16 %v1705, %v1703
        %v1768 = vpack.c.b16 %v1706, %v1704
        %v1769 = vpack.c.b16 %v1709, %v1707
        %v1770 = vpack.c.b16 %v1710, %v1708
        %v1771 = vpack.c.b16 %v1713, %v1711
        %v1772 = vpack.c.b16 %v1714, %v1712
        %v1773 = vpack.c.b16 %v1717, %v1715
        %v1774 = vpack.c.b16 %v1718, %v1716
        %v1775 = vpack.c.b16 %v1721, %v1719
        %v1776 = vpack.c.b16 %v1722, %v1720
        %v1777 = vpack.c.b16 %v1725, %v1723
        %v1778 = vpack.c.b16 %v1726, %v1724
        %v1779 = vpack.c.b16 %v1729, %v1727
        %v1780 = vpack.c.b16 %v1730, %v1728
        %v1781 = vpack.c.b16 %v1733, %v1731
        %v1782 = vpack.c.b16 %v1734, %v1732
        %v1783 = vpack.c.b16 %v1737, %v1735
        %v1784 = vpack.c.b16 %v1738, %v1736
        %v1785 = vpack.c.b16 %v1741, %v1739
        %v1786 = vpack.c.b16 %v1742, %v1740
        %v1787 = vpack.c.b16 %v1745, %v1743
        %v1788 = vpack.c.b16 %v1746, %v1744
        %v1789 = vpack.c.b16 %v1749, %v1747
        %v1790 = vpack.c.b16 %v1750, %v1748
        %v1791 = vpack.c.b16 %v1753, %v1751
        %v1792 = vpack.c.b16 %v1754, %v1752
        %v1793 = vpack.c.b16 %v1757, %v1755
        %v1794 = vpack.c.b16 %v1758, %v1756
        %v1795 = vpack.c.b16 %v1761, %v1759
        %v1796 = vpack.c.b16 %v1762, %v1760
        %v1797 = vpack.c.b16 %v1765, %v1763
        %v1798 = vpack.c.b16 %v1766, %v1764
        %1831 = vmatprep.subr.bf16.mxu0 %v698
        %1832 = vmatpush1.bf16.msra.mxu0 %v697
        %1833 = vmatprep.subr.bf16.mxu0 %v700
        %1834 = vmatpush1.bf16.msra.mxu0 %v699
        %1835 = vmatprep.subr.bf16.mxu0 %v702
        %1836 = vmatpush1.bf16.msra.mxu0 %v701
        %1837 = vmatprep.subr.bf16.mxu0 %v704
        %1838 = vmatpush1.bf16.msra.mxu0 %v703
        %1839 = vmatprep.subr.bf16.mxu0 %v706
        %1840 = vmatpush1.bf16.msra.mxu0 %v705
        %1841 = vmatprep.subr.bf16.mxu0 %v708
        %1842 = vmatpush1.bf16.msra.mxu0 %v707
        %1843 = vmatprep.subr.bf16.mxu0 %v710
        %1844 = vmatpush1.bf16.msra.mxu0 %v709
        %1845 = vmatprep.subr.bf16.mxu0 %v712
        %1846 = vmatpush1.bf16.msra.mxu0 %v711
        %1847 = vmatprep.subr.bf16.mxu0 %v714
        %1848 = vmatpush1.bf16.msra.mxu0 %v713
        %1849 = vmatprep.subr.bf16.mxu0 %v716
        %1850 = vmatpush1.bf16.msra.mxu0 %v715
        %1851 = vmatprep.subr.bf16.mxu0 %v718
        %1852 = vmatpush1.bf16.msra.mxu0 %v717
        %1853 = vmatprep.subr.bf16.mxu0 %v720
        %1854 = vmatpush1.bf16.msra.mxu0 %v719
        %1855 = vmatprep.subr.bf16.mxu0 %v722
        %1856 = vmatpush1.bf16.msra.mxu0 %v721
        %1857 = vmatprep.subr.bf16.mxu0 %v724
        %1858 = vmatpush1.bf16.msra.mxu0 %v723
        %1859 = vmatprep.subr.bf16.mxu0 %v726
        %1860 = vmatpush1.bf16.msra.mxu0 %v725
        %1861 = vmatprep.subr.bf16.mxu0 %v728
        %1862 = vmatpush1.bf16.msra.mxu0 %v727
        %1863 = vmatprep.mubr.bf16.mxu0 %v1768
        %1864 = vmatmul.mubr.bf16.gmra.mrb[0].mxu0 %v1767
        %v1865 = vpop.f32.mrb[0].mxu0
        %v1866 = vadd.f32 0.0, %v1865
        %v1867 = vpop.f32.mrb[0].mxu0
        %v1868 = vadd.f32 0.0, %v1867
        %v1869 = vpop.f32.mrb[0].mxu0
        %v1870 = vadd.f32 0.0, %v1869
        %v1871 = vpop.f32.mrb[0].mxu0
        %v1872 = vadd.f32 0.0, %v1871
        %1873 = vmatprep.mubr.bf16.mxu0 %v1770
        %1874 = vmatmul.mubr.bf16.gmra.mrb[0].mxu0 %v1769
        %v1875 = vpop.f32.mrb[0].mxu0
        %v1876 = vadd.f32 0.0, %v1875
        %v1877 = vpop.f32.mrb[0].mxu0
        %v1878 = vadd.f32 0.0, %v1877
        %v1879 = vpop.f32.mrb[0].mxu0
        %v1880 = vadd.f32 0.0, %v1879
        %v1881 = vpop.f32.mrb[0].mxu0
        %v1882 = vadd.f32 0.0, %v1881
        %1883 = vmatprep.mubr.bf16.mxu0 %v1772
        %1884 = vmatmul.mubr.bf16.gmra.mrb[0].mxu0 %v1771
        %v1885 = vpop.f32.mrb[0].mxu0
        %v1886 = vadd.f32 0.0, %v1885
        %v1887 = vpop.f32.mrb[0].mxu0
        %v1888 = vadd.f32 0.0, %v1887
        %v1889 = vpop.f32.mrb[0].mxu0
        %v1890 = vadd.f32 0.0, %v1889
        %v1891 = vpop.f32.mrb[0].mxu0
        %v1892 = vadd.f32 0.0, %v1891
        %1893 = vmatprep.mubr.bf16.mxu0 %v1774
        %1894 = vmatmul.mubr.bf16.gmra.mrb[0].mxu0 %v1773
        %v1895 = vpop.f32.mrb[0].mxu0
        %v1896 = vadd.f32 0.0, %v1895
        %v1897 = vpop.f32.mrb[0].mxu0
        %v1898 = vadd.f32 0.0, %v1897
        %v1899 = vpop.f32.mrb[0].mxu0
        %v1900 = vadd.f32 0.0, %v1899
        %v1901 = vpop.f32.mrb[0].mxu0
        %v1902 = vadd.f32 0.0, %v1901
        %1903 = vmatprep.mubr.bf16.mxu0 %v1776
        %1904 = vmatmul.mubr.bf16.gmra.mrb[0].mxu0 %v1775
        %v1905 = vpop.f32.mrb[0].mxu0
        %v1906 = vadd.f32 0.0, %v1905
        %v1907 = vpop.f32.mrb[0].mxu0
        %v1908 = vadd.f32 0.0, %v1907
        %v1909 = vpop.f32.mrb[0].mxu0
        %v1910 = vadd.f32 0.0, %v1909
        %v1911 = vpop.f32.mrb[0].mxu0
        %v1912 = vadd.f32 0.0, %v1911
        %1913 = vmatprep.mubr.bf16.mxu0 %v1778
        %1914 = vmatmul.mubr.bf16.gmra.mrb[0].mxu0 %v1777
        %v1915 = vpop.f32.mrb[0].mxu0
        %v1916 = vadd.f32 0.0, %v1915
        %v1917 = vpop.f32.mrb[0].mxu0
        %v1918 = vadd.f32 0.0, %v1917
        %v1919 = vpop.f32.mrb[0].mxu0
        %v1920 = vadd.f32 0.0, %v1919
        %v1921 = vpop.f32.mrb[0].mxu0
        %v1922 = vadd.f32 0.0, %v1921
        %1923 = vmatprep.mubr.bf16.mxu0 %v1780
        %1924 = vmatmul.mubr.bf16.gmra.mrb[0].mxu0 %v1779
        %v1925 = vpop.f32.mrb[0].mxu0
        %v1926 = vadd.f32 0.0, %v1925
        %v1927 = vpop.f32.mrb[0].mxu0
        %v1928 = vadd.f32 0.0, %v1927
        %v1929 = vpop.f32.mrb[0].mxu0
        %v1930 = vadd.f32 0.0, %v1929
        %v1931 = vpop.f32.mrb[0].mxu0
        %v1932 = vadd.f32 0.0, %v1931
        %1933 = vmatprep.mubr.bf16.mxu0 %v1782
        %1934 = vmatmul.mubr.bf16.gmra.mrb[0].mxu0 %v1781
        %v1935 = vpop.f32.mrb[0].mxu0
        %v1936 = vadd.f32 0.0, %v1935
        %v1937 = vpop.f32.mrb[0].mxu0
        %v1938 = vadd.f32 0.0, %v1937
        %v1939 = vpop.f32.mrb[0].mxu0
        %v1940 = vadd.f32 0.0, %v1939
        %v1941 = vpop.f32.mrb[0].mxu0
        %v1942 = vadd.f32 0.0, %v1941
        %1943 = vmatprep.mubr.bf16.mxu0 %v1784
        %1944 = vmatmul.mubr.bf16.gmra.mrb[0].mxu0 %v1783
        %v1945 = vpop.f32.mrb[0].mxu0
        %v1946 = vadd.f32 0.0, %v1945
        %v1947 = vpop.f32.mrb[0].mxu0
        %v1948 = vadd.f32 0.0, %v1947
        %v1949 = vpop.f32.mrb[0].mxu0
        %v1950 = vadd.f32 0.0, %v1949
        %v1951 = vpop.f32.mrb[0].mxu0
        %v1952 = vadd.f32 0.0, %v1951
        %1953 = vmatprep.mubr.bf16.mxu0 %v1786
        %1954 = vmatmul.mubr.bf16.gmra.mrb[0].mxu0 %v1785
        %v1955 = vpop.f32.mrb[0].mxu0
        %v1956 = vadd.f32 0.0, %v1955
        %v1957 = vpop.f32.mrb[0].mxu0
        %v1958 = vadd.f32 0.0, %v1957
        %v1959 = vpop.f32.mrb[0].mxu0
        %v1960 = vadd.f32 0.0, %v1959
        %v1961 = vpop.f32.mrb[0].mxu0
        %v1962 = vadd.f32 0.0, %v1961
        %1963 = vmatprep.mubr.bf16.mxu0 %v1788
        %1964 = vmatmul.mubr.bf16.gmra.mrb[0].mxu0 %v1787
        %v1965 = vpop.f32.mrb[0].mxu0
        %v1966 = vadd.f32 0.0, %v1965
        %v1967 = vpop.f32.mrb[0].mxu0
        %v1968 = vadd.f32 0.0, %v1967
        %v1969 = vpop.f32.mrb[0].mxu0
        %v1970 = vadd.f32 0.0, %v1969
        %v1971 = vpop.f32.mrb[0].mxu0
        %v1972 = vadd.f32 0.0, %v1971
        %1973 = vmatprep.mubr.bf16.mxu0 %v1790
        %1974 = vmatmul.mubr.bf16.gmra.mrb[0].mxu0 %v1789
        %v1975 = vpop.f32.mrb[0].mxu0
        %v1976 = vadd.f32 0.0, %v1975
        %v1977 = vpop.f32.mrb[0].mxu0
        %v1978 = vadd.f32 0.0, %v1977
        %v1979 = vpop.f32.mrb[0].mxu0
        %v1980 = vadd.f32 0.0, %v1979
        %v1981 = vpop.f32.mrb[0].mxu0
        %v1982 = vadd.f32 0.0, %v1981
        %1983 = vmatprep.mubr.bf16.mxu0 %v1792
        %1984 = vmatmul.mubr.bf16.gmra.mrb[0].mxu0 %v1791
        %v1985 = vpop.f32.mrb[0].mxu0
        %v1986 = vadd.f32 0.0, %v1985
        %v1987 = vpop.f32.mrb[0].mxu0
        %v1988 = vadd.f32 0.0, %v1987
        %v1989 = vpop.f32.mrb[0].mxu0
        %v1990 = vadd.f32 0.0, %v1989
        %v1991 = vpop.f32.mrb[0].mxu0
        %v1992 = vadd.f32 0.0, %v1991
        %1993 = vmatprep.mubr.bf16.mxu0 %v1794
        %1994 = vmatmul.mubr.bf16.gmra.mrb[0].mxu0 %v1793
        %v1995 = vpop.f32.mrb[0].mxu0
        %v1996 = vadd.f32 0.0, %v1995
        %v1997 = vpop.f32.mrb[0].mxu0
        %v1998 = vadd.f32 0.0, %v1997
        %v1999 = vpop.f32.mrb[0].mxu0
        %v2000 = vadd.f32 0.0, %v1999
        %v2001 = vpop.f32.mrb[0].mxu0
        %v2002 = vadd.f32 0.0, %v2001
        %2003 = vmatprep.mubr.bf16.mxu0 %v1796
        %2004 = vmatmul.mubr.bf16.gmra.mrb[0].mxu0 %v1795
        %v2005 = vpop.f32.mrb[0].mxu0
        %v2006 = vadd.f32 0.0, %v2005
        %v2007 = vpop.f32.mrb[0].mxu0
        %v2008 = vadd.f32 0.0, %v2007
        %v2009 = vpop.f32.mrb[0].mxu0
        %v2010 = vadd.f32 0.0, %v2009
        %v2011 = vpop.f32.mrb[0].mxu0
        %v2012 = vadd.f32 0.0, %v2011
        %2013 = vmatprep.mubr.bf16.mxu0 %v1798
        %2014 = vmatmul.mubr.bf16.gmra.mrb[0].mxu0 %v1797
        %v2015 = vpop.f32.mrb[0].mxu0
        %v2016 = vadd.f32 0.0, %v2015
        %v2017 = vpop.f32.mrb[0].mxu0
        %v2018 = vadd.f32 0.0, %v2017
        %v2019 = vpop.f32.mrb[0].mxu0
        %v2020 = vadd.f32 0.0, %v2019
        %v2021 = vpop.f32.mrb[0].mxu0
        %v2022 = vadd.f32 0.0, %v2021
        %2023 = vdwg.mxu0
        %v2040 = vunpack.c.l.b16 %v1623
        %v2041 = vunpack.c.h.b16 %v1623
        %v2042 = vunpack.c.l.b16 %v1624
        %v2043 = vunpack.c.h.b16 %v1624
        %v2044 = vunpack.c.l.b16 %v1625
        %v2045 = vunpack.c.h.b16 %v1625
        %v2046 = vunpack.c.l.b16 %v1626
        %v2047 = vunpack.c.h.b16 %v1626
        %v2048 = vunpack.c.l.b16 %v1627
        %v2049 = vunpack.c.h.b16 %v1627
        %v2050 = vunpack.c.l.b16 %v1628
        %v2051 = vunpack.c.h.b16 %v1628
        %v2052 = vunpack.c.l.b16 %v1629
        %v2053 = vunpack.c.h.b16 %v1629
        %v2054 = vunpack.c.l.b16 %v1630
        %v2055 = vunpack.c.h.b16 %v1630
        %v2056 = vunpack.c.l.b16 %v1631
        %v2057 = vunpack.c.h.b16 %v1631
        %v2058 = vunpack.c.l.b16 %v1632
        %v2059 = vunpack.c.h.b16 %v1632
        %v2060 = vunpack.c.l.b16 %v1633
        %v2061 = vunpack.c.h.b16 %v1633
        %v2062 = vunpack.c.l.b16 %v1634
        %v2063 = vunpack.c.h.b16 %v1634
        %v2064 = vunpack.c.l.b16 %v1635
        %v2065 = vunpack.c.h.b16 %v1635
        %v2066 = vunpack.c.l.b16 %v1636
        %v2067 = vunpack.c.h.b16 %v1636
        %v2068 = vunpack.c.l.b16 %v1637
        %v2069 = vunpack.c.h.b16 %v1637
        %v2070 = vunpack.c.l.b16 %v1638
        %v2071 = vunpack.c.h.b16 %v1638
        %v2072 = vpack.c.b16 %v2042, %v2040
        %v2073 = vpack.c.b16 %v2043, %v2041
        %v2074 = vpack.c.b16 %v2046, %v2044
        %v2075 = vpack.c.b16 %v2047, %v2045
        %v2076 = vpack.c.b16 %v2050, %v2048
        %v2077 = vpack.c.b16 %v2051, %v2049
        %v2078 = vpack.c.b16 %v2054, %v2052
        %v2079 = vpack.c.b16 %v2055, %v2053
        %v2080 = vpack.c.b16 %v2058, %v2056
        %v2081 = vpack.c.b16 %v2059, %v2057
        %v2082 = vpack.c.b16 %v2062, %v2060
        %v2083 = vpack.c.b16 %v2063, %v2061
        %v2084 = vpack.c.b16 %v2066, %v2064
        %v2085 = vpack.c.b16 %v2067, %v2065
        %v2086 = vpack.c.b16 %v2070, %v2068
        %v2087 = vpack.c.b16 %v2071, %v2069
        %2104 = vmatprep.subr.bf16.mxu0 %v2073
        %2105 = vmatpush1.bf16.msra.mxu0 %v2072
        %2106 = vmatprep.subr.bf16.mxu0 %v2075
        %2107 = vmatpush1.bf16.msra.mxu0 %v2074
        %2108 = vmatprep.subr.bf16.mxu0 %v2077
        %2109 = vmatpush1.bf16.msra.mxu0 %v2076
        %2110 = vmatprep.subr.bf16.mxu0 %v2079
        %2111 = vmatpush1.bf16.msra.mxu0 %v2078
        %2112 = vmatprep.subr.bf16.mxu0 %v2081
        %2113 = vmatpush1.bf16.msra.mxu0 %v2080
        %2114 = vmatprep.subr.bf16.mxu0 %v2083
        %2115 = vmatpush1.bf16.msra.mxu0 %v2082
        %2116 = vmatprep.subr.bf16.mxu0 %v2085
        %2117 = vmatpush1.bf16.msra.mxu0 %v2084
        %2118 = vmatprep.subr.bf16.mxu0 %v2087
        %2119 = vmatpush1.bf16.msra.mxu0 %v2086
        %2120 = vmatprep.subr.bf16.mxu0 0
        %2121 = vmatpush1.bf16.msra.mxu0 0
        %2122 = vmatprep.subr.bf16.mxu0 0
        %2123 = vmatpush1.bf16.msra.mxu0 0
        %2124 = vmatprep.subr.bf16.mxu0 0
        %2125 = vmatpush1.bf16.msra.mxu0 0
        %2126 = vmatprep.subr.bf16.mxu0 0
        %2127 = vmatpush1.bf16.msra.mxu0 0
        %2128 = vmatprep.subr.bf16.mxu0 0
        %2129 = vmatpush1.bf16.msra.mxu0 0
        %2130 = vmatprep.subr.bf16.mxu0 0
        %2131 = vmatpush1.bf16.msra.mxu0 0
        %2132 = vmatprep.subr.bf16.mxu0 0
        %2133 = vmatpush1.bf16.msra.mxu0 0
        %2134 = vmatprep.subr.bf16.mxu0 0
        %2135 = vmatpush1.bf16.msra.mxu0 0
        %2136 = vmatprep.mubr.bf16.mxu0 0
        %2137 = vmatmul.mubr.bf16.gmra.mrb[0].mxu0 %v1018
        %v2138 = vpop.f32.mrb[0].mxu0
        %v2139 = vadd.f32 %v1866, %v2138
        %v2140 = vpop.f32.mrb[0].mxu0
        %v2141 = vadd.f32 %v1868, %v2140
        %v2142 = vpop.f32.mrb[0].mxu0
        %v2143 = vadd.f32 %v1870, %v2142
        %v2144 = vpop.f32.mrb[0].mxu0
        %v2145 = vadd.f32 %v1872, %v2144
        %2146 = vmatprep.mubr.bf16.mxu0 0
        %2147 = vmatmul.mubr.bf16.gmra.mrb[0].mxu0 %v1019
        %v2148 = vpop.f32.mrb[0].mxu0
        %v2149 = vadd.f32 %v1876, %v2148
        %v2150 = vpop.f32.mrb[0].mxu0
        %v2151 = vadd.f32 %v1878, %v2150
        %v2152 = vpop.f32.mrb[0].mxu0
        %v2153 = vadd.f32 %v1880, %v2152
        %v2154 = vpop.f32.mrb[0].mxu0
        %v2155 = vadd.f32 %v1882, %v2154
        %2156 = vmatprep.mubr.bf16.mxu0 0
        %2157 = vmatmul.mubr.bf16.gmra.mrb[0].mxu0 %v1020
        %v2158 = vpop.f32.mrb[0].mxu0
        %v2159 = vadd.f32 %v1886, %v2158
        %v2160 = vpop.f32.mrb[0].mxu0
        %v2161 = vadd.f32 %v1888, %v2160
        %v2162 = vpop.f32.mrb[0].mxu0
        %v2163 = vadd.f32 %v1890, %v2162
        %v2164 = vpop.f32.mrb[0].mxu0
        %v2165 = vadd.f32 %v1892, %v2164
        %2166 = vmatprep.mubr.bf16.mxu0 0
        %2167 = vmatmul.mubr.bf16.gmra.mrb[0].mxu0 %v1021
        %v2168 = vpop.f32.mrb[0].mxu0
        %v2169 = vadd.f32 %v1896, %v2168
        %v2170 = vpop.f32.mrb[0].mxu0
        %v2171 = vadd.f32 %v1898, %v2170
        %v2172 = vpop.f32.mrb[0].mxu0
        %v2173 = vadd.f32 %v1900, %v2172
        %v2174 = vpop.f32.mrb[0].mxu0
        %v2175 = vadd.f32 %v1902, %v2174
        %2176 = vmatprep.mubr.bf16.mxu0 0
        %2177 = vmatmul.mubr.bf16.gmra.mrb[0].mxu0 %v1022
        %v2178 = vpop.f32.mrb[0].mxu0
        %v2179 = vadd.f32 %v1906, %v2178
        %v2180 = vpop.f32.mrb[0].mxu0
        %v2181 = vadd.f32 %v1908, %v2180
        %v2182 = vpop.f32.mrb[0].mxu0
        %v2183 = vadd.f32 %v1910, %v2182
        %v2184 = vpop.f32.mrb[0].mxu0
        %v2185 = vadd.f32 %v1912, %v2184
        %2186 = vmatprep.mubr.bf16.mxu0 0
        %2187 = vmatmul.mubr.bf16.gmra.mrb[0].mxu0 %v1023
        %v2188 = vpop.f32.mrb[0].mxu0
        %v2189 = vadd.f32 %v1916, %v2188
        %v2190 = vpop.f32.mrb[0].mxu0
        %v2191 = vadd.f32 %v1918, %v2190
        %v2192 = vpop.f32.mrb[0].mxu0
        %v2193 = vadd.f32 %v1920, %v2192
        %v2194 = vpop.f32.mrb[0].mxu0
        %v2195 = vadd.f32 %v1922, %v2194
        %2196 = vmatprep.mubr.bf16.mxu0 0
        %2197 = vmatmul.mubr.bf16.gmra.mrb[0].mxu0 %v1024
        %v2198 = vpop.f32.mrb[0].mxu0
        %v2199 = vadd.f32 %v1926, %v2198
        %v2200 = vpop.f32.mrb[0].mxu0
        %v2201 = vadd.f32 %v1928, %v2200
        %v2202 = vpop.f32.mrb[0].mxu0
        %v2203 = vadd.f32 %v1930, %v2202
        %v2204 = vpop.f32.mrb[0].mxu0
        %v2205 = vadd.f32 %v1932, %v2204
        %2206 = vmatprep.mubr.bf16.mxu0 0
        %2207 = vmatmul.mubr.bf16.gmra.mrb[0].mxu0 %v1025
        %v2208 = vpop.f32.mrb[0].mxu0
        %v2209 = vadd.f32 %v1936, %v2208
        %v2210 = vpop.f32.mrb[0].mxu0
        %v2211 = vadd.f32 %v1938, %v2210
        %v2212 = vpop.f32.mrb[0].mxu0
        %v2213 = vadd.f32 %v1940, %v2212
        %v2214 = vpop.f32.mrb[0].mxu0
        %v2215 = vadd.f32 %v1942, %v2214
        %2216 = vmatprep.mubr.bf16.mxu0 0
        %2217 = vmatmul.mubr.bf16.gmra.mrb[0].mxu0 %v1026
        %v2218 = vpop.f32.mrb[0].mxu0
        %v2219 = vadd.f32 %v1946, %v2218
        %v2220 = vpop.f32.mrb[0].mxu0
        %v2221 = vadd.f32 %v1948, %v2220
        %v2222 = vpop.f32.mrb[0].mxu0
        %v2223 = vadd.f32 %v1950, %v2222
        %v2224 = vpop.f32.mrb[0].mxu0
        %v2225 = vadd.f32 %v1952, %v2224
        %2226 = vmatprep.mubr.bf16.mxu0 0
        %2227 = vmatmul.mubr.bf16.gmra.mrb[0].mxu0 %v1027
        %v2228 = vpop.f32.mrb[0].mxu0
        %v2229 = vadd.f32 %v1956, %v2228
        %v2230 = vpop.f32.mrb[0].mxu0
        %v2231 = vadd.f32 %v1958, %v2230
        %v2232 = vpop.f32.mrb[0].mxu0
        %v2233 = vadd.f32 %v1960, %v2232
        %v2234 = vpop.f32.mrb[0].mxu0
        %v2235 = vadd.f32 %v1962, %v2234
        %2236 = vmatprep.mubr.bf16.mxu0 0
        %2237 = vmatmul.mubr.bf16.gmra.mrb[0].mxu0 %v1028
        %v2238 = vpop.f32.mrb[0].mxu0
        %v2239 = vadd.f32 %v1966, %v2238
        %v2240 = vpop.f32.mrb[0].mxu0
        %v2241 = vadd.f32 %v1968, %v2240
        %v2242 = vpop.f32.mrb[0].mxu0
        %v2243 = vadd.f32 %v1970, %v2242
        %v2244 = vpop.f32.mrb[0].mxu0
        %v2245 = vadd.f32 %v1972, %v2244
        %2246 = vmatprep.mubr.bf16.mxu0 0
        %2247 = vmatmul.mubr.bf16.gmra.mrb[0].mxu0 %v1029
        %v2248 = vpop.f32.mrb[0].mxu0
        %v2249 = vadd.f32 %v1976, %v2248
        %v2250 = vpop.f32.mrb[0].mxu0
        %v2251 = vadd.f32 %v1978, %v2250
        %v2252 = vpop.f32.mrb[0].mxu0
        %v2253 = vadd.f32 %v1980, %v2252
        %v2254 = vpop.f32.mrb[0].mxu0
        %v2255 = vadd.f32 %v1982, %v2254
        %2256 = vmatprep.mubr.bf16.mxu0 0
        %2257 = vmatmul.mubr.bf16.gmra.mrb[0].mxu0 %v1030
        %v2258 = vpop.f32.mrb[0].mxu0
        %v2259 = vadd.f32 %v1986, %v2258
        %v2260 = vpop.f32.mrb[0].mxu0
        %v2261 = vadd.f32 %v1988, %v2260
        %v2262 = vpop.f32.mrb[0].mxu0
        %v2263 = vadd.f32 %v1990, %v2262
        %v2264 = vpop.f32.mrb[0].mxu0
        %v2265 = vadd.f32 %v1992, %v2264
        %2266 = vmatprep.mubr.bf16.mxu0 0
        %2267 = vmatmul.mubr.bf16.gmra.mrb[0].mxu0 %v1031
        %v2268 = vpop.f32.mrb[0].mxu0
        %v2269 = vadd.f32 %v1996, %v2268
        %v2270 = vpop.f32.mrb[0].mxu0
        %v2271 = vadd.f32 %v1998, %v2270
        %v2272 = vpop.f32.mrb[0].mxu0
        %v2273 = vadd.f32 %v2000, %v2272
        %v2274 = vpop.f32.mrb[0].mxu0
        %v2275 = vadd.f32 %v2002, %v2274
        %2276 = vmatprep.mubr.bf16.mxu0 0
        %2277 = vmatmul.mubr.bf16.gmra.mrb[0].mxu0 %v1032
        %v2278 = vpop.f32.mrb[0].mxu0
        %v2279 = vadd.f32 %v2006, %v2278
        %v2280 = vpop.f32.mrb[0].mxu0
        %v2281 = vadd.f32 %v2008, %v2280
        %v2282 = vpop.f32.mrb[0].mxu0
        %v2283 = vadd.f32 %v2010, %v2282
        %v2284 = vpop.f32.mrb[0].mxu0
        %v2285 = vadd.f32 %v2012, %v2284
        %2286 = vmatprep.mubr.bf16.mxu0 0
        %2287 = vmatmul.mubr.bf16.gmra.mrb[0].mxu0 %v1033
        %v2288 = vpop.f32.mrb[0].mxu0
        %v2289 = vadd.f32 %v2016, %v2288
        %v2290 = vpop.f32.mrb[0].mxu0
        %v2291 = vadd.f32 %v2018, %v2290
        %v2292 = vpop.f32.mrb[0].mxu0
        %v2293 = vadd.f32 %v2020, %v2292
        %v2294 = vpop.f32.mrb[0].mxu0
        %v2295 = vadd.f32 %v2022, %v2294
        %2296 = vdwg.mxu0
        %v2297 = vld [vmem:[#allocation10 + $0x2] sm:$0x3]
        %v2299 = vlaneseq
        %v2300 = vshrl.u32 %v2299, 7
        %v2301 = vsub.s32 0, %v2300
        %v2302 = vrot.slane %v2297, %v2301
        %v2303 = vlaneseq
        %v2304 = vshrl.u32 %v2303, 7
        %v2305 = vsub.s32 1, %v2304
        %v2306 = vrot.slane %v2297, %v2305
        %v2309 = vadd.f32 %v2139, %v2302
        %v2310 = vadd.f32 %v2141, %v2306
        %v2311 = vadd.f32 %v2143, %v2302
        %v2312 = vadd.f32 %v2145, %v2306
        %v2313 = vadd.f32 %v2149, %v2302
        %v2314 = vadd.f32 %v2151, %v2306
        %v2315 = vadd.f32 %v2153, %v2302
        %v2316 = vadd.f32 %v2155, %v2306
        %v2317 = vadd.f32 %v2159, %v2302
        %v2318 = vadd.f32 %v2161, %v2306
        %v2319 = vadd.f32 %v2163, %v2302
        %v2320 = vadd.f32 %v2165, %v2306
        %v2321 = vadd.f32 %v2169, %v2302
        %v2322 = vadd.f32 %v2171, %v2306
        %v2323 = vadd.f32 %v2173, %v2302
        %v2324 = vadd.f32 %v2175, %v2306
        %v2325 = vadd.f32 %v2179, %v2302
        %v2326 = vadd.f32 %v2181, %v2306
        %v2327 = vadd.f32 %v2183, %v2302
        %v2328 = vadd.f32 %v2185, %v2306
        %v2329 = vadd.f32 %v2189, %v2302
        %v2330 = vadd.f32 %v2191, %v2306
        %v2331 = vadd.f32 %v2193, %v2302
        %v2332 = vadd.f32 %v2195, %v2306
        %v2333 = vadd.f32 %v2199, %v2302
        %v2334 = vadd.f32 %v2201, %v2306
        %v2335 = vadd.f32 %v2203, %v2302
        %v2336 = vadd.f32 %v2205, %v2306
        %v2337 = vadd.f32 %v2209, %v2302
        %v2338 = vadd.f32 %v2211, %v2306
        %v2339 = vadd.f32 %v2213, %v2302
        %v2340 = vadd.f32 %v2215, %v2306
        %v2341 = vadd.f32 %v2219, %v2302
        %v2342 = vadd.f32 %v2221, %v2306
        %v2343 = vadd.f32 %v2223, %v2302
        %v2344 = vadd.f32 %v2225, %v2306
        %v2345 = vadd.f32 %v2229, %v2302
        %v2346 = vadd.f32 %v2231, %v2306
        %v2347 = vadd.f32 %v2233, %v2302
        %v2348 = vadd.f32 %v2235, %v2306
        %v2349 = vadd.f32 %v2239, %v2302
        %v2350 = vadd.f32 %v2241, %v2306
        %v2351 = vadd.f32 %v2243, %v2302
        %v2352 = vadd.f32 %v2245, %v2306
        %v2353 = vadd.f32 %v2249, %v2302
        %v2354 = vadd.f32 %v2251, %v2306
        %v2355 = vadd.f32 %v2253, %v2302
        %v2356 = vadd.f32 %v2255, %v2306
        %v2357 = vadd.f32 %v2259, %v2302
        %v2358 = vadd.f32 %v2261, %v2306
        %v2359 = vadd.f32 %v2263, %v2302
        %v2360 = vadd.f32 %v2265, %v2306
        %v2361 = vadd.f32 %v2269, %v2302
        %v2362 = vadd.f32 %v2271, %v2306
        %v2363 = vadd.f32 %v2273, %v2302
        %v2364 = vadd.f32 %v2275, %v2306
        %v2365 = vadd.f32 %v2279, %v2302
        %v2366 = vadd.f32 %v2281, %v2306
        %v2367 = vadd.f32 %v2283, %v2302
        %v2368 = vadd.f32 %v2285, %v2306
        %v2369 = vadd.f32 %v2289, %v2302
        %v2370 = vadd.f32 %v2291, %v2306
        %v2371 = vadd.f32 %v2293, %v2302
        %v2372 = vadd.f32 %v2295, %v2306
        %v2373 = vpack.c.bf16 %v2311, %v2309
        %v2374 = vpack.c.bf16 %v2312, %v2310
        %v2375 = vpack.c.bf16 %v2315, %v2313
        %v2376 = vpack.c.bf16 %v2316, %v2314
        %v2377 = vpack.c.bf16 %v2319, %v2317
        %v2378 = vpack.c.bf16 %v2320, %v2318
        %v2379 = vpack.c.bf16 %v2323, %v2321
        %v2380 = vpack.c.bf16 %v2324, %v2322
        %v2381 = vpack.c.bf16 %v2327, %v2325
        %v2382 = vpack.c.bf16 %v2328, %v2326
        %v2383 = vpack.c.bf16 %v2331, %v2329
        %v2384 = vpack.c.bf16 %v2332, %v2330
        %v2385 = vpack.c.bf16 %v2335, %v2333
        %v2386 = vpack.c.bf16 %v2336, %v2334
        %v2387 = vpack.c.bf16 %v2339, %v2337
        %v2388 = vpack.c.bf16 %v2340, %v2338
        %v2389 = vpack.c.bf16 %v2343, %v2341
        %v2390 = vpack.c.bf16 %v2344, %v2342
        %v2391 = vpack.c.bf16 %v2347, %v2345
        %v2392 = vpack.c.bf16 %v2348, %v2346
        %v2393 = vpack.c.bf16 %v2351, %v2349
        %v2394 = vpack.c.bf16 %v2352, %v2350
        %v2395 = vpack.c.bf16 %v2355, %v2353
        %v2396 = vpack.c.bf16 %v2356, %v2354
        %v2397 = vpack.c.bf16 %v2359, %v2357
        %v2398 = vpack.c.bf16 %v2360, %v2358
        %v2399 = vpack.c.bf16 %v2363, %v2361
        %v2400 = vpack.c.bf16 %v2364, %v2362
        %v2401 = vpack.c.bf16 %v2367, %v2365
        %v2402 = vpack.c.bf16 %v2368, %v2366
        %v2403 = vpack.c.bf16 %v2371, %v2369
        %v2404 = vpack.c.bf16 %v2372, %v2370
        %v2437 = vunpack.c.l.b16 %v2373
        %v2438 = vunpack.c.l.b16 %v2374
        %v2439 = vunpack.c.h.b16 %v2373
        %v2440 = vunpack.c.h.b16 %v2374
        %v2441 = vunpack.c.l.b16 %v2375
        %v2442 = vunpack.c.l.b16 %v2376
        %v2443 = vunpack.c.h.b16 %v2375
        %v2444 = vunpack.c.h.b16 %v2376
        %v2445 = vunpack.c.l.b16 %v2377
        %v2446 = vunpack.c.l.b16 %v2378
        %v2447 = vunpack.c.h.b16 %v2377
        %v2448 = vunpack.c.h.b16 %v2378
        %v2449 = vunpack.c.l.b16 %v2379
        %v2450 = vunpack.c.l.b16 %v2380
        %v2451 = vunpack.c.h.b16 %v2379
        %v2452 = vunpack.c.h.b16 %v2380
        %v2453 = vunpack.c.l.b16 %v2381
        %v2454 = vunpack.c.l.b16 %v2382
        %v2455 = vunpack.c.h.b16 %v2381
        %v2456 = vunpack.c.h.b16 %v2382
        %v2457 = vunpack.c.l.b16 %v2383
        %v2458 = vunpack.c.l.b16 %v2384
        %v2459 = vunpack.c.h.b16 %v2383
        %v2460 = vunpack.c.h.b16 %v2384
        %v2461 = vunpack.c.l.b16 %v2385
        %v2462 = vunpack.c.l.b16 %v2386
        %v2463 = vunpack.c.h.b16 %v2385
        %v2464 = vunpack.c.h.b16 %v2386
        %v2465 = vunpack.c.l.b16 %v2387
        %v2466 = vunpack.c.l.b16 %v2388
        %v2467 = vunpack.c.h.b16 %v2387
        %v2468 = vunpack.c.h.b16 %v2388
        %v2469 = vunpack.c.l.b16 %v2389
        %v2470 = vunpack.c.l.b16 %v2390
        %v2471 = vunpack.c.h.b16 %v2389
        %v2472 = vunpack.c.h.b16 %v2390
        %v2473 = vunpack.c.l.b16 %v2391
        %v2474 = vunpack.c.l.b16 %v2392
        %v2475 = vunpack.c.h.b16 %v2391
        %v2476 = vunpack.c.h.b16 %v2392
        %v2477 = vunpack.c.l.b16 %v2393
        %v2478 = vunpack.c.l.b16 %v2394
        %v2479 = vunpack.c.h.b16 %v2393
        %v2480 = vunpack.c.h.b16 %v2394
        %v2481 = vunpack.c.l.b16 %v2395
        %v2482 = vunpack.c.l.b16 %v2396
        %v2483 = vunpack.c.h.b16 %v2395
        %v2484 = vunpack.c.h.b16 %v2396
        %v2485 = vunpack.c.l.b16 %v2397
        %v2486 = vunpack.c.l.b16 %v2398
        %v2487 = vunpack.c.h.b16 %v2397
        %v2488 = vunpack.c.h.b16 %v2398
        %v2489 = vunpack.c.l.b16 %v2399
        %v2490 = vunpack.c.l.b16 %v2400
        %v2491 = vunpack.c.h.b16 %v2399
        %v2492 = vunpack.c.h.b16 %v2400
        %v2493 = vunpack.c.l.b16 %v2401
        %v2494 = vunpack.c.l.b16 %v2402
        %v2495 = vunpack.c.h.b16 %v2401
        %v2496 = vunpack.c.h.b16 %v2402
        %v2497 = vunpack.c.l.b16 %v2403
        %v2498 = vunpack.c.l.b16 %v2404
        %v2499 = vunpack.c.h.b16 %v2403
        %v2500 = vunpack.c.h.b16 %v2404
        %v2501 = vpack.c.b16 %v2438, %v2437
        %v2502 = vpack.c.b16 %v2440, %v2439
        %v2503 = vpack.c.b16 %v2442, %v2441
        %v2504 = vpack.c.b16 %v2444, %v2443
        %v2505 = vpack.c.b16 %v2446, %v2445
        %v2506 = vpack.c.b16 %v2448, %v2447
        %v2507 = vpack.c.b16 %v2450, %v2449
        %v2508 = vpack.c.b16 %v2452, %v2451
        %v2509 = vpack.c.b16 %v2454, %v2453
        %v2510 = vpack.c.b16 %v2456, %v2455
        %v2511 = vpack.c.b16 %v2458, %v2457
        %v2512 = vpack.c.b16 %v2460, %v2459
        %v2513 = vpack.c.b16 %v2462, %v2461
        %v2514 = vpack.c.b16 %v2464, %v2463
        %v2515 = vpack.c.b16 %v2466, %v2465
        %v2516 = vpack.c.b16 %v2468, %v2467
        %v2517 = vpack.c.b16 %v2470, %v2469
        %v2518 = vpack.c.b16 %v2472, %v2471
        %v2519 = vpack.c.b16 %v2474, %v2473
        %v2520 = vpack.c.b16 %v2476, %v2475
        %v2521 = vpack.c.b16 %v2478, %v2477
        %v2522 = vpack.c.b16 %v2480, %v2479
        %v2523 = vpack.c.b16 %v2482, %v2481
        %v2524 = vpack.c.b16 %v2484, %v2483
        %v2525 = vpack.c.b16 %v2486, %v2485
        %v2526 = vpack.c.b16 %v2488, %v2487
        %v2527 = vpack.c.b16 %v2490, %v2489
        %v2528 = vpack.c.b16 %v2492, %v2491
        %v2529 = vpack.c.b16 %v2494, %v2493
        %v2530 = vpack.c.b16 %v2496, %v2495
        %v2531 = vpack.c.b16 %v2498, %v2497
        %v2532 = vpack.c.b16 %v2500, %v2499
        %2565 = vst [vmem:[%s324 + $0x8] sm:$0xff] %v2501
        %2566 = vst [vmem:[%s324 + $0x28] sm:$0xff] %v2502
        %2567 = vst [vmem:[%s324 + $0x48] sm:$0xff] %v2503
        %2568 = vst [vmem:[%s324 + $0x68] sm:$0xff] %v2504
        %2569 = vst [vmem:[%s324 + $0x88] sm:$0xff] %v2505
        %2570 = vst [vmem:[%s324 + $0xa8] sm:$0xff] %v2506
        %2571 = vst [vmem:[%s324 + $0xc8] sm:$0xff] %v2507
        %2572 = vst [vmem:[%s324 + $0xe8] sm:$0xff] %v2508
        %2573 = vst [vmem:[%s324 + $0x108] sm:$0xff] %v2509
        %2574 = vst [vmem:[%s324 + $0x128] sm:$0xff] %v2510
        %2575 = vst [vmem:[%s324 + $0x148] sm:$0xff] %v2511
        %2576 = vst [vmem:[%s324 + $0x168] sm:$0xff] %v2512
        %2577 = vst [vmem:[%s324 + $0x188] sm:$0xff] %v2513
        %2578 = vst [vmem:[%s324 + $0x1a8] sm:$0xff] %v2514
        %2579 = vst [vmem:[%s324 + $0x1c8] sm:$0xff] %v2515
        %2580 = vst [vmem:[%s324 + $0x1e8] sm:$0xff] %v2516
        %2581 = vst [vmem:[%s324 + $0x208] sm:$0xff] %v2517
        %2582 = vst [vmem:[%s324 + $0x228] sm:$0xff] %v2518
        %2583 = vst [vmem:[%s324 + $0x248] sm:$0xff] %v2519
        %2584 = vst [vmem:[%s324 + $0x268] sm:$0xff] %v2520
        %2585 = vst [vmem:[%s324 + $0x288] sm:$0xff] %v2521
        %2586 = vst [vmem:[%s324 + $0x2a8] sm:$0xff] %v2522
        %2587 = vst [vmem:[%s324 + $0x2c8] sm:$0xff] %v2523
        %2588 = vst [vmem:[%s324 + $0x2e8] sm:$0xff] %v2524
        %2589 = vst [vmem:[%s324 + $0x308] sm:$0xff] %v2525
        %2590 = vst [vmem:[%s324 + $0x328] sm:$0xff] %v2526
        %2591 = vst [vmem:[%s324 + $0x348] sm:$0xff] %v2527
        %2592 = vst [vmem:[%s324 + $0x368] sm:$0xff] %v2528
        %2593 = vst [vmem:[%s324 + $0x388] sm:$0xff] %v2529
        %2594 = vst [vmem:[%s324 + $0x3a8] sm:$0xff] %v2530
        %2595 = vst [vmem:[%s324 + $0x3c8] sm:$0xff] %v2531
        %2596 = vst [vmem:[%s324 + $0x3e8] sm:$0xff] %v2532
        %v2597 = vld [vmem:[#allocation7 + $0x10] sm:$0xff]
        %v2598 = vld [vmem:[#allocation7 + $0x30] sm:$0xff]
        %v2599 = vld [vmem:[#allocation7 + $0x50] sm:$0xff]
        %v2600 = vld [vmem:[#allocation7 + $0x70] sm:$0xff]
        %v2601 = vld [vmem:[#allocation7 + $0x90] sm:$0xff]
        %v2602 = vld [vmem:[#allocation7 + $0xb0] sm:$0xff]
        %v2603 = vld [vmem:[#allocation7 + $0xd0] sm:$0xff]
        %v2604 = vld [vmem:[#allocation7 + $0xf0] sm:$0xff]
        %v2605 = vld [vmem:[#allocation7 + $0x110] sm:$0xff]
        %v2606 = vld [vmem:[#allocation7 + $0x130] sm:$0xff]
        %v2607 = vld [vmem:[#allocation7 + $0x150] sm:$0xff]
        %v2608 = vld [vmem:[#allocation7 + $0x170] sm:$0xff]
        %v2609 = vld [vmem:[#allocation7 + $0x190] sm:$0xff]
        %v2610 = vld [vmem:[#allocation7 + $0x1b0] sm:$0xff]
        %v2611 = vld [vmem:[#allocation7 + $0x1d0] sm:$0xff]
        %v2612 = vld [vmem:[#allocation7 + $0x1f0] sm:$0xff]
        %v2613 = vld [vmem:[%s281 + $0x10] sm:$0xff]
        %v2614 = vld [vmem:[%s281 + $0x30] sm:$0xff]
        %v2615 = vld [vmem:[%s281 + $0x50] sm:$0xff]
        %v2616 = vld [vmem:[%s281 + $0x70] sm:$0xff]
        %v2617 = vld [vmem:[%s281 + $0x90] sm:$0xff]
        %v2618 = vld [vmem:[%s281 + $0xb0] sm:$0xff]
        %v2619 = vld [vmem:[%s281 + $0xd0] sm:$0xff]
        %v2620 = vld [vmem:[%s281 + $0xf0] sm:$0xff]
        %v2621 = vld [vmem:[%s281 + $0x110] sm:$0xff]
        %v2622 = vld [vmem:[%s281 + $0x130] sm:$0xff]
        %v2623 = vld [vmem:[%s281 + $0x150] sm:$0xff]
        %v2624 = vld [vmem:[%s281 + $0x170] sm:$0xff]
        %v2625 = vld [vmem:[%s281 + $0x190] sm:$0xff]
        %v2626 = vld [vmem:[%s281 + $0x1b0] sm:$0xff]
        %v2627 = vld [vmem:[%s281 + $0x1d0] sm:$0xff]
        %v2628 = vld [vmem:[%s281 + $0x1f0] sm:$0xff]
        %v2629 = vld [vmem:[%s281 + $0x210] sm:$0xff]
        %v2630 = vld [vmem:[%s281 + $0x230] sm:$0xff]
        %v2631 = vld [vmem:[%s281 + $0x250] sm:$0xff]
        %v2632 = vld [vmem:[%s281 + $0x270] sm:$0xff]
        %v2633 = vld [vmem:[%s281 + $0x290] sm:$0xff]
        %v2634 = vld [vmem:[%s281 + $0x2b0] sm:$0xff]
        %v2635 = vld [vmem:[%s281 + $0x2d0] sm:$0xff]
        %v2636 = vld [vmem:[%s281 + $0x2f0] sm:$0xff]
        %v2637 = vld [vmem:[%s281 + $0x310] sm:$0xff]
        %v2638 = vld [vmem:[%s281 + $0x330] sm:$0xff]
        %v2639 = vld [vmem:[%s281 + $0x350] sm:$0xff]
        %v2640 = vld [vmem:[%s281 + $0x370] sm:$0xff]
        %v2641 = vld [vmem:[%s281 + $0x390] sm:$0xff]
        %v2642 = vld [vmem:[%s281 + $0x3b0] sm:$0xff]
        %v2643 = vld [vmem:[%s281 + $0x3d0] sm:$0xff]
        %v2644 = vld [vmem:[%s281 + $0x3f0] sm:$0xff]
        %v2677 = vunpack.c.l.b16 %v2613
        %v2678 = vunpack.c.h.b16 %v2613
        %v2679 = vunpack.c.l.b16 %v2614
        %v2680 = vunpack.c.h.b16 %v2614
        %v2681 = vunpack.c.l.b16 %v2615
        %v2682 = vunpack.c.h.b16 %v2615
        %v2683 = vunpack.c.l.b16 %v2616
        %v2684 = vunpack.c.h.b16 %v2616
        %v2685 = vunpack.c.l.b16 %v2617
        %v2686 = vunpack.c.h.b16 %v2617
        %v2687 = vunpack.c.l.b16 %v2618
        %v2688 = vunpack.c.h.b16 %v2618
        %v2689 = vunpack.c.l.b16 %v2619
        %v2690 = vunpack.c.h.b16 %v2619
        %v2691 = vunpack.c.l.b16 %v2620
        %v2692 = vunpack.c.h.b16 %v2620
        %v2693 = vunpack.c.l.b16 %v2621
        %v2694 = vunpack.c.h.b16 %v2621
        %v2695 = vunpack.c.l.b16 %v2622
        %v2696 = vunpack.c.h.b16 %v2622
        %v2697 = vunpack.c.l.b16 %v2623
        %v2698 = vunpack.c.h.b16 %v2623
        %v2699 = vunpack.c.l.b16 %v2624
        %v2700 = vunpack.c.h.b16 %v2624
        %v2701 = vunpack.c.l.b16 %v2625
        %v2702 = vunpack.c.h.b16 %v2625
        %v2703 = vunpack.c.l.b16 %v2626
        %v2704 = vunpack.c.h.b16 %v2626
        %v2705 = vunpack.c.l.b16 %v2627
        %v2706 = vunpack.c.h.b16 %v2627
        %v2707 = vunpack.c.l.b16 %v2628
        %v2708 = vunpack.c.h.b16 %v2628
        %v2709 = vunpack.c.l.b16 %v2629
        %v2710 = vunpack.c.h.b16 %v2629
        %v2711 = vunpack.c.l.b16 %v2630
        %v2712 = vunpack.c.h.b16 %v2630
        %v2713 = vunpack.c.l.b16 %v2631
        %v2714 = vunpack.c.h.b16 %v2631
        %v2715 = vunpack.c.l.b16 %v2632
        %v2716 = vunpack.c.h.b16 %v2632
        %v2717 = vunpack.c.l.b16 %v2633
        %v2718 = vunpack.c.h.b16 %v2633
        %v2719 = vunpack.c.l.b16 %v2634
        %v2720 = vunpack.c.h.b16 %v2634
        %v2721 = vunpack.c.l.b16 %v2635
        %v2722 = vunpack.c.h.b16 %v2635
        %v2723 = vunpack.c.l.b16 %v2636
        %v2724 = vunpack.c.h.b16 %v2636
        %v2725 = vunpack.c.l.b16 %v2637
        %v2726 = vunpack.c.h.b16 %v2637
        %v2727 = vunpack.c.l.b16 %v2638
        %v2728 = vunpack.c.h.b16 %v2638
        %v2729 = vunpack.c.l.b16 %v2639
        %v2730 = vunpack.c.h.b16 %v2639
        %v2731 = vunpack.c.l.b16 %v2640
        %v2732 = vunpack.c.h.b16 %v2640
        %v2733 = vunpack.c.l.b16 %v2641
        %v2734 = vunpack.c.h.b16 %v2641
        %v2735 = vunpack.c.l.b16 %v2642
        %v2736 = vunpack.c.h.b16 %v2642
        %v2737 = vunpack.c.l.b16 %v2643
        %v2738 = vunpack.c.h.b16 %v2643
        %v2739 = vunpack.c.l.b16 %v2644
        %v2740 = vunpack.c.h.b16 %v2644
        %v2741 = vpack.c.b16 %v2679, %v2677
        %v2742 = vpack.c.b16 %v2680, %v2678
        %v2743 = vpack.c.b16 %v2683, %v2681
        %v2744 = vpack.c.b16 %v2684, %v2682
        %v2745 = vpack.c.b16 %v2687, %v2685
        %v2746 = vpack.c.b16 %v2688, %v2686
        %v2747 = vpack.c.b16 %v2691, %v2689
        %v2748 = vpack.c.b16 %v2692, %v2690
        %v2749 = vpack.c.b16 %v2695, %v2693
        %v2750 = vpack.c.b16 %v2696, %v2694
        %v2751 = vpack.c.b16 %v2699, %v2697
        %v2752 = vpack.c.b16 %v2700, %v2698
        %v2753 = vpack.c.b16 %v2703, %v2701
        %v2754 = vpack.c.b16 %v2704, %v2702
        %v2755 = vpack.c.b16 %v2707, %v2705
        %v2756 = vpack.c.b16 %v2708, %v2706
        %v2757 = vpack.c.b16 %v2711, %v2709
        %v2758 = vpack.c.b16 %v2712, %v2710
        %v2759 = vpack.c.b16 %v2715, %v2713
        %v2760 = vpack.c.b16 %v2716, %v2714
        %v2761 = vpack.c.b16 %v2719, %v2717
        %v2762 = vpack.c.b16 %v2720, %v2718
        %v2763 = vpack.c.b16 %v2723, %v2721
        %v2764 = vpack.c.b16 %v2724, %v2722
        %v2765 = vpack.c.b16 %v2727, %v2725
        %v2766 = vpack.c.b16 %v2728, %v2726
        %v2767 = vpack.c.b16 %v2731, %v2729
        %v2768 = vpack.c.b16 %v2732, %v2730
        %v2769 = vpack.c.b16 %v2735, %v2733
        %v2770 = vpack.c.b16 %v2736, %v2734
        %v2771 = vpack.c.b16 %v2739, %v2737
        %v2772 = vpack.c.b16 %v2740, %v2738
        %2805 = vmatprep.subr.bf16.mxu0 %v698
        %2806 = vmatpush1.bf16.msra.mxu0 %v697
        %2807 = vmatprep.subr.bf16.mxu0 %v700
        %2808 = vmatpush1.bf16.msra.mxu0 %v699
        %2809 = vmatprep.subr.bf16.mxu0 %v702
        %2810 = vmatpush1.bf16.msra.mxu0 %v701
        %2811 = vmatprep.subr.bf16.mxu0 %v704
        %2812 = vmatpush1.bf16.msra.mxu0 %v703
        %2813 = vmatprep.subr.bf16.mxu0 %v706
        %2814 = vmatpush1.bf16.msra.mxu0 %v705
        %2815 = vmatprep.subr.bf16.mxu0 %v708
        %2816 = vmatpush1.bf16.msra.mxu0 %v707
        %2817 = vmatprep.subr.bf16.mxu0 %v710
        %2818 = vmatpush1.bf16.msra.mxu0 %v709
        %2819 = vmatprep.subr.bf16.mxu0 %v712
        %2820 = vmatpush1.bf16.msra.mxu0 %v711
        %2821 = vmatprep.subr.bf16.mxu0 %v714
        %2822 = vmatpush1.bf16.msra.mxu0 %v713
        %2823 = vmatprep.subr.bf16.mxu0 %v716
        %2824 = vmatpush1.bf16.msra.mxu0 %v715
        %2825 = vmatprep.subr.bf16.mxu0 %v718
        %2826 = vmatpush1.bf16.msra.mxu0 %v717
        %2827 = vmatprep.subr.bf16.mxu0 %v720
        %2828 = vmatpush1.bf16.msra.mxu0 %v719
        %2829 = vmatprep.subr.bf16.mxu0 %v722
        %2830 = vmatpush1.bf16.msra.mxu0 %v721
        %2831 = vmatprep.subr.bf16.mxu0 %v724
        %2832 = vmatpush1.bf16.msra.mxu0 %v723
        %2833 = vmatprep.subr.bf16.mxu0 %v726
        %2834 = vmatpush1.bf16.msra.mxu0 %v725
        %2835 = vmatprep.subr.bf16.mxu0 %v728
        %2836 = vmatpush1.bf16.msra.mxu0 %v727
        %2837 = vmatprep.mubr.bf16.mxu0 %v2742
        %2838 = vmatmul.mubr.bf16.gmra.mrb[0].mxu0 %v2741
        %v2839 = vpop.f32.mrb[0].mxu0
        %v2840 = vadd.f32 0.0, %v2839
        %v2841 = vpop.f32.mrb[0].mxu0
        %v2842 = vadd.f32 0.0, %v2841
        %v2843 = vpop.f32.mrb[0].mxu0
        %v2844 = vadd.f32 0.0, %v2843
        %v2845 = vpop.f32.mrb[0].mxu0
        %v2846 = vadd.f32 0.0, %v2845
        %2847 = vmatprep.mubr.bf16.mxu0 %v2744
        %2848 = vmatmul.mubr.bf16.gmra.mrb[0].mxu0 %v2743
        %v2849 = vpop.f32.mrb[0].mxu0
        %v2850 = vadd.f32 0.0, %v2849
        %v2851 = vpop.f32.mrb[0].mxu0
        %v2852 = vadd.f32 0.0, %v2851
        %v2853 = vpop.f32.mrb[0].mxu0
        %v2854 = vadd.f32 0.0, %v2853
        %v2855 = vpop.f32.mrb[0].mxu0
        %v2856 = vadd.f32 0.0, %v2855
        %2857 = vmatprep.mubr.bf16.mxu0 %v2746
        %2858 = vmatmul.mubr.bf16.gmra.mrb[0].mxu0 %v2745
        %v2859 = vpop.f32.mrb[0].mxu0
        %v2860 = vadd.f32 0.0, %v2859
        %v2861 = vpop.f32.mrb[0].mxu0
        %v2862 = vadd.f32 0.0, %v2861
        %v2863 = vpop.f32.mrb[0].mxu0
        %v2864 = vadd.f32 0.0, %v2863
        %v2865 = vpop.f32.mrb[0].mxu0
        %v2866 = vadd.f32 0.0, %v2865
        %2867 = vmatprep.mubr.bf16.mxu0 %v2748
        %2868 = vmatmul.mubr.bf16.gmra.mrb[0].mxu0 %v2747
        %v2869 = vpop.f32.mrb[0].mxu0
        %v2870 = vadd.f32 0.0, %v2869
        %v2871 = vpop.f32.mrb[0].mxu0
        %v2872 = vadd.f32 0.0, %v2871
        %v2873 = vpop.f32.mrb[0].mxu0
        %v2874 = vadd.f32 0.0, %v2873
        %v2875 = vpop.f32.mrb[0].mxu0
        %v2876 = vadd.f32 0.0, %v2875
        %2877 = vmatprep.mubr.bf16.mxu0 %v2750
        %2878 = vmatmul.mubr.bf16.gmra.mrb[0].mxu0 %v2749
        %v2879 = vpop.f32.mrb[0].mxu0
        %v2880 = vadd.f32 0.0, %v2879
        %v2881 = vpop.f32.mrb[0].mxu0
        %v2882 = vadd.f32 0.0, %v2881
        %v2883 = vpop.f32.mrb[0].mxu0
        %v2884 = vadd.f32 0.0, %v2883
        %v2885 = vpop.f32.mrb[0].mxu0
        %v2886 = vadd.f32 0.0, %v2885
        %2887 = vmatprep.mubr.bf16.mxu0 %v2752
        %2888 = vmatmul.mubr.bf16.gmra.mrb[0].mxu0 %v2751
        %v2889 = vpop.f32.mrb[0].mxu0
        %v2890 = vadd.f32 0.0, %v2889
        %v2891 = vpop.f32.mrb[0].mxu0
        %v2892 = vadd.f32 0.0, %v2891
        %v2893 = vpop.f32.mrb[0].mxu0
        %v2894 = vadd.f32 0.0, %v2893
        %v2895 = vpop.f32.mrb[0].mxu0
        %v2896 = vadd.f32 0.0, %v2895
        %2897 = vmatprep.mubr.bf16.mxu0 %v2754
        %2898 = vmatmul.mubr.bf16.gmra.mrb[0].mxu0 %v2753
        %v2899 = vpop.f32.mrb[0].mxu0
        %v2900 = vadd.f32 0.0, %v2899
        %v2901 = vpop.f32.mrb[0].mxu0
        %v2902 = vadd.f32 0.0, %v2901
        %v2903 = vpop.f32.mrb[0].mxu0
        %v2904 = vadd.f32 0.0, %v2903
        %v2905 = vpop.f32.mrb[0].mxu0
        %v2906 = vadd.f32 0.0, %v2905
        %2907 = vmatprep.mubr.bf16.mxu0 %v2756
        %2908 = vmatmul.mubr.bf16.gmra.mrb[0].mxu0 %v2755
        %v2909 = vpop.f32.mrb[0].mxu0
        %v2910 = vadd.f32 0.0, %v2909
        %v2911 = vpop.f32.mrb[0].mxu0
        %v2912 = vadd.f32 0.0, %v2911
        %v2913 = vpop.f32.mrb[0].mxu0
        %v2914 = vadd.f32 0.0, %v2913
        %v2915 = vpop.f32.mrb[0].mxu0
        %v2916 = vadd.f32 0.0, %v2915
        %2917 = vmatprep.mubr.bf16.mxu0 %v2758
        %2918 = vmatmul.mubr.bf16.gmra.mrb[0].mxu0 %v2757
        %v2919 = vpop.f32.mrb[0].mxu0
        %v2920 = vadd.f32 0.0, %v2919
        %v2921 = vpop.f32.mrb[0].mxu0
        %v2922 = vadd.f32 0.0, %v2921
        %v2923 = vpop.f32.mrb[0].mxu0
        %v2924 = vadd.f32 0.0, %v2923
        %v2925 = vpop.f32.mrb[0].mxu0
        %v2926 = vadd.f32 0.0, %v2925
        %2927 = vmatprep.mubr.bf16.mxu0 %v2760
        %2928 = vmatmul.mubr.bf16.gmra.mrb[0].mxu0 %v2759
        %v2929 = vpop.f32.mrb[0].mxu0
        %v2930 = vadd.f32 0.0, %v2929
        %v2931 = vpop.f32.mrb[0].mxu0
        %v2932 = vadd.f32 0.0, %v2931
        %v2933 = vpop.f32.mrb[0].mxu0
        %v2934 = vadd.f32 0.0, %v2933
        %v2935 = vpop.f32.mrb[0].mxu0
        %v2936 = vadd.f32 0.0, %v2935
        %2937 = vmatprep.mubr.bf16.mxu0 %v2762
        %2938 = vmatmul.mubr.bf16.gmra.mrb[0].mxu0 %v2761
        %v2939 = vpop.f32.mrb[0].mxu0
        %v2940 = vadd.f32 0.0, %v2939
        %v2941 = vpop.f32.mrb[0].mxu0
        %v2942 = vadd.f32 0.0, %v2941
        %v2943 = vpop.f32.mrb[0].mxu0
        %v2944 = vadd.f32 0.0, %v2943
        %v2945 = vpop.f32.mrb[0].mxu0
        %v2946 = vadd.f32 0.0, %v2945
        %2947 = vmatprep.mubr.bf16.mxu0 %v2764
        %2948 = vmatmul.mubr.bf16.gmra.mrb[0].mxu0 %v2763
        %v2949 = vpop.f32.mrb[0].mxu0
        %v2950 = vadd.f32 0.0, %v2949
        %v2951 = vpop.f32.mrb[0].mxu0
        %v2952 = vadd.f32 0.0, %v2951
        %v2953 = vpop.f32.mrb[0].mxu0
        %v2954 = vadd.f32 0.0, %v2953
        %v2955 = vpop.f32.mrb[0].mxu0
        %v2956 = vadd.f32 0.0, %v2955
        %2957 = vmatprep.mubr.bf16.mxu0 %v2766
        %2958 = vmatmul.mubr.bf16.gmra.mrb[0].mxu0 %v2765
        %v2959 = vpop.f32.mrb[0].mxu0
        %v2960 = vadd.f32 0.0, %v2959
        %v2961 = vpop.f32.mrb[0].mxu0
        %v2962 = vadd.f32 0.0, %v2961
        %v2963 = vpop.f32.mrb[0].mxu0
        %v2964 = vadd.f32 0.0, %v2963
        %v2965 = vpop.f32.mrb[0].mxu0
        %v2966 = vadd.f32 0.0, %v2965
        %2967 = vmatprep.mubr.bf16.mxu0 %v2768
        %2968 = vmatmul.mubr.bf16.gmra.mrb[0].mxu0 %v2767
        %v2969 = vpop.f32.mrb[0].mxu0
        %v2970 = vadd.f32 0.0, %v2969
        %v2971 = vpop.f32.mrb[0].mxu0
        %v2972 = vadd.f32 0.0, %v2971
        %v2973 = vpop.f32.mrb[0].mxu0
        %v2974 = vadd.f32 0.0, %v2973
        %v2975 = vpop.f32.mrb[0].mxu0
        %v2976 = vadd.f32 0.0, %v2975
        %2977 = vmatprep.mubr.bf16.mxu0 %v2770
        %2978 = vmatmul.mubr.bf16.gmra.mrb[0].mxu0 %v2769
        %v2979 = vpop.f32.mrb[0].mxu0
        %v2980 = vadd.f32 0.0, %v2979
        %v2981 = vpop.f32.mrb[0].mxu0
        %v2982 = vadd.f32 0.0, %v2981
        %v2983 = vpop.f32.mrb[0].mxu0
        %v2984 = vadd.f32 0.0, %v2983
        %v2985 = vpop.f32.mrb[0].mxu0
        %v2986 = vadd.f32 0.0, %v2985
        %2987 = vmatprep.mubr.bf16.mxu0 %v2772
        %2988 = vmatmul.mubr.bf16.gmra.mrb[0].mxu0 %v2771
        %v2989 = vpop.f32.mrb[0].mxu0
        %v2990 = vadd.f32 0.0, %v2989
        %v2991 = vpop.f32.mrb[0].mxu0
        %v2992 = vadd.f32 0.0, %v2991
        %v2993 = vpop.f32.mrb[0].mxu0
        %v2994 = vadd.f32 0.0, %v2993
        %v2995 = vpop.f32.mrb[0].mxu0
        %v2996 = vadd.f32 0.0, %v2995
        %2997 = vdwg.mxu0
        %v3014 = vunpack.c.l.b16 %v2597
        %v3015 = vunpack.c.h.b16 %v2597
        %v3016 = vunpack.c.l.b16 %v2598
        %v3017 = vunpack.c.h.b16 %v2598
        %v3018 = vunpack.c.l.b16 %v2599
        %v3019 = vunpack.c.h.b16 %v2599
        %v3020 = vunpack.c.l.b16 %v2600
        %v3021 = vunpack.c.h.b16 %v2600
        %v3022 = vunpack.c.l.b16 %v2601
        %v3023 = vunpack.c.h.b16 %v2601
        %v3024 = vunpack.c.l.b16 %v2602
        %v3025 = vunpack.c.h.b16 %v2602
        %v3026 = vunpack.c.l.b16 %v2603
        %v3027 = vunpack.c.h.b16 %v2603
        %v3028 = vunpack.c.l.b16 %v2604
        %v3029 = vunpack.c.h.b16 %v2604
        %v3030 = vunpack.c.l.b16 %v2605
        %v3031 = vunpack.c.h.b16 %v2605
        %v3032 = vunpack.c.l.b16 %v2606
        %v3033 = vunpack.c.h.b16 %v2606
        %v3034 = vunpack.c.l.b16 %v2607
        %v3035 = vunpack.c.h.b16 %v2607
        %v3036 = vunpack.c.l.b16 %v2608
        %v3037 = vunpack.c.h.b16 %v2608
        %v3038 = vunpack.c.l.b16 %v2609
        %v3039 = vunpack.c.h.b16 %v2609
        %v3040 = vunpack.c.l.b16 %v2610
        %v3041 = vunpack.c.h.b16 %v2610
        %v3042 = vunpack.c.l.b16 %v2611
        %v3043 = vunpack.c.h.b16 %v2611
        %v3044 = vunpack.c.l.b16 %v2612
        %v3045 = vunpack.c.h.b16 %v2612
        %v3046 = vpack.c.b16 %v3016, %v3014
        %v3047 = vpack.c.b16 %v3017, %v3015
        %v3048 = vpack.c.b16 %v3020, %v3018
        %v3049 = vpack.c.b16 %v3021, %v3019
        %v3050 = vpack.c.b16 %v3024, %v3022
        %v3051 = vpack.c.b16 %v3025, %v3023
        %v3052 = vpack.c.b16 %v3028, %v3026
        %v3053 = vpack.c.b16 %v3029, %v3027
        %v3054 = vpack.c.b16 %v3032, %v3030
        %v3055 = vpack.c.b16 %v3033, %v3031
        %v3056 = vpack.c.b16 %v3036, %v3034
        %v3057 = vpack.c.b16 %v3037, %v3035
        %v3058 = vpack.c.b16 %v3040, %v3038
        %v3059 = vpack.c.b16 %v3041, %v3039
        %v3060 = vpack.c.b16 %v3044, %v3042
        %v3061 = vpack.c.b16 %v3045, %v3043
        %3078 = vmatprep.subr.bf16.mxu0 %v3047
        %3079 = vmatpush1.bf16.msra.mxu0 %v3046
        %3080 = vmatprep.subr.bf16.mxu0 %v3049
        %3081 = vmatpush1.bf16.msra.mxu0 %v3048
        %3082 = vmatprep.subr.bf16.mxu0 %v3051
        %3083 = vmatpush1.bf16.msra.mxu0 %v3050
        %3084 = vmatprep.subr.bf16.mxu0 %v3053
        %3085 = vmatpush1.bf16.msra.mxu0 %v3052
        %3086 = vmatprep.subr.bf16.mxu0 %v3055
        %3087 = vmatpush1.bf16.msra.mxu0 %v3054
        %3088 = vmatprep.subr.bf16.mxu0 %v3057
        %3089 = vmatpush1.bf16.msra.mxu0 %v3056
        %3090 = vmatprep.subr.bf16.mxu0 %v3059
        %3091 = vmatpush1.bf16.msra.mxu0 %v3058
        %3092 = vmatprep.subr.bf16.mxu0 %v3061
        %3093 = vmatpush1.bf16.msra.mxu0 %v3060
        %3094 = vmatprep.subr.bf16.mxu0 0
        %3095 = vmatpush1.bf16.msra.mxu0 0
        %3096 = vmatprep.subr.bf16.mxu0 0
        %3097 = vmatpush1.bf16.msra.mxu0 0
        %3098 = vmatprep.subr.bf16.mxu0 0
        %3099 = vmatpush1.bf16.msra.mxu0 0
        %3100 = vmatprep.subr.bf16.mxu0 0
        %3101 = vmatpush1.bf16.msra.mxu0 0
        %3102 = vmatprep.subr.bf16.mxu0 0
        %3103 = vmatpush1.bf16.msra.mxu0 0
        %3104 = vmatprep.subr.bf16.mxu0 0
        %3105 = vmatpush1.bf16.msra.mxu0 0
        %3106 = vmatprep.subr.bf16.mxu0 0
        %3107 = vmatpush1.bf16.msra.mxu0 0
        %3108 = vmatprep.subr.bf16.mxu0 0
        %3109 = vmatpush1.bf16.msra.mxu0 0
        %3110 = vmatprep.mubr.bf16.mxu0 0
        %3111 = vmatmul.mubr.bf16.gmra.mrb[0].mxu0 %v1018
        %v3112 = vpop.f32.mrb[0].mxu0
        %v3113 = vadd.f32 %v2840, %v3112
        %v3114 = vpop.f32.mrb[0].mxu0
        %v3115 = vadd.f32 %v2842, %v3114
        %v3116 = vpop.f32.mrb[0].mxu0
        %v3117 = vadd.f32 %v2844, %v3116
        %v3118 = vpop.f32.mrb[0].mxu0
        %v3119 = vadd.f32 %v2846, %v3118
        %3120 = vmatprep.mubr.bf16.mxu0 0
        %3121 = vmatmul.mubr.bf16.gmra.mrb[0].mxu0 %v1019
        %v3122 = vpop.f32.mrb[0].mxu0
        %v3123 = vadd.f32 %v2850, %v3122
        %v3124 = vpop.f32.mrb[0].mxu0
        %v3125 = vadd.f32 %v2852, %v3124
        %v3126 = vpop.f32.mrb[0].mxu0
        %v3127 = vadd.f32 %v2854, %v3126
        %v3128 = vpop.f32.mrb[0].mxu0
        %v3129 = vadd.f32 %v2856, %v3128
        %3130 = vmatprep.mubr.bf16.mxu0 0
        %3131 = vmatmul.mubr.bf16.gmra.mrb[0].mxu0 %v1020
        %v3132 = vpop.f32.mrb[0].mxu0
        %v3133 = vadd.f32 %v2860, %v3132
        %v3134 = vpop.f32.mrb[0].mxu0
        %v3135 = vadd.f32 %v2862, %v3134
        %v3136 = vpop.f32.mrb[0].mxu0
        %v3137 = vadd.f32 %v2864, %v3136
        %v3138 = vpop.f32.mrb[0].mxu0
        %v3139 = vadd.f32 %v2866, %v3138
        %3140 = vmatprep.mubr.bf16.mxu0 0
        %3141 = vmatmul.mubr.bf16.gmra.mrb[0].mxu0 %v1021
        %v3142 = vpop.f32.mrb[0].mxu0
        %v3143 = vadd.f32 %v2870, %v3142
        %v3144 = vpop.f32.mrb[0].mxu0
        %v3145 = vadd.f32 %v2872, %v3144
        %v3146 = vpop.f32.mrb[0].mxu0
        %v3147 = vadd.f32 %v2874, %v3146
        %v3148 = vpop.f32.mrb[0].mxu0
        %v3149 = vadd.f32 %v2876, %v3148
        %3150 = vmatprep.mubr.bf16.mxu0 0
        %3151 = vmatmul.mubr.bf16.gmra.mrb[0].mxu0 %v1022
        %v3152 = vpop.f32.mrb[0].mxu0
        %v3153 = vadd.f32 %v2880, %v3152
        %v3154 = vpop.f32.mrb[0].mxu0
        %v3155 = vadd.f32 %v2882, %v3154
        %v3156 = vpop.f32.mrb[0].mxu0
        %v3157 = vadd.f32 %v2884, %v3156
        %v3158 = vpop.f32.mrb[0].mxu0
        %v3159 = vadd.f32 %v2886, %v3158
        %3160 = vmatprep.mubr.bf16.mxu0 0
        %3161 = vmatmul.mubr.bf16.gmra.mrb[0].mxu0 %v1023
        %v3162 = vpop.f32.mrb[0].mxu0
        %v3163 = vadd.f32 %v2890, %v3162
        %v3164 = vpop.f32.mrb[0].mxu0
        %v3165 = vadd.f32 %v2892, %v3164
        %v3166 = vpop.f32.mrb[0].mxu0
        %v3167 = vadd.f32 %v2894, %v3166
        %v3168 = vpop.f32.mrb[0].mxu0
        %v3169 = vadd.f32 %v2896, %v3168
        %3170 = vmatprep.mubr.bf16.mxu0 0
        %3171 = vmatmul.mubr.bf16.gmra.mrb[0].mxu0 %v1024
        %v3172 = vpop.f32.mrb[0].mxu0
        %v3173 = vadd.f32 %v2900, %v3172
        %v3174 = vpop.f32.mrb[0].mxu0
        %v3175 = vadd.f32 %v2902, %v3174
        %v3176 = vpop.f32.mrb[0].mxu0
        %v3177 = vadd.f32 %v2904, %v3176
        %v3178 = vpop.f32.mrb[0].mxu0
        %v3179 = vadd.f32 %v2906, %v3178
        %3180 = vmatprep.mubr.bf16.mxu0 0
        %3181 = vmatmul.mubr.bf16.gmra.mrb[0].mxu0 %v1025
        %v3182 = vpop.f32.mrb[0].mxu0
        %v3183 = vadd.f32 %v2910, %v3182
        %v3184 = vpop.f32.mrb[0].mxu0
        %v3185 = vadd.f32 %v2912, %v3184
        %v3186 = vpop.f32.mrb[0].mxu0
        %v3187 = vadd.f32 %v2914, %v3186
        %v3188 = vpop.f32.mrb[0].mxu0
        %v3189 = vadd.f32 %v2916, %v3188
        %3190 = vmatprep.mubr.bf16.mxu0 0
        %3191 = vmatmul.mubr.bf16.gmra.mrb[0].mxu0 %v1026
        %v3192 = vpop.f32.mrb[0].mxu0
        %v3193 = vadd.f32 %v2920, %v3192
        %v3194 = vpop.f32.mrb[0].mxu0
        %v3195 = vadd.f32 %v2922, %v3194
        %v3196 = vpop.f32.mrb[0].mxu0
        %v3197 = vadd.f32 %v2924, %v3196
        %v3198 = vpop.f32.mrb[0].mxu0
        %v3199 = vadd.f32 %v2926, %v3198
        %3200 = vmatprep.mubr.bf16.mxu0 0
        %3201 = vmatmul.mubr.bf16.gmra.mrb[0].mxu0 %v1027
        %v3202 = vpop.f32.mrb[0].mxu0
        %v3203 = vadd.f32 %v2930, %v3202
        %v3204 = vpop.f32.mrb[0].mxu0
        %v3205 = vadd.f32 %v2932, %v3204
        %v3206 = vpop.f32.mrb[0].mxu0
        %v3207 = vadd.f32 %v2934, %v3206
        %v3208 = vpop.f32.mrb[0].mxu0
        %v3209 = vadd.f32 %v2936, %v3208
        %3210 = vmatprep.mubr.bf16.mxu0 0
        %3211 = vmatmul.mubr.bf16.gmra.mrb[0].mxu0 %v1028
        %v3212 = vpop.f32.mrb[0].mxu0
        %v3213 = vadd.f32 %v2940, %v3212
        %v3214 = vpop.f32.mrb[0].mxu0
        %v3215 = vadd.f32 %v2942, %v3214
        %v3216 = vpop.f32.mrb[0].mxu0
        %v3217 = vadd.f32 %v2944, %v3216
        %v3218 = vpop.f32.mrb[0].mxu0
        %v3219 = vadd.f32 %v2946, %v3218
        %3220 = vmatprep.mubr.bf16.mxu0 0
        %3221 = vmatmul.mubr.bf16.gmra.mrb[0].mxu0 %v1029
        %v3222 = vpop.f32.mrb[0].mxu0
        %v3223 = vadd.f32 %v2950, %v3222
        %v3224 = vpop.f32.mrb[0].mxu0
        %v3225 = vadd.f32 %v2952, %v3224
        %v3226 = vpop.f32.mrb[0].mxu0
        %v3227 = vadd.f32 %v2954, %v3226
        %v3228 = vpop.f32.mrb[0].mxu0
        %v3229 = vadd.f32 %v2956, %v3228
        %3230 = vmatprep.mubr.bf16.mxu0 0
        %3231 = vmatmul.mubr.bf16.gmra.mrb[0].mxu0 %v1030
        %v3232 = vpop.f32.mrb[0].mxu0
        %v3233 = vadd.f32 %v2960, %v3232
        %v3234 = vpop.f32.mrb[0].mxu0
        %v3235 = vadd.f32 %v2962, %v3234
        %v3236 = vpop.f32.mrb[0].mxu0
        %v3237 = vadd.f32 %v2964, %v3236
        %v3238 = vpop.f32.mrb[0].mxu0
        %v3239 = vadd.f32 %v2966, %v3238
        %3240 = vmatprep.mubr.bf16.mxu0 0
        %3241 = vmatmul.mubr.bf16.gmra.mrb[0].mxu0 %v1031
        %v3242 = vpop.f32.mrb[0].mxu0
        %v3243 = vadd.f32 %v2970, %v3242
        %v3244 = vpop.f32.mrb[0].mxu0
        %v3245 = vadd.f32 %v2972, %v3244
        %v3246 = vpop.f32.mrb[0].mxu0
        %v3247 = vadd.f32 %v2974, %v3246
        %v3248 = vpop.f32.mrb[0].mxu0
        %v3249 = vadd.f32 %v2976, %v3248
        %3250 = vmatprep.mubr.bf16.mxu0 0
        %3251 = vmatmul.mubr.bf16.gmra.mrb[0].mxu0 %v1032
        %v3252 = vpop.f32.mrb[0].mxu0
        %v3253 = vadd.f32 %v2980, %v3252
        %v3254 = vpop.f32.mrb[0].mxu0
        %v3255 = vadd.f32 %v2982, %v3254
        %v3256 = vpop.f32.mrb[0].mxu0
        %v3257 = vadd.f32 %v2984, %v3256
        %v3258 = vpop.f32.mrb[0].mxu0
        %v3259 = vadd.f32 %v2986, %v3258
        %3260 = vmatprep.mubr.bf16.mxu0 0
        %3261 = vmatmul.mubr.bf16.gmra.mrb[0].mxu0 %v1033
        %v3262 = vpop.f32.mrb[0].mxu0
        %v3263 = vadd.f32 %v2990, %v3262
        %v3264 = vpop.f32.mrb[0].mxu0
        %v3265 = vadd.f32 %v2992, %v3264
        %v3266 = vpop.f32.mrb[0].mxu0
        %v3267 = vadd.f32 %v2994, %v3266
        %v3268 = vpop.f32.mrb[0].mxu0
        %v3269 = vadd.f32 %v2996, %v3268
        %3270 = vdwg.mxu0
        %v3271 = vld [vmem:[#allocation10 + $0x4] sm:$0x3]
        %v3273 = vlaneseq
        %v3274 = vshrl.u32 %v3273, 7
        %v3275 = vsub.s32 0, %v3274
        %v3276 = vrot.slane %v3271, %v3275
        %v3277 = vlaneseq
        %v3278 = vshrl.u32 %v3277, 7
        %v3279 = vsub.s32 1, %v3278
        %v3280 = vrot.slane %v3271, %v3279
        %v3283 = vadd.f32 %v3113, %v3276
        %v3284 = vadd.f32 %v3115, %v3280
        %v3285 = vadd.f32 %v3117, %v3276
        %v3286 = vadd.f32 %v3119, %v3280
        %v3287 = vadd.f32 %v3123, %v3276
        %v3288 = vadd.f32 %v3125, %v3280
        %v3289 = vadd.f32 %v3127, %v3276
        %v3290 = vadd.f32 %v3129, %v3280
        %v3291 = vadd.f32 %v3133, %v3276
        %v3292 = vadd.f32 %v3135, %v3280
        %v3293 = vadd.f32 %v3137, %v3276
        %v3294 = vadd.f32 %v3139, %v3280
        %v3295 = vadd.f32 %v3143, %v3276
        %v3296 = vadd.f32 %v3145, %v3280
        %v3297 = vadd.f32 %v3147, %v3276
        %v3298 = vadd.f32 %v3149, %v3280
        %v3299 = vadd.f32 %v3153, %v3276
        %v3300 = vadd.f32 %v3155, %v3280
        %v3301 = vadd.f32 %v3157, %v3276
        %v3302 = vadd.f32 %v3159, %v3280
        %v3303 = vadd.f32 %v3163, %v3276
        %v3304 = vadd.f32 %v3165, %v3280
        %v3305 = vadd.f32 %v3167, %v3276
        %v3306 = vadd.f32 %v3169, %v3280
        %v3307 = vadd.f32 %v3173, %v3276
        %v3308 = vadd.f32 %v3175, %v3280
        %v3309 = vadd.f32 %v3177, %v3276
        %v3310 = vadd.f32 %v3179, %v3280
        %v3311 = vadd.f32 %v3183, %v3276
        %v3312 = vadd.f32 %v3185, %v3280
        %v3313 = vadd.f32 %v3187, %v3276
        %v3314 = vadd.f32 %v3189, %v3280
        %v3315 = vadd.f32 %v3193, %v3276
        %v3316 = vadd.f32 %v3195, %v3280
        %v3317 = vadd.f32 %v3197, %v3276
        %v3318 = vadd.f32 %v3199, %v3280
        %v3319 = vadd.f32 %v3203, %v3276
        %v3320 = vadd.f32 %v3205, %v3280
        %v3321 = vadd.f32 %v3207, %v3276
        %v3322 = vadd.f32 %v3209, %v3280
        %v3323 = vadd.f32 %v3213, %v3276
        %v3324 = vadd.f32 %v3215, %v3280
        %v3325 = vadd.f32 %v3217, %v3276
        %v3326 = vadd.f32 %v3219, %v3280
        %v3327 = vadd.f32 %v3223, %v3276
        %v3328 = vadd.f32 %v3225, %v3280
        %v3329 = vadd.f32 %v3227, %v3276
        %v3330 = vadd.f32 %v3229, %v3280
        %v3331 = vadd.f32 %v3233, %v3276
        %v3332 = vadd.f32 %v3235, %v3280
        %v3333 = vadd.f32 %v3237, %v3276
        %v3334 = vadd.f32 %v3239, %v3280
        %v3335 = vadd.f32 %v3243, %v3276
        %v3336 = vadd.f32 %v3245, %v3280
        %v3337 = vadd.f32 %v3247, %v3276
        %v3338 = vadd.f32 %v3249, %v3280
        %v3339 = vadd.f32 %v3253, %v3276
        %v3340 = vadd.f32 %v3255, %v3280
        %v3341 = vadd.f32 %v3257, %v3276
        %v3342 = vadd.f32 %v3259, %v3280
        %v3343 = vadd.f32 %v3263, %v3276
        %v3344 = vadd.f32 %v3265, %v3280
        %v3345 = vadd.f32 %v3267, %v3276
        %v3346 = vadd.f32 %v3269, %v3280
        %v3347 = vpack.c.bf16 %v3285, %v3283
        %v3348 = vpack.c.bf16 %v3286, %v3284
        %v3349 = vpack.c.bf16 %v3289, %v3287
        %v3350 = vpack.c.bf16 %v3290, %v3288
        %v3351 = vpack.c.bf16 %v3293, %v3291
        %v3352 = vpack.c.bf16 %v3294, %v3292
        %v3353 = vpack.c.bf16 %v3297, %v3295
        %v3354 = vpack.c.bf16 %v3298, %v3296
        %v3355 = vpack.c.bf16 %v3301, %v3299
        %v3356 = vpack.c.bf16 %v3302, %v3300
        %v3357 = vpack.c.bf16 %v3305, %v3303
        %v3358 = vpack.c.bf16 %v3306, %v3304
        %v3359 = vpack.c.bf16 %v3309, %v3307
        %v3360 = vpack.c.bf16 %v3310, %v3308
        %v3361 = vpack.c.bf16 %v3313, %v3311
        %v3362 = vpack.c.bf16 %v3314, %v3312
        %v3363 = vpack.c.bf16 %v3317, %v3315
        %v3364 = vpack.c.bf16 %v3318, %v3316
        %v3365 = vpack.c.bf16 %v3321, %v3319
        %v3366 = vpack.c.bf16 %v3322, %v3320
        %v3367 = vpack.c.bf16 %v3325, %v3323
        %v3368 = vpack.c.bf16 %v3326, %v3324
        %v3369 = vpack.c.bf16 %v3329, %v3327
        %v3370 = vpack.c.bf16 %v3330, %v3328
        %v3371 = vpack.c.bf16 %v3333, %v3331
        %v3372 = vpack.c.bf16 %v3334, %v3332
        %v3373 = vpack.c.bf16 %v3337, %v3335
        %v3374 = vpack.c.bf16 %v3338, %v3336
        %v3375 = vpack.c.bf16 %v3341, %v3339
        %v3376 = vpack.c.bf16 %v3342, %v3340
        %v3377 = vpack.c.bf16 %v3345, %v3343
        %v3378 = vpack.c.bf16 %v3346, %v3344
        %v3411 = vunpack.c.l.b16 %v3347
        %v3412 = vunpack.c.l.b16 %v3348
        %v3413 = vunpack.c.h.b16 %v3347
        %v3414 = vunpack.c.h.b16 %v3348
        %v3415 = vunpack.c.l.b16 %v3349
        %v3416 = vunpack.c.l.b16 %v3350
        %v3417 = vunpack.c.h.b16 %v3349
        %v3418 = vunpack.c.h.b16 %v3350
        %v3419 = vunpack.c.l.b16 %v3351
        %v3420 = vunpack.c.l.b16 %v3352
        %v3421 = vunpack.c.h.b16 %v3351
        %v3422 = vunpack.c.h.b16 %v3352
        %v3423 = vunpack.c.l.b16 %v3353
        %v3424 = vunpack.c.l.b16 %v3354
        %v3425 = vunpack.c.h.b16 %v3353
        %v3426 = vunpack.c.h.b16 %v3354
        %v3427 = vunpack.c.l.b16 %v3355
        %v3428 = vunpack.c.l.b16 %v3356
        %v3429 = vunpack.c.h.b16 %v3355
        %v3430 = vunpack.c.h.b16 %v3356
        %v3431 = vunpack.c.l.b16 %v3357
        %v3432 = vunpack.c.l.b16 %v3358
        %v3433 = vunpack.c.h.b16 %v3357
        %v3434 = vunpack.c.h.b16 %v3358
        %v3435 = vunpack.c.l.b16 %v3359
        %v3436 = vunpack.c.l.b16 %v3360
        %v3437 = vunpack.c.h.b16 %v3359
        %v3438 = vunpack.c.h.b16 %v3360
        %v3439 = vunpack.c.l.b16 %v3361
        %v3440 = vunpack.c.l.b16 %v3362
        %v3441 = vunpack.c.h.b16 %v3361
        %v3442 = vunpack.c.h.b16 %v3362
        %v3443 = vunpack.c.l.b16 %v3363
        %v3444 = vunpack.c.l.b16 %v3364
        %v3445 = vunpack.c.h.b16 %v3363
        %v3446 = vunpack.c.h.b16 %v3364
        %v3447 = vunpack.c.l.b16 %v3365
        %v3448 = vunpack.c.l.b16 %v3366
        %v3449 = vunpack.c.h.b16 %v3365
        %v3450 = vunpack.c.h.b16 %v3366
        %v3451 = vunpack.c.l.b16 %v3367
        %v3452 = vunpack.c.l.b16 %v3368
        %v3453 = vunpack.c.h.b16 %v3367
        %v3454 = vunpack.c.h.b16 %v3368
        %v3455 = vunpack.c.l.b16 %v3369
        %v3456 = vunpack.c.l.b16 %v3370
        %v3457 = vunpack.c.h.b16 %v3369
        %v3458 = vunpack.c.h.b16 %v3370
        %v3459 = vunpack.c.l.b16 %v3371
        %v3460 = vunpack.c.l.b16 %v3372
        %v3461 = vunpack.c.h.b16 %v3371
        %v3462 = vunpack.c.h.b16 %v3372
        %v3463 = vunpack.c.l.b16 %v3373
        %v3464 = vunpack.c.l.b16 %v3374
        %v3465 = vunpack.c.h.b16 %v3373
        %v3466 = vunpack.c.h.b16 %v3374
        %v3467 = vunpack.c.l.b16 %v3375
        %v3468 = vunpack.c.l.b16 %v3376
        %v3469 = vunpack.c.h.b16 %v3375
        %v3470 = vunpack.c.h.b16 %v3376
        %v3471 = vunpack.c.l.b16 %v3377
        %v3472 = vunpack.c.l.b16 %v3378
        %v3473 = vunpack.c.h.b16 %v3377
        %v3474 = vunpack.c.h.b16 %v3378
        %v3475 = vpack.c.b16 %v3412, %v3411
        %v3476 = vpack.c.b16 %v3414, %v3413
        %v3477 = vpack.c.b16 %v3416, %v3415
        %v3478 = vpack.c.b16 %v3418, %v3417
        %v3479 = vpack.c.b16 %v3420, %v3419
        %v3480 = vpack.c.b16 %v3422, %v3421
        %v3481 = vpack.c.b16 %v3424, %v3423
        %v3482 = vpack.c.b16 %v3426, %v3425
        %v3483 = vpack.c.b16 %v3428, %v3427
        %v3484 = vpack.c.b16 %v3430, %v3429
        %v3485 = vpack.c.b16 %v3432, %v3431
        %v3486 = vpack.c.b16 %v3434, %v3433
        %v3487 = vpack.c.b16 %v3436, %v3435
        %v3488 = vpack.c.b16 %v3438, %v3437
        %v3489 = vpack.c.b16 %v3440, %v3439
        %v3490 = vpack.c.b16 %v3442, %v3441
        %v3491 = vpack.c.b16 %v3444, %v3443
        %v3492 = vpack.c.b16 %v3446, %v3445
        %v3493 = vpack.c.b16 %v3448, %v3447
        %v3494 = vpack.c.b16 %v3450, %v3449
        %v3495 = vpack.c.b16 %v3452, %v3451
        %v3496 = vpack.c.b16 %v3454, %v3453
        %v3497 = vpack.c.b16 %v3456, %v3455
        %v3498 = vpack.c.b16 %v3458, %v3457
        %v3499 = vpack.c.b16 %v3460, %v3459
        %v3500 = vpack.c.b16 %v3462, %v3461
        %v3501 = vpack.c.b16 %v3464, %v3463
        %v3502 = vpack.c.b16 %v3466, %v3465
        %v3503 = vpack.c.b16 %v3468, %v3467
        %v3504 = vpack.c.b16 %v3470, %v3469
        %v3505 = vpack.c.b16 %v3472, %v3471
        %v3506 = vpack.c.b16 %v3474, %v3473
        %3539 = vst [vmem:[%s324 + $0x10] sm:$0xff] %v3475
        %3540 = vst [vmem:[%s324 + $0x30] sm:$0xff] %v3476
        %3541 = vst [vmem:[%s324 + $0x50] sm:$0xff] %v3477
        %3542 = vst [vmem:[%s324 + $0x70] sm:$0xff] %v3478
        %3543 = vst [vmem:[%s324 + $0x90] sm:$0xff] %v3479
        %3544 = vst [vmem:[%s324 + $0xb0] sm:$0xff] %v3480
        %3545 = vst [vmem:[%s324 + $0xd0] sm:$0xff] %v3481
        %3546 = vst [vmem:[%s324 + $0xf0] sm:$0xff] %v3482
        %3547 = vst [vmem:[%s324 + $0x110] sm:$0xff] %v3483
        %3548 = vst [vmem:[%s324 + $0x130] sm:$0xff] %v3484
        %3549 = vst [vmem:[%s324 + $0x150] sm:$0xff] %v3485
        %3550 = vst [vmem:[%s324 + $0x170] sm:$0xff] %v3486
        %3551 = vst [vmem:[%s324 + $0x190] sm:$0xff] %v3487
        %3552 = vst [vmem:[%s324 + $0x1b0] sm:$0xff] %v3488
        %3553 = vst [vmem:[%s324 + $0x1d0] sm:$0xff] %v3489
        %3554 = vst [vmem:[%s324 + $0x1f0] sm:$0xff] %v3490
        %3555 = vst [vmem:[%s324 + $0x210] sm:$0xff] %v3491
        %3556 = vst [vmem:[%s324 + $0x230] sm:$0xff] %v3492
        %3557 = vst [vmem:[%s324 + $0x250] sm:$0xff] %v3493
        %3558 = vst [vmem:[%s324 + $0x270] sm:$0xff] %v3494
        %3559 = vst [vmem:[%s324 + $0x290] sm:$0xff] %v3495
        %3560 = vst [vmem:[%s324 + $0x2b0] sm:$0xff] %v3496
        %3561 = vst [vmem:[%s324 + $0x2d0] sm:$0xff] %v3497
        %3562 = vst [vmem:[%s324 + $0x2f0] sm:$0xff] %v3498
        %3563 = vst [vmem:[%s324 + $0x310] sm:$0xff] %v3499
        %3564 = vst [vmem:[%s324 + $0x330] sm:$0xff] %v3500
        %3565 = vst [vmem:[%s324 + $0x350] sm:$0xff] %v3501
        %3566 = vst [vmem:[%s324 + $0x370] sm:$0xff] %v3502
        %3567 = vst [vmem:[%s324 + $0x390] sm:$0xff] %v3503
        %3568 = vst [vmem:[%s324 + $0x3b0] sm:$0xff] %v3504
        %3569 = vst [vmem:[%s324 + $0x3d0] sm:$0xff] %v3505
        %3570 = vst [vmem:[%s324 + $0x3f0] sm:$0xff] %v3506
        %v3571 = vld [vmem:[#allocation7 + $0x18] sm:$0xff]
        %v3572 = vld [vmem:[#allocation7 + $0x38] sm:$0xff]
        %v3573 = vld [vmem:[#allocation7 + $0x58] sm:$0xff]
        %v3574 = vld [vmem:[#allocation7 + $0x78] sm:$0xff]
        %v3575 = vld [vmem:[#allocation7 + $0x98] sm:$0xff]
        %v3576 = vld [vmem:[#allocation7 + $0xb8] sm:$0xff]
        %v3577 = vld [vmem:[#allocation7 + $0xd8] sm:$0xff]
        %v3578 = vld [vmem:[#allocation7 + $0xf8] sm:$0xff]
        %v3579 = vld [vmem:[#allocation7 + $0x118] sm:$0xff]
        %v3580 = vld [vmem:[#allocation7 + $0x138] sm:$0xff]
        %v3581 = vld [vmem:[#allocation7 + $0x158] sm:$0xff]
        %v3582 = vld [vmem:[#allocation7 + $0x178] sm:$0xff]
        %v3583 = vld [vmem:[#allocation7 + $0x198] sm:$0xff]
        %v3584 = vld [vmem:[#allocation7 + $0x1b8] sm:$0xff]
        %v3585 = vld [vmem:[#allocation7 + $0x1d8] sm:$0xff]
        %v3586 = vld [vmem:[#allocation7 + $0x1f8] sm:$0xff]
        %v3587 = vld [vmem:[%s281 + $0x18] sm:$0xff]
        %v3588 = vld [vmem:[%s281 + $0x38] sm:$0xff]
        %v3589 = vld [vmem:[%s281 + $0x58] sm:$0xff]
        %v3590 = vld [vmem:[%s281 + $0x78] sm:$0xff]
        %v3591 = vld [vmem:[%s281 + $0x98] sm:$0xff]
        %v3592 = vld [vmem:[%s281 + $0xb8] sm:$0xff]
        %v3593 = vld [vmem:[%s281 + $0xd8] sm:$0xff]
        %v3594 = vld [vmem:[%s281 + $0xf8] sm:$0xff]
        %v3595 = vld [vmem:[%s281 + $0x118] sm:$0xff]
        %v3596 = vld [vmem:[%s281 + $0x138] sm:$0xff]
        %v3597 = vld [vmem:[%s281 + $0x158] sm:$0xff]
        %v3598 = vld [vmem:[%s281 + $0x178] sm:$0xff]
        %v3599 = vld [vmem:[%s281 + $0x198] sm:$0xff]
        %v3600 = vld [vmem:[%s281 + $0x1b8] sm:$0xff]
        %v3601 = vld [vmem:[%s281 + $0x1d8] sm:$0xff]
        %v3602 = vld [vmem:[%s281 + $0x1f8] sm:$0xff]
        %v3603 = vld [vmem:[%s281 + $0x218] sm:$0xff]
        %v3604 = vld [vmem:[%s281 + $0x238] sm:$0xff]
        %v3605 = vld [vmem:[%s281 + $0x258] sm:$0xff]
        %v3606 = vld [vmem:[%s281 + $0x278] sm:$0xff]
        %v3607 = vld [vmem:[%s281 + $0x298] sm:$0xff]
        %v3608 = vld [vmem:[%s281 + $0x2b8] sm:$0xff]
        %v3609 = vld [vmem:[%s281 + $0x2d8] sm:$0xff]
        %v3610 = vld [vmem:[%s281 + $0x2f8] sm:$0xff]
        %v3611 = vld [vmem:[%s281 + $0x318] sm:$0xff]
        %v3612 = vld [vmem:[%s281 + $0x338] sm:$0xff]
        %v3613 = vld [vmem:[%s281 + $0x358] sm:$0xff]
        %v3614 = vld [vmem:[%s281 + $0x378] sm:$0xff]
        %v3615 = vld [vmem:[%s281 + $0x398] sm:$0xff]
        %v3616 = vld [vmem:[%s281 + $0x3b8] sm:$0xff]
        %v3617 = vld [vmem:[%s281 + $0x3d8] sm:$0xff]
        %v3618 = vld [vmem:[%s281 + $0x3f8] sm:$0xff]
        %v3651 = vunpack.c.l.b16 %v3587
        %v3652 = vunpack.c.h.b16 %v3587
        %v3653 = vunpack.c.l.b16 %v3588
        %v3654 = vunpack.c.h.b16 %v3588
        %v3655 = vunpack.c.l.b16 %v3589
        %v3656 = vunpack.c.h.b16 %v3589
        %v3657 = vunpack.c.l.b16 %v3590
        %v3658 = vunpack.c.h.b16 %v3590
        %v3659 = vunpack.c.l.b16 %v3591
        %v3660 = vunpack.c.h.b16 %v3591
        %v3661 = vunpack.c.l.b16 %v3592
        %v3662 = vunpack.c.h.b16 %v3592
        %v3663 = vunpack.c.l.b16 %v3593
        %v3664 = vunpack.c.h.b16 %v3593
        %v3665 = vunpack.c.l.b16 %v3594
        %v3666 = vunpack.c.h.b16 %v3594
        %v3667 = vunpack.c.l.b16 %v3595
        %v3668 = vunpack.c.h.b16 %v3595
        %v3669 = vunpack.c.l.b16 %v3596
        %v3670 = vunpack.c.h.b16 %v3596
        %v3671 = vunpack.c.l.b16 %v3597
        %v3672 = vunpack.c.h.b16 %v3597
        %v3673 = vunpack.c.l.b16 %v3598
        %v3674 = vunpack.c.h.b16 %v3598
        %v3675 = vunpack.c.l.b16 %v3599
        %v3676 = vunpack.c.h.b16 %v3599
        %v3677 = vunpack.c.l.b16 %v3600
        %v3678 = vunpack.c.h.b16 %v3600
        %v3679 = vunpack.c.l.b16 %v3601
        %v3680 = vunpack.c.h.b16 %v3601
        %v3681 = vunpack.c.l.b16 %v3602
        %v3682 = vunpack.c.h.b16 %v3602
        %v3683 = vunpack.c.l.b16 %v3603
        %v3684 = vunpack.c.h.b16 %v3603
        %v3685 = vunpack.c.l.b16 %v3604
        %v3686 = vunpack.c.h.b16 %v3604
        %v3687 = vunpack.c.l.b16 %v3605
        %v3688 = vunpack.c.h.b16 %v3605
        %v3689 = vunpack.c.l.b16 %v3606
        %v3690 = vunpack.c.h.b16 %v3606
        %v3691 = vunpack.c.l.b16 %v3607
        %v3692 = vunpack.c.h.b16 %v3607
        %v3693 = vunpack.c.l.b16 %v3608
        %v3694 = vunpack.c.h.b16 %v3608
        %v3695 = vunpack.c.l.b16 %v3609
        %v3696 = vunpack.c.h.b16 %v3609
        %v3697 = vunpack.c.l.b16 %v3610
        %v3698 = vunpack.c.h.b16 %v3610
        %v3699 = vunpack.c.l.b16 %v3611
        %v3700 = vunpack.c.h.b16 %v3611
        %v3701 = vunpack.c.l.b16 %v3612
        %v3702 = vunpack.c.h.b16 %v3612
        %v3703 = vunpack.c.l.b16 %v3613
        %v3704 = vunpack.c.h.b16 %v3613
        %v3705 = vunpack.c.l.b16 %v3614
        %v3706 = vunpack.c.h.b16 %v3614
        %v3707 = vunpack.c.l.b16 %v3615
        %v3708 = vunpack.c.h.b16 %v3615
        %v3709 = vunpack.c.l.b16 %v3616
        %v3710 = vunpack.c.h.b16 %v3616
        %v3711 = vunpack.c.l.b16 %v3617
        %v3712 = vunpack.c.h.b16 %v3617
        %v3713 = vunpack.c.l.b16 %v3618
        %v3714 = vunpack.c.h.b16 %v3618
        %v3715 = vpack.c.b16 %v3653, %v3651
        %v3716 = vpack.c.b16 %v3654, %v3652
        %v3717 = vpack.c.b16 %v3657, %v3655
        %v3718 = vpack.c.b16 %v3658, %v3656
        %v3719 = vpack.c.b16 %v3661, %v3659
        %v3720 = vpack.c.b16 %v3662, %v3660
        %v3721 = vpack.c.b16 %v3665, %v3663
        %v3722 = vpack.c.b16 %v3666, %v3664
        %v3723 = vpack.c.b16 %v3669, %v3667
        %v3724 = vpack.c.b16 %v3670, %v3668
        %v3725 = vpack.c.b16 %v3673, %v3671
        %v3726 = vpack.c.b16 %v3674, %v3672
        %v3727 = vpack.c.b16 %v3677, %v3675
        %v3728 = vpack.c.b16 %v3678, %v3676
        %v3729 = vpack.c.b16 %v3681, %v3679
        %v3730 = vpack.c.b16 %v3682, %v3680
        %v3731 = vpack.c.b16 %v3685, %v3683
        %v3732 = vpack.c.b16 %v3686, %v3684
        %v3733 = vpack.c.b16 %v3689, %v3687
        %v3734 = vpack.c.b16 %v3690, %v3688
        %v3735 = vpack.c.b16 %v3693, %v3691
        %v3736 = vpack.c.b16 %v3694, %v3692
        %v3737 = vpack.c.b16 %v3697, %v3695
        %v3738 = vpack.c.b16 %v3698, %v3696
        %v3739 = vpack.c.b16 %v3701, %v3699
        %v3740 = vpack.c.b16 %v3702, %v3700
        %v3741 = vpack.c.b16 %v3705, %v3703
        %v3742 = vpack.c.b16 %v3706, %v3704
        %v3743 = vpack.c.b16 %v3709, %v3707
        %v3744 = vpack.c.b16 %v3710, %v3708
        %v3745 = vpack.c.b16 %v3713, %v3711
        %v3746 = vpack.c.b16 %v3714, %v3712
        %3779 = vmatprep.subr.bf16.mxu0 %v698
        %3780 = vmatpush1.bf16.msra.mxu0 %v697
        %3781 = vmatprep.subr.bf16.mxu0 %v700
        %3782 = vmatpush1.bf16.msra.mxu0 %v699
        %3783 = vmatprep.subr.bf16.mxu0 %v702
        %3784 = vmatpush1.bf16.msra.mxu0 %v701
        %3785 = vmatprep.subr.bf16.mxu0 %v704
        %3786 = vmatpush1.bf16.msra.mxu0 %v703
        %3787 = vmatprep.subr.bf16.mxu0 %v706
        %3788 = vmatpush1.bf16.msra.mxu0 %v705
        %3789 = vmatprep.subr.bf16.mxu0 %v708
        %3790 = vmatpush1.bf16.msra.mxu0 %v707
        %3791 = vmatprep.subr.bf16.mxu0 %v710
        %3792 = vmatpush1.bf16.msra.mxu0 %v709
        %3793 = vmatprep.subr.bf16.mxu0 %v712
        %3794 = vmatpush1.bf16.msra.mxu0 %v711
        %3795 = vmatprep.subr.bf16.mxu0 %v714
        %3796 = vmatpush1.bf16.msra.mxu0 %v713
        %3797 = vmatprep.subr.bf16.mxu0 %v716
        %3798 = vmatpush1.bf16.msra.mxu0 %v715
        %3799 = vmatprep.subr.bf16.mxu0 %v718
        %3800 = vmatpush1.bf16.msra.mxu0 %v717
        %3801 = vmatprep.subr.bf16.mxu0 %v720
        %3802 = vmatpush1.bf16.msra.mxu0 %v719
        %3803 = vmatprep.subr.bf16.mxu0 %v722
        %3804 = vmatpush1.bf16.msra.mxu0 %v721
        %3805 = vmatprep.subr.bf16.mxu0 %v724
        %3806 = vmatpush1.bf16.msra.mxu0 %v723
        %3807 = vmatprep.subr.bf16.mxu0 %v726
        %3808 = vmatpush1.bf16.msra.mxu0 %v725
        %3809 = vmatprep.subr.bf16.mxu0 %v728
        %3810 = vmatpush1.bf16.msra.mxu0 %v727
        %3811 = vmatprep.mubr.bf16.mxu0 %v3716
        %3812 = vmatmul.mubr.bf16.gmra.mrb[0].mxu0 %v3715
        %v3813 = vpop.f32.mrb[0].mxu0
        %v3814 = vadd.f32 0.0, %v3813
        %v3815 = vpop.f32.mrb[0].mxu0
        %v3816 = vadd.f32 0.0, %v3815
        %v3817 = vpop.f32.mrb[0].mxu0
        %v3818 = vadd.f32 0.0, %v3817
        %v3819 = vpop.f32.mrb[0].mxu0
        %v3820 = vadd.f32 0.0, %v3819
        %3821 = vmatprep.mubr.bf16.mxu0 %v3718
        %3822 = vmatmul.mubr.bf16.gmra.mrb[0].mxu0 %v3717
        %v3823 = vpop.f32.mrb[0].mxu0
        %v3824 = vadd.f32 0.0, %v3823
        %v3825 = vpop.f32.mrb[0].mxu0
        %v3826 = vadd.f32 0.0, %v3825
        %v3827 = vpop.f32.mrb[0].mxu0
        %v3828 = vadd.f32 0.0, %v3827
        %v3829 = vpop.f32.mrb[0].mxu0
        %v3830 = vadd.f32 0.0, %v3829
        %3831 = vmatprep.mubr.bf16.mxu0 %v3720
        %3832 = vmatmul.mubr.bf16.gmra.mrb[0].mxu0 %v3719
        %v3833 = vpop.f32.mrb[0].mxu0
        %v3834 = vadd.f32 0.0, %v3833
        %v3835 = vpop.f32.mrb[0].mxu0
        %v3836 = vadd.f32 0.0, %v3835
        %v3837 = vpop.f32.mrb[0].mxu0
        %v3838 = vadd.f32 0.0, %v3837
        %v3839 = vpop.f32.mrb[0].mxu0
        %v3840 = vadd.f32 0.0, %v3839
        %3841 = vmatprep.mubr.bf16.mxu0 %v3722
        %3842 = vmatmul.mubr.bf16.gmra.mrb[0].mxu0 %v3721
        %v3843 = vpop.f32.mrb[0].mxu0
        %v3844 = vadd.f32 0.0, %v3843
        %v3845 = vpop.f32.mrb[0].mxu0
        %v3846 = vadd.f32 0.0, %v3845
        %v3847 = vpop.f32.mrb[0].mxu0
        %v3848 = vadd.f32 0.0, %v3847
        %v3849 = vpop.f32.mrb[0].mxu0
        %v3850 = vadd.f32 0.0, %v3849
        %3851 = vmatprep.mubr.bf16.mxu0 %v3724
        %3852 = vmatmul.mubr.bf16.gmra.mrb[0].mxu0 %v3723
        %v3853 = vpop.f32.mrb[0].mxu0
        %v3854 = vadd.f32 0.0, %v3853
        %v3855 = vpop.f32.mrb[0].mxu0
        %v3856 = vadd.f32 0.0, %v3855
        %v3857 = vpop.f32.mrb[0].mxu0
        %v3858 = vadd.f32 0.0, %v3857
        %v3859 = vpop.f32.mrb[0].mxu0
        %v3860 = vadd.f32 0.0, %v3859
        %3861 = vmatprep.mubr.bf16.mxu0 %v3726
        %3862 = vmatmul.mubr.bf16.gmra.mrb[0].mxu0 %v3725
        %v3863 = vpop.f32.mrb[0].mxu0
        %v3864 = vadd.f32 0.0, %v3863
        %v3865 = vpop.f32.mrb[0].mxu0
        %v3866 = vadd.f32 0.0, %v3865
        %v3867 = vpop.f32.mrb[0].mxu0
        %v3868 = vadd.f32 0.0, %v3867
        %v3869 = vpop.f32.mrb[0].mxu0
        %v3870 = vadd.f32 0.0, %v3869
        %3871 = vmatprep.mubr.bf16.mxu0 %v3728
        %3872 = vmatmul.mubr.bf16.gmra.mrb[0].mxu0 %v3727
        %v3873 = vpop.f32.mrb[0].mxu0
        %v3874 = vadd.f32 0.0, %v3873
        %v3875 = vpop.f32.mrb[0].mxu0
        %v3876 = vadd.f32 0.0, %v3875
        %v3877 = vpop.f32.mrb[0].mxu0
        %v3878 = vadd.f32 0.0, %v3877
        %v3879 = vpop.f32.mrb[0].mxu0
        %v3880 = vadd.f32 0.0, %v3879
        %3881 = vmatprep.mubr.bf16.mxu0 %v3730
        %3882 = vmatmul.mubr.bf16.gmra.mrb[0].mxu0 %v3729
        %v3883 = vpop.f32.mrb[0].mxu0
        %v3884 = vadd.f32 0.0, %v3883
        %v3885 = vpop.f32.mrb[0].mxu0
        %v3886 = vadd.f32 0.0, %v3885
        %v3887 = vpop.f32.mrb[0].mxu0
        %v3888 = vadd.f32 0.0, %v3887
        %v3889 = vpop.f32.mrb[0].mxu0
        %v3890 = vadd.f32 0.0, %v3889
        %3891 = vmatprep.mubr.bf16.mxu0 %v3732
        %3892 = vmatmul.mubr.bf16.gmra.mrb[0].mxu0 %v3731
        %v3893 = vpop.f32.mrb[0].mxu0
        %v3894 = vadd.f32 0.0, %v3893
        %v3895 = vpop.f32.mrb[0].mxu0
        %v3896 = vadd.f32 0.0, %v3895
        %v3897 = vpop.f32.mrb[0].mxu0
        %v3898 = vadd.f32 0.0, %v3897
        %v3899 = vpop.f32.mrb[0].mxu0
        %v3900 = vadd.f32 0.0, %v3899
        %3901 = vmatprep.mubr.bf16.mxu0 %v3734
        %3902 = vmatmul.mubr.bf16.gmra.mrb[0].mxu0 %v3733
        %v3903 = vpop.f32.mrb[0].mxu0
        %v3904 = vadd.f32 0.0, %v3903
        %v3905 = vpop.f32.mrb[0].mxu0
        %v3906 = vadd.f32 0.0, %v3905
        %v3907 = vpop.f32.mrb[0].mxu0
        %v3908 = vadd.f32 0.0, %v3907
        %v3909 = vpop.f32.mrb[0].mxu0
        %v3910 = vadd.f32 0.0, %v3909
        %3911 = vmatprep.mubr.bf16.mxu0 %v3736
        %3912 = vmatmul.mubr.bf16.gmra.mrb[0].mxu0 %v3735
        %v3913 = vpop.f32.mrb[0].mxu0
        %v3914 = vadd.f32 0.0, %v3913
        %v3915 = vpop.f32.mrb[0].mxu0
        %v3916 = vadd.f32 0.0, %v3915
        %v3917 = vpop.f32.mrb[0].mxu0
        %v3918 = vadd.f32 0.0, %v3917
        %v3919 = vpop.f32.mrb[0].mxu0
        %v3920 = vadd.f32 0.0, %v3919
        %3921 = vmatprep.mubr.bf16.mxu0 %v3738
        %3922 = vmatmul.mubr.bf16.gmra.mrb[0].mxu0 %v3737
        %v3923 = vpop.f32.mrb[0].mxu0
        %v3924 = vadd.f32 0.0, %v3923
        %v3925 = vpop.f32.mrb[0].mxu0
        %v3926 = vadd.f32 0.0, %v3925
        %v3927 = vpop.f32.mrb[0].mxu0
        %v3928 = vadd.f32 0.0, %v3927
        %v3929 = vpop.f32.mrb[0].mxu0
        %v3930 = vadd.f32 0.0, %v3929
        %3931 = vmatprep.mubr.bf16.mxu0 %v3740
        %3932 = vmatmul.mubr.bf16.gmra.mrb[0].mxu0 %v3739
        %v3933 = vpop.f32.mrb[0].mxu0
        %v3934 = vadd.f32 0.0, %v3933
        %v3935 = vpop.f32.mrb[0].mxu0
        %v3936 = vadd.f32 0.0, %v3935
        %v3937 = vpop.f32.mrb[0].mxu0
        %v3938 = vadd.f32 0.0, %v3937
        %v3939 = vpop.f32.mrb[0].mxu0
        %v3940 = vadd.f32 0.0, %v3939
        %3941 = vmatprep.mubr.bf16.mxu0 %v3742
        %3942 = vmatmul.mubr.bf16.gmra.mrb[0].mxu0 %v3741
        %v3943 = vpop.f32.mrb[0].mxu0
        %v3944 = vadd.f32 0.0, %v3943
        %v3945 = vpop.f32.mrb[0].mxu0
        %v3946 = vadd.f32 0.0, %v3945
        %v3947 = vpop.f32.mrb[0].mxu0
        %v3948 = vadd.f32 0.0, %v3947
        %v3949 = vpop.f32.mrb[0].mxu0
        %v3950 = vadd.f32 0.0, %v3949
        %3951 = vmatprep.mubr.bf16.mxu0 %v3744
        %3952 = vmatmul.mubr.bf16.gmra.mrb[0].mxu0 %v3743
        %v3953 = vpop.f32.mrb[0].mxu0
        %v3954 = vadd.f32 0.0, %v3953
        %v3955 = vpop.f32.mrb[0].mxu0
        %v3956 = vadd.f32 0.0, %v3955
        %v3957 = vpop.f32.mrb[0].mxu0
        %v3958 = vadd.f32 0.0, %v3957
        %v3959 = vpop.f32.mrb[0].mxu0
        %v3960 = vadd.f32 0.0, %v3959
        %3961 = vmatprep.mubr.bf16.mxu0 %v3746
        %3962 = vmatmul.mubr.bf16.gmra.mrb[0].mxu0 %v3745
        %v3963 = vpop.f32.mrb[0].mxu0
        %v3964 = vadd.f32 0.0, %v3963
        %v3965 = vpop.f32.mrb[0].mxu0
        %v3966 = vadd.f32 0.0, %v3965
        %v3967 = vpop.f32.mrb[0].mxu0
        %v3968 = vadd.f32 0.0, %v3967
        %v3969 = vpop.f32.mrb[0].mxu0
        %v3970 = vadd.f32 0.0, %v3969
        %3971 = vdwg.mxu0
        %v3988 = vunpack.c.l.b16 %v3571
        %v3989 = vunpack.c.h.b16 %v3571
        %v3990 = vunpack.c.l.b16 %v3572
        %v3991 = vunpack.c.h.b16 %v3572
        %v3992 = vunpack.c.l.b16 %v3573
        %v3993 = vunpack.c.h.b16 %v3573
        %v3994 = vunpack.c.l.b16 %v3574
        %v3995 = vunpack.c.h.b16 %v3574
        %v3996 = vunpack.c.l.b16 %v3575
        %v3997 = vunpack.c.h.b16 %v3575
        %v3998 = vunpack.c.l.b16 %v3576
        %v3999 = vunpack.c.h.b16 %v3576
        %v4000 = vunpack.c.l.b16 %v3577
        %v4001 = vunpack.c.h.b16 %v3577
        %v4002 = vunpack.c.l.b16 %v3578
        %v4003 = vunpack.c.h.b16 %v3578
        %v4004 = vunpack.c.l.b16 %v3579
        %v4005 = vunpack.c.h.b16 %v3579
        %v4006 = vunpack.c.l.b16 %v3580
        %v4007 = vunpack.c.h.b16 %v3580
        %v4008 = vunpack.c.l.b16 %v3581
        %v4009 = vunpack.c.h.b16 %v3581
        %v4010 = vunpack.c.l.b16 %v3582
        %v4011 = vunpack.c.h.b16 %v3582
        %v4012 = vunpack.c.l.b16 %v3583
        %v4013 = vunpack.c.h.b16 %v3583
        %v4014 = vunpack.c.l.b16 %v3584
        %v4015 = vunpack.c.h.b16 %v3584
        %v4016 = vunpack.c.l.b16 %v3585
        %v4017 = vunpack.c.h.b16 %v3585
        %v4018 = vunpack.c.l.b16 %v3586
        %v4019 = vunpack.c.h.b16 %v3586
        %v4020 = vpack.c.b16 %v3990, %v3988
        %v4021 = vpack.c.b16 %v3991, %v3989
        %v4022 = vpack.c.b16 %v3994, %v3992
        %v4023 = vpack.c.b16 %v3995, %v3993
        %v4024 = vpack.c.b16 %v3998, %v3996
        %v4025 = vpack.c.b16 %v3999, %v3997
        %v4026 = vpack.c.b16 %v4002, %v4000
        %v4027 = vpack.c.b16 %v4003, %v4001
        %v4028 = vpack.c.b16 %v4006, %v4004
        %v4029 = vpack.c.b16 %v4007, %v4005
        %v4030 = vpack.c.b16 %v4010, %v4008
        %v4031 = vpack.c.b16 %v4011, %v4009
        %v4032 = vpack.c.b16 %v4014, %v4012
        %v4033 = vpack.c.b16 %v4015, %v4013
        %v4034 = vpack.c.b16 %v4018, %v4016
        %v4035 = vpack.c.b16 %v4019, %v4017
        %4052 = vmatprep.subr.bf16.mxu0 %v4021
        %4053 = vmatpush1.bf16.msra.mxu0 %v4020
        %4054 = vmatprep.subr.bf16.mxu0 %v4023
        %4055 = vmatpush1.bf16.msra.mxu0 %v4022
        %4056 = vmatprep.subr.bf16.mxu0 %v4025
        %4057 = vmatpush1.bf16.msra.mxu0 %v4024
        %4058 = vmatprep.subr.bf16.mxu0 %v4027
        %4059 = vmatpush1.bf16.msra.mxu0 %v4026
        %4060 = vmatprep.subr.bf16.mxu0 %v4029
        %4061 = vmatpush1.bf16.msra.mxu0 %v4028
        %4062 = vmatprep.subr.bf16.mxu0 %v4031
        %4063 = vmatpush1.bf16.msra.mxu0 %v4030
        %4064 = vmatprep.subr.bf16.mxu0 %v4033
        %4065 = vmatpush1.bf16.msra.mxu0 %v4032
        %4066 = vmatprep.subr.bf16.mxu0 %v4035
        %4067 = vmatpush1.bf16.msra.mxu0 %v4034
        %4068 = vmatprep.subr.bf16.mxu0 0
        %4069 = vmatpush1.bf16.msra.mxu0 0
        %4070 = vmatprep.subr.bf16.mxu0 0
        %4071 = vmatpush1.bf16.msra.mxu0 0
        %4072 = vmatprep.subr.bf16.mxu0 0
        %4073 = vmatpush1.bf16.msra.mxu0 0
        %4074 = vmatprep.subr.bf16.mxu0 0
        %4075 = vmatpush1.bf16.msra.mxu0 0
        %4076 = vmatprep.subr.bf16.mxu0 0
        %4077 = vmatpush1.bf16.msra.mxu0 0
        %4078 = vmatprep.subr.bf16.mxu0 0
        %4079 = vmatpush1.bf16.msra.mxu0 0
        %4080 = vmatprep.subr.bf16.mxu0 0
        %4081 = vmatpush1.bf16.msra.mxu0 0
        %4082 = vmatprep.subr.bf16.mxu0 0
        %4083 = vmatpush1.bf16.msra.mxu0 0
        %4084 = vmatprep.mubr.bf16.mxu0 0
        %4085 = vmatmul.mubr.bf16.gmra.mrb[0].mxu0 %v1018
        %v4086 = vpop.f32.mrb[0].mxu0
        %v4087 = vadd.f32 %v3814, %v4086
        %v4088 = vpop.f32.mrb[0].mxu0
        %v4089 = vadd.f32 %v3816, %v4088
        %v4090 = vpop.f32.mrb[0].mxu0
        %v4091 = vadd.f32 %v3818, %v4090
        %v4092 = vpop.f32.mrb[0].mxu0
        %v4093 = vadd.f32 %v3820, %v4092
        %4094 = vmatprep.mubr.bf16.mxu0 0
        %4095 = vmatmul.mubr.bf16.gmra.mrb[0].mxu0 %v1019
        %v4096 = vpop.f32.mrb[0].mxu0
        %v4097 = vadd.f32 %v3824, %v4096
        %v4098 = vpop.f32.mrb[0].mxu0
        %v4099 = vadd.f32 %v3826, %v4098
        %v4100 = vpop.f32.mrb[0].mxu0
        %v4101 = vadd.f32 %v3828, %v4100
        %v4102 = vpop.f32.mrb[0].mxu0
        %v4103 = vadd.f32 %v3830, %v4102
        %4104 = vmatprep.mubr.bf16.mxu0 0
        %4105 = vmatmul.mubr.bf16.gmra.mrb[0].mxu0 %v1020
        %v4106 = vpop.f32.mrb[0].mxu0
        %v4107 = vadd.f32 %v3834, %v4106
        %v4108 = vpop.f32.mrb[0].mxu0
        %v4109 = vadd.f32 %v3836, %v4108
        %v4110 = vpop.f32.mrb[0].mxu0
        %v4111 = vadd.f32 %v3838, %v4110
        %v4112 = vpop.f32.mrb[0].mxu0
        %v4113 = vadd.f32 %v3840, %v4112
        %4114 = vmatprep.mubr.bf16.mxu0 0
        %4115 = vmatmul.mubr.bf16.gmra.mrb[0].mxu0 %v1021
        %v4116 = vpop.f32.mrb[0].mxu0
        %v4117 = vadd.f32 %v3844, %v4116
        %v4118 = vpop.f32.mrb[0].mxu0
        %v4119 = vadd.f32 %v3846, %v4118
        %v4120 = vpop.f32.mrb[0].mxu0
        %v4121 = vadd.f32 %v3848, %v4120
        %v4122 = vpop.f32.mrb[0].mxu0
        %v4123 = vadd.f32 %v3850, %v4122
        %4124 = vmatprep.mubr.bf16.mxu0 0
        %4125 = vmatmul.mubr.bf16.gmra.mrb[0].mxu0 %v1022
        %v4126 = vpop.f32.mrb[0].mxu0
        %v4127 = vadd.f32 %v3854, %v4126
        %v4128 = vpop.f32.mrb[0].mxu0
        %v4129 = vadd.f32 %v3856, %v4128
        %v4130 = vpop.f32.mrb[0].mxu0
        %v4131 = vadd.f32 %v3858, %v4130
        %v4132 = vpop.f32.mrb[0].mxu0
        %v4133 = vadd.f32 %v3860, %v4132
        %4134 = vmatprep.mubr.bf16.mxu0 0
        %4135 = vmatmul.mubr.bf16.gmra.mrb[0].mxu0 %v1023
        %v4136 = vpop.f32.mrb[0].mxu0
        %v4137 = vadd.f32 %v3864, %v4136
        %v4138 = vpop.f32.mrb[0].mxu0
        %v4139 = vadd.f32 %v3866, %v4138
        %v4140 = vpop.f32.mrb[0].mxu0
        %v4141 = vadd.f32 %v3868, %v4140
        %v4142 = vpop.f32.mrb[0].mxu0
        %v4143 = vadd.f32 %v3870, %v4142
        %4144 = vmatprep.mubr.bf16.mxu0 0
        %4145 = vmatmul.mubr.bf16.gmra.mrb[0].mxu0 %v1024
        %v4146 = vpop.f32.mrb[0].mxu0
        %v4147 = vadd.f32 %v3874, %v4146
        %v4148 = vpop.f32.mrb[0].mxu0
        %v4149 = vadd.f32 %v3876, %v4148
        %v4150 = vpop.f32.mrb[0].mxu0
        %v4151 = vadd.f32 %v3878, %v4150
        %v4152 = vpop.f32.mrb[0].mxu0
        %v4153 = vadd.f32 %v3880, %v4152
        %4154 = vmatprep.mubr.bf16.mxu0 0
        %4155 = vmatmul.mubr.bf16.gmra.mrb[0].mxu0 %v1025
        %v4156 = vpop.f32.mrb[0].mxu0
        %v4157 = vadd.f32 %v3884, %v4156
        %v4158 = vpop.f32.mrb[0].mxu0
        %v4159 = vadd.f32 %v3886, %v4158
        %v4160 = vpop.f32.mrb[0].mxu0
        %v4161 = vadd.f32 %v3888, %v4160
        %v4162 = vpop.f32.mrb[0].mxu0
        %v4163 = vadd.f32 %v3890, %v4162
        %4164 = vmatprep.mubr.bf16.mxu0 0
        %4165 = vmatmul.mubr.bf16.gmra.mrb[0].mxu0 %v1026
        %v4166 = vpop.f32.mrb[0].mxu0
        %v4167 = vadd.f32 %v3894, %v4166
        %v4168 = vpop.f32.mrb[0].mxu0
        %v4169 = vadd.f32 %v3896, %v4168
        %v4170 = vpop.f32.mrb[0].mxu0
        %v4171 = vadd.f32 %v3898, %v4170
        %v4172 = vpop.f32.mrb[0].mxu0
        %v4173 = vadd.f32 %v3900, %v4172
        %4174 = vmatprep.mubr.bf16.mxu0 0
        %4175 = vmatmul.mubr.bf16.gmra.mrb[0].mxu0 %v1027
        %v4176 = vpop.f32.mrb[0].mxu0
        %v4177 = vadd.f32 %v3904, %v4176
        %v4178 = vpop.f32.mrb[0].mxu0
        %v4179 = vadd.f32 %v3906, %v4178
        %v4180 = vpop.f32.mrb[0].mxu0
        %v4181 = vadd.f32 %v3908, %v4180
        %v4182 = vpop.f32.mrb[0].mxu0
        %v4183 = vadd.f32 %v3910, %v4182
        %4184 = vmatprep.mubr.bf16.mxu0 0
        %4185 = vmatmul.mubr.bf16.gmra.mrb[0].mxu0 %v1028
        %v4186 = vpop.f32.mrb[0].mxu0
        %v4187 = vadd.f32 %v3914, %v4186
        %v4188 = vpop.f32.mrb[0].mxu0
        %v4189 = vadd.f32 %v3916, %v4188
        %v4190 = vpop.f32.mrb[0].mxu0
        %v4191 = vadd.f32 %v3918, %v4190
        %v4192 = vpop.f32.mrb[0].mxu0
        %v4193 = vadd.f32 %v3920, %v4192
        %4194 = vmatprep.mubr.bf16.mxu0 0
        %4195 = vmatmul.mubr.bf16.gmra.mrb[0].mxu0 %v1029
        %v4196 = vpop.f32.mrb[0].mxu0
        %v4197 = vadd.f32 %v3924, %v4196
        %v4198 = vpop.f32.mrb[0].mxu0
        %v4199 = vadd.f32 %v3926, %v4198
        %v4200 = vpop.f32.mrb[0].mxu0
        %v4201 = vadd.f32 %v3928, %v4200
        %v4202 = vpop.f32.mrb[0].mxu0
        %v4203 = vadd.f32 %v3930, %v4202
        %4204 = vmatprep.mubr.bf16.mxu0 0
        %4205 = vmatmul.mubr.bf16.gmra.mrb[0].mxu0 %v1030
        %v4206 = vpop.f32.mrb[0].mxu0
        %v4207 = vadd.f32 %v3934, %v4206
        %v4208 = vpop.f32.mrb[0].mxu0
        %v4209 = vadd.f32 %v3936, %v4208
        %v4210 = vpop.f32.mrb[0].mxu0
        %v4211 = vadd.f32 %v3938, %v4210
        %v4212 = vpop.f32.mrb[0].mxu0
        %v4213 = vadd.f32 %v3940, %v4212
        %4214 = vmatprep.mubr.bf16.mxu0 0
        %4215 = vmatmul.mubr.bf16.gmra.mrb[0].mxu0 %v1031
        %v4216 = vpop.f32.mrb[0].mxu0
        %v4217 = vadd.f32 %v3944, %v4216
        %v4218 = vpop.f32.mrb[0].mxu0
        %v4219 = vadd.f32 %v3946, %v4218
        %v4220 = vpop.f32.mrb[0].mxu0
        %v4221 = vadd.f32 %v3948, %v4220
        %v4222 = vpop.f32.mrb[0].mxu0
        %v4223 = vadd.f32 %v3950, %v4222
        %4224 = vmatprep.mubr.bf16.mxu0 0
        %4225 = vmatmul.mubr.bf16.gmra.mrb[0].mxu0 %v1032
        %v4226 = vpop.f32.mrb[0].mxu0
        %v4227 = vadd.f32 %v3954, %v4226
        %v4228 = vpop.f32.mrb[0].mxu0
        %v4229 = vadd.f32 %v3956, %v4228
        %v4230 = vpop.f32.mrb[0].mxu0
        %v4231 = vadd.f32 %v3958, %v4230
        %v4232 = vpop.f32.mrb[0].mxu0
        %v4233 = vadd.f32 %v3960, %v4232
        %4234 = vmatprep.mubr.bf16.mxu0 0
        %4235 = vmatmul.mubr.bf16.gmra.mrb[0].mxu0 %v1033
        %v4236 = vpop.f32.mrb[0].mxu0
        %v4237 = vadd.f32 %v3964, %v4236
        %v4238 = vpop.f32.mrb[0].mxu0
        %v4239 = vadd.f32 %v3966, %v4238
        %v4240 = vpop.f32.mrb[0].mxu0
        %v4241 = vadd.f32 %v3968, %v4240
        %v4242 = vpop.f32.mrb[0].mxu0
        %v4243 = vadd.f32 %v3970, %v4242
        %4244 = vdwg.mxu0
        %v4245 = vld [vmem:[#allocation10 + $0x6] sm:$0x3]
        %v4247 = vlaneseq
        %v4248 = vshrl.u32 %v4247, 7
        %v4249 = vsub.s32 0, %v4248
        %v4250 = vrot.slane %v4245, %v4249
        %v4251 = vlaneseq
        %v4252 = vshrl.u32 %v4251, 7
        %v4253 = vsub.s32 1, %v4252
        %v4254 = vrot.slane %v4245, %v4253
        %v4257 = vadd.f32 %v4087, %v4250
        %v4258 = vadd.f32 %v4089, %v4254
        %v4259 = vadd.f32 %v4091, %v4250
        %v4260 = vadd.f32 %v4093, %v4254
        %v4261 = vadd.f32 %v4097, %v4250
        %v4262 = vadd.f32 %v4099, %v4254
        %v4263 = vadd.f32 %v4101, %v4250
        %v4264 = vadd.f32 %v4103, %v4254
        %v4265 = vadd.f32 %v4107, %v4250
        %v4266 = vadd.f32 %v4109, %v4254
        %v4267 = vadd.f32 %v4111, %v4250
        %v4268 = vadd.f32 %v4113, %v4254
        %v4269 = vadd.f32 %v4117, %v4250
        %v4270 = vadd.f32 %v4119, %v4254
        %v4271 = vadd.f32 %v4121, %v4250
        %v4272 = vadd.f32 %v4123, %v4254
        %v4273 = vadd.f32 %v4127, %v4250
        %v4274 = vadd.f32 %v4129, %v4254
        %v4275 = vadd.f32 %v4131, %v4250
        %v4276 = vadd.f32 %v4133, %v4254
        %v4277 = vadd.f32 %v4137, %v4250
        %v4278 = vadd.f32 %v4139, %v4254
        %v4279 = vadd.f32 %v4141, %v4250
        %v4280 = vadd.f32 %v4143, %v4254
        %v4281 = vadd.f32 %v4147, %v4250
        %v4282 = vadd.f32 %v4149, %v4254
        %v4283 = vadd.f32 %v4151, %v4250
        %v4284 = vadd.f32 %v4153, %v4254
        %v4285 = vadd.f32 %v4157, %v4250
        %v4286 = vadd.f32 %v4159, %v4254
        %v4287 = vadd.f32 %v4161, %v4250
        %v4288 = vadd.f32 %v4163, %v4254
        %v4289 = vadd.f32 %v4167, %v4250
        %v4290 = vadd.f32 %v4169, %v4254
        %v4291 = vadd.f32 %v4171, %v4250
        %v4292 = vadd.f32 %v4173, %v4254
        %v4293 = vadd.f32 %v4177, %v4250
        %v4294 = vadd.f32 %v4179, %v4254
        %v4295 = vadd.f32 %v4181, %v4250
        %v4296 = vadd.f32 %v4183, %v4254
        %v4297 = vadd.f32 %v4187, %v4250
        %v4298 = vadd.f32 %v4189, %v4254
        %v4299 = vadd.f32 %v4191, %v4250
        %v4300 = vadd.f32 %v4193, %v4254
        %v4301 = vadd.f32 %v4197, %v4250
        %v4302 = vadd.f32 %v4199, %v4254
        %v4303 = vadd.f32 %v4201, %v4250
        %v4304 = vadd.f32 %v4203, %v4254
        %v4305 = vadd.f32 %v4207, %v4250
        %v4306 = vadd.f32 %v4209, %v4254
        %v4307 = vadd.f32 %v4211, %v4250
        %v4308 = vadd.f32 %v4213, %v4254
        %v4309 = vadd.f32 %v4217, %v4250
        %v4310 = vadd.f32 %v4219, %v4254
        %v4311 = vadd.f32 %v4221, %v4250
        %v4312 = vadd.f32 %v4223, %v4254
        %v4313 = vadd.f32 %v4227, %v4250
        %v4314 = vadd.f32 %v4229, %v4254
        %v4315 = vadd.f32 %v4231, %v4250
        %v4316 = vadd.f32 %v4233, %v4254
        %v4317 = vadd.f32 %v4237, %v4250
        %v4318 = vadd.f32 %v4239, %v4254
        %v4319 = vadd.f32 %v4241, %v4250
        %v4320 = vadd.f32 %v4243, %v4254
        %v4321 = vpack.c.bf16 %v4259, %v4257
        %v4322 = vpack.c.bf16 %v4260, %v4258
        %v4323 = vpack.c.bf16 %v4263, %v4261
        %v4324 = vpack.c.bf16 %v4264, %v4262
        %v4325 = vpack.c.bf16 %v4267, %v4265
        %v4326 = vpack.c.bf16 %v4268, %v4266
        %v4327 = vpack.c.bf16 %v4271, %v4269
        %v4328 = vpack.c.bf16 %v4272, %v4270
        %v4329 = vpack.c.bf16 %v4275, %v4273
        %v4330 = vpack.c.bf16 %v4276, %v4274
        %v4331 = vpack.c.bf16 %v4279, %v4277
        %v4332 = vpack.c.bf16 %v4280, %v4278
        %v4333 = vpack.c.bf16 %v4283, %v4281
        %v4334 = vpack.c.bf16 %v4284, %v4282
        %v4335 = vpack.c.bf16 %v4287, %v4285
        %v4336 = vpack.c.bf16 %v4288, %v4286
        %v4337 = vpack.c.bf16 %v4291, %v4289
        %v4338 = vpack.c.bf16 %v4292, %v4290
        %v4339 = vpack.c.bf16 %v4295, %v4293
        %v4340 = vpack.c.bf16 %v4296, %v4294
        %v4341 = vpack.c.bf16 %v4299, %v4297
        %v4342 = vpack.c.bf16 %v4300, %v4298
        %v4343 = vpack.c.bf16 %v4303, %v4301
        %v4344 = vpack.c.bf16 %v4304, %v4302
        %v4345 = vpack.c.bf16 %v4307, %v4305
        %v4346 = vpack.c.bf16 %v4308, %v4306
        %v4347 = vpack.c.bf16 %v4311, %v4309
        %v4348 = vpack.c.bf16 %v4312, %v4310
        %v4349 = vpack.c.bf16 %v4315, %v4313
        %v4350 = vpack.c.bf16 %v4316, %v4314
        %v4351 = vpack.c.bf16 %v4319, %v4317
        %v4352 = vpack.c.bf16 %v4320, %v4318
        %v4385 = vunpack.c.l.b16 %v4321
        %v4386 = vunpack.c.l.b16 %v4322
        %v4387 = vunpack.c.h.b16 %v4321
        %v4388 = vunpack.c.h.b16 %v4322
        %v4389 = vunpack.c.l.b16 %v4323
        %v4390 = vunpack.c.l.b16 %v4324
        %v4391 = vunpack.c.h.b16 %v4323
        %v4392 = vunpack.c.h.b16 %v4324
        %v4393 = vunpack.c.l.b16 %v4325
        %v4394 = vunpack.c.l.b16 %v4326
        %v4395 = vunpack.c.h.b16 %v4325
        %v4396 = vunpack.c.h.b16 %v4326
        %v4397 = vunpack.c.l.b16 %v4327
        %v4398 = vunpack.c.l.b16 %v4328
        %v4399 = vunpack.c.h.b16 %v4327
        %v4400 = vunpack.c.h.b16 %v4328
        %v4401 = vunpack.c.l.b16 %v4329
        %v4402 = vunpack.c.l.b16 %v4330
        %v4403 = vunpack.c.h.b16 %v4329
        %v4404 = vunpack.c.h.b16 %v4330
        %v4405 = vunpack.c.l.b16 %v4331
        %v4406 = vunpack.c.l.b16 %v4332
        %v4407 = vunpack.c.h.b16 %v4331
        %v4408 = vunpack.c.h.b16 %v4332
        %v4409 = vunpack.c.l.b16 %v4333
        %v4410 = vunpack.c.l.b16 %v4334
        %v4411 = vunpack.c.h.b16 %v4333
        %v4412 = vunpack.c.h.b16 %v4334
        %v4413 = vunpack.c.l.b16 %v4335
        %v4414 = vunpack.c.l.b16 %v4336
        %v4415 = vunpack.c.h.b16 %v4335
        %v4416 = vunpack.c.h.b16 %v4336
        %v4417 = vunpack.c.l.b16 %v4337
        %v4418 = vunpack.c.l.b16 %v4338
        %v4419 = vunpack.c.h.b16 %v4337
        %v4420 = vunpack.c.h.b16 %v4338
        %v4421 = vunpack.c.l.b16 %v4339
        %v4422 = vunpack.c.l.b16 %v4340
        %v4423 = vunpack.c.h.b16 %v4339
        %v4424 = vunpack.c.h.b16 %v4340
        %v4425 = vunpack.c.l.b16 %v4341
        %v4426 = vunpack.c.l.b16 %v4342
        %v4427 = vunpack.c.h.b16 %v4341
        %v4428 = vunpack.c.h.b16 %v4342
        %v4429 = vunpack.c.l.b16 %v4343
        %v4430 = vunpack.c.l.b16 %v4344
        %v4431 = vunpack.c.h.b16 %v4343
        %v4432 = vunpack.c.h.b16 %v4344
        %v4433 = vunpack.c.l.b16 %v4345
        %v4434 = vunpack.c.l.b16 %v4346
        %v4435 = vunpack.c.h.b16 %v4345
        %v4436 = vunpack.c.h.b16 %v4346
        %v4437 = vunpack.c.l.b16 %v4347
        %v4438 = vunpack.c.l.b16 %v4348
        %v4439 = vunpack.c.h.b16 %v4347
        %v4440 = vunpack.c.h.b16 %v4348
        %v4441 = vunpack.c.l.b16 %v4349
        %v4442 = vunpack.c.l.b16 %v4350
        %v4443 = vunpack.c.h.b16 %v4349
        %v4444 = vunpack.c.h.b16 %v4350
        %v4445 = vunpack.c.l.b16 %v4351
        %v4446 = vunpack.c.l.b16 %v4352
        %v4447 = vunpack.c.h.b16 %v4351
        %v4448 = vunpack.c.h.b16 %v4352
        %v4449 = vpack.c.b16 %v4386, %v4385
        %v4450 = vpack.c.b16 %v4388, %v4387
        %v4451 = vpack.c.b16 %v4390, %v4389
        %v4452 = vpack.c.b16 %v4392, %v4391
        %v4453 = vpack.c.b16 %v4394, %v4393
        %v4454 = vpack.c.b16 %v4396, %v4395
        %v4455 = vpack.c.b16 %v4398, %v4397
        %v4456 = vpack.c.b16 %v4400, %v4399
        %v4457 = vpack.c.b16 %v4402, %v4401
        %v4458 = vpack.c.b16 %v4404, %v4403
        %v4459 = vpack.c.b16 %v4406, %v4405
        %v4460 = vpack.c.b16 %v4408, %v4407
        %v4461 = vpack.c.b16 %v4410, %v4409
        %v4462 = vpack.c.b16 %v4412, %v4411
        %v4463 = vpack.c.b16 %v4414, %v4413
        %v4464 = vpack.c.b16 %v4416, %v4415
        %v4465 = vpack.c.b16 %v4418, %v4417
        %v4466 = vpack.c.b16 %v4420, %v4419
        %v4467 = vpack.c.b16 %v4422, %v4421
        %v4468 = vpack.c.b16 %v4424, %v4423
        %v4469 = vpack.c.b16 %v4426, %v4425
        %v4470 = vpack.c.b16 %v4428, %v4427
        %v4471 = vpack.c.b16 %v4430, %v4429
        %v4472 = vpack.c.b16 %v4432, %v4431
        %v4473 = vpack.c.b16 %v4434, %v4433
        %v4474 = vpack.c.b16 %v4436, %v4435
        %v4475 = vpack.c.b16 %v4438, %v4437
        %v4476 = vpack.c.b16 %v4440, %v4439
        %v4477 = vpack.c.b16 %v4442, %v4441
        %v4478 = vpack.c.b16 %v4444, %v4443
        %v4479 = vpack.c.b16 %v4446, %v4445
        %v4480 = vpack.c.b16 %v4448, %v4447
        %4513 = vst [vmem:[%s324 + $0x18] sm:$0xff] %v4449
        %4514 = vst [vmem:[%s324 + $0x38] sm:$0xff] %v4450
        %4515 = vst [vmem:[%s324 + $0x58] sm:$0xff] %v4451
        %4516 = vst [vmem:[%s324 + $0x78] sm:$0xff] %v4452
        %4517 = vst [vmem:[%s324 + $0x98] sm:$0xff] %v4453
        %4518 = vst [vmem:[%s324 + $0xb8] sm:$0xff] %v4454
        %4519 = vst [vmem:[%s324 + $0xd8] sm:$0xff] %v4455
        %4520 = vst [vmem:[%s324 + $0xf8] sm:$0xff] %v4456
        %4521 = vst [vmem:[%s324 + $0x118] sm:$0xff] %v4457
        %4522 = vst [vmem:[%s324 + $0x138] sm:$0xff] %v4458
        %4523 = vst [vmem:[%s324 + $0x158] sm:$0xff] %v4459
        %4524 = vst [vmem:[%s324 + $0x178] sm:$0xff] %v4460
        %4525 = vst [vmem:[%s324 + $0x198] sm:$0xff] %v4461
        %4526 = vst [vmem:[%s324 + $0x1b8] sm:$0xff] %v4462
        %4527 = vst [vmem:[%s324 + $0x1d8] sm:$0xff] %v4463
        %4528 = vst [vmem:[%s324 + $0x1f8] sm:$0xff] %v4464
        %4529 = vst [vmem:[%s324 + $0x218] sm:$0xff] %v4465
        %4530 = vst [vmem:[%s324 + $0x238] sm:$0xff] %v4466
        %4531 = vst [vmem:[%s324 + $0x258] sm:$0xff] %v4467
        %4532 = vst [vmem:[%s324 + $0x278] sm:$0xff] %v4468
        %4533 = vst [vmem:[%s324 + $0x298] sm:$0xff] %v4469
        %4534 = vst [vmem:[%s324 + $0x2b8] sm:$0xff] %v4470
        %4535 = vst [vmem:[%s324 + $0x2d8] sm:$0xff] %v4471
        %4536 = vst [vmem:[%s324 + $0x2f8] sm:$0xff] %v4472
        %4537 = vst [vmem:[%s324 + $0x318] sm:$0xff] %v4473
        %4538 = vst [vmem:[%s324 + $0x338] sm:$0xff] %v4474
        %4539 = vst [vmem:[%s324 + $0x358] sm:$0xff] %v4475
        %4540 = vst [vmem:[%s324 + $0x378] sm:$0xff] %v4476
        %4541 = vst [vmem:[%s324 + $0x398] sm:$0xff] %v4477
        %4542 = vst [vmem:[%s324 + $0x3b8] sm:$0xff] %v4478
        %4543 = vst [vmem:[%s324 + $0x3d8] sm:$0xff] %v4479
        %4544 = vst [vmem:[%s324 + $0x3f8] sm:$0xff] %v4480
        %s4545 = sand.u32 %s149, 1
        %s4546 = scalar_lea.sflag [#allocation4], %s4545
        %s4547 = sand.u32 %s149, 1
        %s4548 = smul.addr %s4547, 1024
        %s4549 = scalar_lea.vmem [#allocation11], %s4548
        // Predicated region
        $region61: #{tpu_custom_call.1} parent=39 // pred_check
          %p4550 = pneg %p159
        $region62: #{tpu_custom_call.1} parent=39 // pred_check_branch
          %4552 = sbr.rel (%p4550) target = $region64
        $region63: #{tpu_custom_call.1} parent=39 // pred_region
          %s4553 = smul.u32 32, %s26
          %s4555 = ssub.s32 16384, 16384
          %4556 = vsyncadd %s4546, %s4555
          %s4557 = smul.addr %s4553, 8
          %s4558 = smul.addr %s4557, 64
          %s4559 = scalar_lea.hbm %s5, %s4558
          %s4560 = sshll.u32 %s4549, 4
          %s4561 = int_to_ptr.vmem [resolvable:$true] %s4560
          %4566 = dma.vmem_to_hbm [thread:$0]  %s4561, 16384, %s4559, %s4546, 512, 512, 32
        $region64: #{tpu_custom_call.1} parent=39 // pred_fallthru
          _
      $region40: #{tpu_custom_call.1} parent=5 // pred_fallthru
        _
      %p4567 = scmp.le.s32.totalorder 2, %s21
      // Predicated region
      $region65: #{tpu_custom_call.1} parent=5 // pred_check
        %p4568 = pneg %p4567
      $region66: #{tpu_custom_call.1} parent=5 // pred_check_branch
        %4570 = sbr.rel (%p4568) target = $region68
      $region67: #{tpu_custom_call.1} parent=5 // pred_region
        %s4571 = ssub.s32 %s21, 2
        // Predicated region
        $region69: #{tpu_custom_call.1} parent=67 // pred_check
          %p4572 = pneg %p165
        $region70: #{tpu_custom_call.1} parent=67 // pred_check_branch
          %4574 = sbr.rel (%p4572) target = $region72
        $region71: #{tpu_custom_call.1} parent=67 // pred_region
          %s4575 = sand.u32 %s150, 1
          %s4576 = scalar_lea.sflag [#allocation4], %s4575
          %s4577 = sand.u32 %s150, 1
          %s4578 = smul.addr %s4577, 1024
          %s4579 = scalar_lea.vmem [#allocation11], %s4578
          %4580 = dma.done %s4576, 16384
        $region72: #{tpu_custom_call.1} parent=67 // pred_fallthru
          _
      $region68: #{tpu_custom_call.1} parent=5 // pred_fallthru
        _
    $region6: #{tpu_custom_call.1} parent=1 // loop_footer
      %s25 = sadd.s32 1, %s21
    $region7: #{tpu_custom_call.1} parent=1 // loop_footer_branch
      %20 = sbr.rel target = $region3
    $region8: #{tpu_custom_call.1} parent=1 // loop_exit
      _
    %4581 = vsyncpa [#allocation3], 1
    %s4582 = scalar_lea.sflag [#allocation3], 1
    %4583 = vsyncpa %s4582, 1
    %4584 = vsyncpa [#allocation6], 1
    %s4585 = scalar_lea.sflag [#allocation6], 1
    %4586 = vsyncpa %s4585, 1
    %4587 = vsyncpa [#allocation9], 1
    %4588 = vsyncpa [#allocation4], 1
    %s4589 = scalar_lea.sflag [#allocation4], 1
    %4590 = vsyncpa %s4589, 1

</llo_original>
